<compile_context>
chip_gen: v7x
topology: tpu7x:2x2x1
jax: 0.10.0
libtpu: 0.0.40
codegen_flags: <defaults>
</compile_context>

<pallas_src>
import jax
import jax.numpy as jnp
from jax import lax
from jax.experimental import pallas as pl
from jax.experimental.pallas import tpu as pltpu


# Flip to jnp.bfloat16 on v6e/v7x to halve VMEM/HBM traffic for embeddings and
# weights (MXU accumulates in f32; gate/state math stays f32, which also keeps
# v5e's f32-only VPU/EUP path).  f32 default keeps exact parity with the
# PyTorch reference at the small test shapes used here.
PARAM_DTYPE = jnp.float32

_VMEM = pl.BlockSpec(memory_space=pltpu.MemorySpace.VMEM)


def _round_up(x, m):
    return ((x + m - 1) // m) * m


def _vmem_limit_bytes(estimate_bytes):
    # Explicit scoped-VMEM budget: generous headroom over the static estimate,
    # capped at 64 MiB so the same setting fits v7x (64 MiB) and v5e/v6e.
    return int(min(64 * 1024 * 1024, max(8 * 1024 * 1024, 4 * estimate_bytes)))


# ----------------------------- Pallas kernels ------------------------------

def _bilstm_maxpool_kernel(x_ref, lens_ref,
                           wih_ref, b_ref,
                           whh_f_ref, whh_b_ref,
                           out_ref,
                           proj_f_ref, proj_b_ref):
    T, Bt, E = x_ref.shape
    H = whh_f_ref.shape[0]

    # ---- Hoisted input projection: ONE fused GEMM for both directions with
    # biases folded in, then split into per-direction scratch. ----
    x2 = x_ref[...].reshape(T * Bt, E)
    proj = (jnp.dot(x2, wih_ref[...], preferred_element_type=jnp.float32)
            + b_ref[...])                                    # (T*Bt, 8H)
    proj_f_ref[...] = proj[:, :4 * H].reshape(T, Bt, 4 * H)
    proj_b_ref[...] = proj[:, 4 * H:].reshape(T, Bt, 4 * H)

    whh_f = whh_f_ref[...]
    whh_b = whh_b_ref[...]
    lens = lens_ref[...]                                     # (Bt, 1) int32

    def lstm_step(pre, h, c, whh, valid):
        # `pre` already holds x_t @ W_ih + b_ih + b_hh; only h @ W_hh is left.
        gates = pre + jnp.dot(h.astype(whh.dtype), whh,
                              preferred_element_type=jnp.float32)
        # TODO(synk): gate slices are lane-misaligned when H % 32 != 0 (and
        # ideally H % 128 == 0); keep H a multiple of 128 in production.
        i = jax.nn.sigmoid(gates[:, 0 * H:1 * H])
        f = jax.nn.sigmoid(gates[:, 1 * H:2 * H])
        g = jnp.tanh(gates[:, 2 * H:3 * H])
        o = jax.nn.sigmoid(gates[:, 3 * H:4 * H])
        c_new = f * c + i * g
        h_new = o * jnp.tanh(c_new)
        h_out = jnp.where(valid, h_new, h)     # packed: freeze state past length
        c_out = jnp.where(valid, c_new, c)
        y = jnp.where(valid, h_new, 0.0)       # pad_packed_sequence zero-pads
        return h_out, c_out, y

    def body(s, carry):
        h_f, c_f, m_f, h_b, c_b, m_b = carry
        # forward direction: timestep s
        h_f, c_f, y_f = lstm_step(proj_f_ref[s], h_f, c_f, whh_f, s < lens)
        m_f = jnp.maximum(m_f, y_f)
        # backward direction: timestep T-1-s (starts at each row's last valid token)
        tb = T - 1 - s
        h_b, c_b, y_b = lstm_step(proj_b_ref[tb], h_b, c_b, whh_b, tb < lens)
        m_b = jnp.maximum(m_b, y_b)
        return h_f, c_f, m_f, h_b, c_b, m_b

    zeros = jnp.zeros((Bt, H), jnp.float32)
    neg = jnp.full((Bt, H), -jnp.inf, jnp.float32)
    init = (zeros, zeros, neg, zeros, zeros, neg)

    if T <= 16:
        unroll = True
    elif T % 2 == 0:
        unroll = 2
    else:
        unroll = 1
    _, _, m_f, _, _, m_b = lax.fori_loop(0, T, body, init, unroll=unroll)

    # Direct slice stores -- no concatenated temporary.
    out_ref[:, :H] = m_f
    out_ref[:, H:] = m_b


def _mlp_kernel(u_ref, v_ref,
                w1u_ref, w1v_ref, w1d_ref, w1p_ref, b1_ref,
                w2_ref, b2_ref, w3_ref, b3_ref,
                out_ref):
    u = u_ref[...].astype(jnp.float32)
    v = v_ref[...].astype(jnp.float32)
    wdt = w1u_ref.dtype
    # [u, v, |u-v|, u*v] @ W1 without materializing the concat: four MXU
    # matmuls against row-blocks of W1 accumulate into the same f32 tile.
    h1 = (jnp.dot(u.astype(wdt), w1u_ref[...], preferred_element_type=jnp.float32)
          + jnp.dot(v.astype(wdt), w1v_ref[...], preferred_element_type=jnp.float32)
          + jnp.dot(jnp.abs(u - v).astype(wdt), w1d_ref[...],
                    preferred_element_type=jnp.float32)
          + jnp.dot((u * v).astype(wdt), w1p_ref[...],
                    preferred_element_type=jnp.float32)
          + b1_ref[...])
    h2 = jnp.dot(h1.astype(wdt), w2_ref[...],
                 preferred_element_type=jnp.float32) + b2_ref[...]
    out_ref[...] = (jnp.dot(h2.astype(wdt), w3_ref[...],
                            preferred_element_type=jnp.float32) + b3_ref[...])


# ------------------------------- wrappers -----------------------------------

def bilstm_maxpool(x_tbe, lens_b1, lstm_params, b_tile):
    """x_tbe: (T, B_pad, E) time-major embeddings; lens_b1: (B_pad, 1) int32."""
    T, B_pad, E = x_tbe.shape
    H = lstm_params["whh_f_t"].shape[0]
    assert B_pad % b_tile == 0
    nbt = B_pad // b_tile

    est = 4 * (2 * T * b_tile * E                 # x block (double-buffered)
               + 2 * T * b_tile * 4 * H           # proj scratch (both dirs)
               + T * b_tile * 8 * H               # fused-GEMM temporary
               + (E + 1) * 8 * H + 2 * H * 4 * H  # weights + biases
               + 2 * b_tile * 2 * H               # out block (double-buffered)
               + 16 * b_tile * H)                 # loop carries

    grid_spec = pltpu.PrefetchScalarGridSpec(
        num_scalar_prefetch=0,
        grid=(nbt,),
        in_specs=[
            pl.BlockSpec((T, b_tile, E), lambda i: (0, i, 0)),
            pl.BlockSpec((b_tile, 1), lambda i: (i, 0)),
            pl.BlockSpec((E, 8 * H), lambda i: (0, 0)),
            pl.BlockSpec((1, 8 * H), lambda i: (0, 0)),
            pl.BlockSpec((H, 4 * H), lambda i: (0, 0)),
            pl.BlockSpec((H, 4 * H), lambda i: (0, 0)),
        ],
        out_specs=pl.BlockSpec((b_tile, 2 * H), lambda i: (i, 0)),
        scratch_shapes=[pltpu.VMEM((T, b_tile, 4 * H), jnp.float32),
                        pltpu.VMEM((T, b_tile, 4 * H), jnp.float32)],
    )
    return pl.pallas_call(
        _bilstm_maxpool_kernel,
        out_shape=jax.ShapeDtypeStruct((B_pad, 2 * H), jnp.float32),
        grid_spec=grid_spec,
        compiler_params=pltpu.CompilerParams(
            dimension_semantics=("parallel",),
            vmem_limit_bytes=_vmem_limit_bytes(est)),
    )(x_tbe, lens_b1,
      lstm_params["wih_cat_t"], lstm_params["b_cat"],
      lstm_params["whh_f_t"], lstm_params["whh_b_t"])


def mlp_forward(u, v, mlp_params):
    B, two_h = u.shape
    hidden = mlp_params["w2_t"].shape[0]
    num_labels = mlp_params["w3_t"].shape[1]
    est = 4 * (2 * B * two_h + 4 * two_h * hidden + hidden * hidden
               + hidden * num_labels + 4 * B * (two_h + hidden) + B * num_labels)
    # TODO(synk): for production sizes (H=2048, hidden=512) tile W1 over a grid
    # instead of whole-array VMEM residency (W1 alone is 32 MiB f32, tight on
    # v7x's 64 MiB VMEM).
    return pl.pallas_call(
        _mlp_kernel,
        out_shape=jax.ShapeDtypeStruct((B, num_labels), jnp.float32),
        in_specs=[_VMEM] * 11,
        out_specs=_VMEM,
        compiler_params=pltpu.CompilerParams(
            vmem_limit_bytes=_vmem_limit_bytes(est)),
    )(u, v,
      mlp_params["w1_u"], mlp_params["w1_v"], mlp_params["w1_d"],
      mlp_params["w1_p"], mlp_params["b1"],
      mlp_params["w2_t"], mlp_params["b2"],
      mlp_params["w3_t"], mlp_params["b3"])


def bilstm_maxpool_nli_forward(sentence1, lengths1, sentence2, lengths2, params):
    emb = params["embedding"]
    B, T = sentence1.shape

    # Both sentences share the BiLSTM -> stack them along the batch and run a
    # single pallas_call.
    tokens = jnp.concatenate([sentence1, sentence2], axis=0)            # (2B, T)
    lengths = jnp.concatenate([lengths1, lengths2], axis=0).astype(jnp.int32)

    # TODO(synk): embedding gather kept in plain JAX (glue, not the hot path).
    x = jnp.take(emb, tokens, axis=0)                                   # (2B, T, E)
    x = jnp.transpose(x, (1, 0, 2)).astype(PARAM_DTYPE)                 # (T, 2B, E)

    b_eff = 2 * B
    b_tile = min(_round_up(b_eff, 8), 128)
    b_pad = _round_up(b_eff, b_tile)
    if b_pad != b_eff:
        x = jnp.pad(x, ((0, 0), (0, b_pad - b_eff), (0, 0)))
        lengths = jnp.pad(lengths, (0, b_pad - b_eff), constant_values=1)
    lens_b1 = lengths.reshape(b_pad, 1)

    pooled = bilstm_maxpool(x, lens_b1, params["lstm"], b_tile)         # (b_pad, 2H)
    u = pooled[:B]                                                      # sentence1
    v = pooled[B:2 * B]                                                 # sentence2
    return mlp_forward(u, v, params["mlp"])


# ---------------------------- parameter setup --------------------------------

def init_params(key, embedding_dim, bilstm_dim, hidden_dim, vocab_size, num_labels):
    ks = jax.random.split(key, 16)
    H, E = bilstm_dim, embedding_dim
    s = 0.1

    def n(k, shape):
        return (s * jax.random.normal(k, shape)).astype(jnp.float32)

    # LSTM weights (PyTorch layout (4H,E)/(4H,H), gate order i,f,g,o), stored
    # transposed for x @ W.  Both directions' W_ih are concatenated column-wise
    # (one fused input-projection GEMM); b_ih + b_hh are pre-summed and folded.
    wih_f = n(ks[1], (4 * H, E));  whh_f = n(ks[2], (4 * H, H))
    bih_f = n(ks[3], (4 * H,));    bhh_f = n(ks[4], (4 * H,))
    wih_b = n(ks[5], (4 * H, E));  whh_b = n(ks[6], (4 * H, H))
    bih_b = n(ks[7], (4 * H,));    bhh_b = n(ks[8], (4 * H,))

    w1 = n(ks[9], (hidden_dim, 8 * H));        b1 = n(ks[10], (hidden_dim,))
    w2 = n(ks[11], (hidden_dim, hidden_dim));  b2 = n(ks[12], (hidden_dim,))
    w3 = n(ks[13], (num_labels, hidden_dim));  b3 = n(ks[14], (num_labels,))

    wih_cat_t = jnp.concatenate([wih_f.T, wih_b.T], axis=1)        # (E, 8H)
    b_cat = jnp.concatenate([bih_f + bhh_f, bih_b + bhh_b]).reshape(1, 8 * H)
    w1_t = w1.T      # (8H, hidden): row blocks ordered [u, v, |u-v|, u*v]
    return {
        "embedding": n(ks[0], (vocab_size, E)).astype(PARAM_DTYPE),
        "lstm": {
            "wih_cat_t": wih_cat_t.astype(PARAM_DTYPE),
            "b_cat": b_cat.astype(jnp.float32),
            "whh_f_t": whh_f.T.astype(PARAM_DTYPE),
            "whh_b_t": whh_b.T.astype(PARAM_DTYPE),
        },
        "mlp": {
            "w1_u": w1_t[0 * 2 * H:1 * 2 * H].astype(PARAM_DTYPE),
            "w1_v": w1_t[1 * 2 * H:2 * 2 * H].astype(PARAM_DTYPE),
            "w1_d": w1_t[2 * 2 * H:3 * 2 * H].astype(PARAM_DTYPE),
            "w1_p": w1_t[3 * 2 * H:4 * 2 * H].astype(PARAM_DTYPE),
            "b1": b1.reshape(1, -1),
            "w2_t": w2.T.astype(PARAM_DTYPE), "b2": b2.reshape(1, -1),
            "w3_t": w3.T.astype(PARAM_DTYPE), "b3": b3.reshape(1, -1),
        },
    }


# --------------------------------- main --------------------------------------

if __name__ == "__main__":
    B, T = 2, 8
    embedding_dim, bilstm_dim, hidden_dim = 32, 32, 32
    vocab_size, num_labels = 100, 3

    key = jax.random.PRNGKey(0)
    k_params, k_s1, k_s2 = jax.random.split(key, 3)

    params = init_params(k_params, embedding_dim, bilstm_dim, hidden_dim,
                         vocab_size, num_labels)

    sentence1 = jax.random.randint(k_s1, (B, T), 0, vocab_size, dtype=jnp.int32)
    sentence2 = jax.random.randint(k_s2, (B, T), 0, vocab_size, dtype=jnp.int32)
    lengths1 = jnp.array([T, 5], dtype=jnp.int32)   # max(lengths) == T, lengths >= 1
    lengths2 = jnp.array([T, 6], dtype=jnp.int32)

    fwd = jax.jit(bilstm_maxpool_nli_forward)
    logits = fwd(sentence1, lengths1, sentence2, lengths2, params)
    logits = jax.block_until_ready(logits)

    assert logits.shape == (B, num_labels), logits.shape
    assert bool(jnp.all(jnp.isfinite(logits)))
    print("KERNEL_OK")
</pallas_src>

<mosaic_0001>
module attributes {stable_mosaic.version = 11 : i64} {
  func.func @_mlp_kernel(%arg0: memref<2x64xf32, #tpu.memory_space<vmem>>, %arg1: memref<2x64xf32, #tpu.memory_space<vmem>>, %arg2: memref<64x32xf32, #tpu.memory_space<vmem>>, %arg3: memref<64x32xf32, #tpu.memory_space<vmem>>, %arg4: memref<64x32xf32, #tpu.memory_space<vmem>>, %arg5: memref<64x32xf32, #tpu.memory_space<vmem>>, %arg6: memref<1x32xf32, #tpu.memory_space<vmem>>, %arg7: memref<32x32xf32, #tpu.memory_space<vmem>>, %arg8: memref<1x32xf32, #tpu.memory_space<vmem>>, %arg9: memref<32x3xf32, #tpu.memory_space<vmem>>, %arg10: memref<1x3xf32, #tpu.memory_space<vmem>>, %arg11: memref<2x3xf32, #tpu.memory_space<vmem>>) attributes {dimension_semantics = [], scalar_prefetch = 0 : i64, scratch_operands = 0 : i64, tpu.core_type = #tpu.core_type<tc>} {
    %c0 = arith.constant 0 : index
    %c0_0 = arith.constant 0 : index
    %0 = vector.load %arg0[%c0, %c0_0] : memref<2x64xf32, #tpu.memory_space<vmem>>, vector<2x64xf32>
    %c0_1 = arith.constant 0 : index
    %c0_2 = arith.constant 0 : index
    %1 = vector.load %arg1[%c0_1, %c0_2] : memref<2x64xf32, #tpu.memory_space<vmem>>, vector<2x64xf32>
    %c0_3 = arith.constant 0 : index
    %c0_4 = arith.constant 0 : index
    %2 = vector.load %arg2[%c0_3, %c0_4] : memref<64x32xf32, #tpu.memory_space<vmem>>, vector<64x32xf32>
    %cst = arith.constant dense<0.000000e+00> : vector<2x32xf32>
    %3 = tpu.matmul %0, %2, %cst {dimension_numbers = #tpu.dot_dimension_numbers<[1], [0], [0], [1], [0, 0, 1, 1], [], []>} : vector<2x64xf32>, vector<64x32xf32>, vector<2x32xf32> -> vector<2x32xf32>
    %c0_5 = arith.constant 0 : index
    %c0_6 = arith.constant 0 : index
    %4 = vector.load %arg3[%c0_5, %c0_6] : memref<64x32xf32, #tpu.memory_space<vmem>>, vector<64x32xf32>
    %cst_7 = arith.constant dense<0.000000e+00> : vector<2x32xf32>
    %5 = tpu.matmul %1, %4, %cst_7 {dimension_numbers = #tpu.dot_dimension_numbers<[1], [0], [0], [1], [0, 0, 1, 1], [], []>} : vector<2x64xf32>, vector<64x32xf32>, vector<2x32xf32> -> vector<2x32xf32>
    %6 = arith.addf %3, %5 : vector<2x32xf32>
    %7 = arith.subf %0, %1 : vector<2x64xf32>
    %8 = math.absf %7 : vector<2x64xf32>
    %c0_8 = arith.constant 0 : index
    %c0_9 = arith.constant 0 : index
    %9 = vector.load %arg4[%c0_8, %c0_9] : memref<64x32xf32, #tpu.memory_space<vmem>>, vector<64x32xf32>
    %cst_10 = arith.constant dense<0.000000e+00> : vector<2x32xf32>
    %10 = tpu.matmul %8, %9, %cst_10 {dimension_numbers = #tpu.dot_dimension_numbers<[1], [0], [0], [1], [0, 0, 1, 1], [], []>} : vector<2x64xf32>, vector<64x32xf32>, vector<2x32xf32> -> vector<2x32xf32>
    %11 = arith.addf %6, %10 : vector<2x32xf32>
    %12 = arith.mulf %0, %1 : vector<2x64xf32>
    %c0_11 = arith.constant 0 : index
    %c0_12 = arith.constant 0 : index
    %13 = vector.load %arg5[%c0_11, %c0_12] : memref<64x32xf32, #tpu.memory_space<vmem>>, vector<64x32xf32>
    %cst_13 = arith.constant dense<0.000000e+00> : vector<2x32xf32>
    %14 = tpu.matmul %12, %13, %cst_13 {dimension_numbers = #tpu.dot_dimension_numbers<[1], [0], [0], [1], [0, 0, 1, 1], [], []>} : vector<2x64xf32>, vector<64x32xf32>, vector<2x32xf32> -> vector<2x32xf32>
    %15 = arith.addf %11, %14 : vector<2x32xf32>
    %c0_14 = arith.constant 0 : index
    %c0_15 = arith.constant 0 : index
    %16 = vector.load %arg6[%c0_14, %c0_15] : memref<1x32xf32, #tpu.memory_space<vmem>>, vector<1x32xf32>
    %17 = vector.broadcast %16 : vector<1x32xf32> to vector<2x32xf32>
    %18 = arith.addf %15, %17 : vector<2x32xf32>
    %c0_16 = arith.constant 0 : index
    %c0_17 = arith.constant 0 : index
    %19 = vector.load %arg7[%c0_16, %c0_17] : memref<32x32xf32, #tpu.memory_space<vmem>>, vector<32x32xf32>
    %cst_18 = arith.constant dense<0.000000e+00> : vector<2x32xf32>
    %20 = tpu.matmul %18, %19, %cst_18 {dimension_numbers = #tpu.dot_dimension_numbers<[1], [0], [0], [1], [0, 0, 1, 1], [], []>} : vector<2x32xf32>, vector<32x32xf32>, vector<2x32xf32> -> vector<2x32xf32>
    %c0_19 = arith.constant 0 : index
    %c0_20 = arith.constant 0 : index
    %21 = vector.load %arg8[%c0_19, %c0_20] : memref<1x32xf32, #tpu.memory_space<vmem>>, vector<1x32xf32>
    %22 = vector.broadcast %21 : vector<1x32xf32> to vector<2x32xf32>
    %23 = arith.addf %20, %22 : vector<2x32xf32>
    %c0_21 = arith.constant 0 : index
    %c0_22 = arith.constant 0 : index
    %24 = vector.load %arg9[%c0_21, %c0_22] : memref<32x3xf32, #tpu.memory_space<vmem>>, vector<32x3xf32>
    %cst_23 = arith.constant dense<0.000000e+00> : vector<2x3xf32>
    %25 = tpu.matmul %23, %24, %cst_23 {dimension_numbers = #tpu.dot_dimension_numbers<[1], [0], [0], [1], [0, 0, 1, 1], [], []>} : vector<2x32xf32>, vector<32x3xf32>, vector<2x3xf32> -> vector<2x3xf32>
    %c0_24 = arith.constant 0 : index
    %c0_25 = arith.constant 0 : index
    %26 = vector.load %arg10[%c0_24, %c0_25] : memref<1x3xf32, #tpu.memory_space<vmem>>, vector<1x3xf32>
    %27 = vector.broadcast %26 : vector<1x3xf32> to vector<2x3xf32>
    %28 = arith.addf %25, %27 : vector<2x3xf32>
    %c0_26 = arith.constant 0 : index
    %c0_27 = arith.constant 0 : index
    %29 = vector.load %arg11[%c0_26, %c0_27] : memref<2x3xf32, #tpu.memory_space<vmem>>, vector<2x3xf32>
    tpu.vector_store %arg11[%c0_26, %c0_27], %28 {strides = array<i32>} : memref<2x3xf32, #tpu.memory_space<vmem>>, vector<2x3xf32>,
    return
  }
}

module attributes {stable_mosaic.version = 11 : i64} {
  func.func @_bilstm_maxpool_kernel(%arg0: i32, %arg1: memref<8x8x32xf32, #tpu.memory_space<vmem>>, %arg2: memref<8x1xi32, #tpu.memory_space<vmem>>, %arg3: memref<32x256xf32, #tpu.memory_space<vmem>>, %arg4: memref<1x256xf32, #tpu.memory_space<vmem>>, %arg5: memref<32x128xf32, #tpu.memory_space<vmem>>, %arg6: memref<32x128xf32, #tpu.memory_space<vmem>>, %arg7: memref<8x64xf32, #tpu.memory_space<vmem>>, %arg8: memref<8x8x128xf32, #tpu.memory_space<vmem>>, %arg9: memref<8x8x128xf32, #tpu.memory_space<vmem>>) attributes {dimension_semantics = [#tpu.dimension_semantics<parallel>], iteration_bounds = array<i64: 1>, scalar_prefetch = 0 : i64, scratch_operands = 2 : i64, tpu.core_type = #tpu.core_type<tc>, window_params = [{transform_indices = @transform_0, window_bounds = array<i64: 8, 8, 32>}, {transform_indices = @transform_1, window_bounds = array<i64: 8, 1>}, {pipeline_mode = #tpu.pipeline_mode<synchronous>, transform_indices = @transform_2, window_bounds = array<i64: 32, 256>}, {pipeline_mode = #tpu.pipeline_mode<synchronous>, transform_indices = @transform_3, window_bounds = array<i64: 1, 256>}, {pipeline_mode = #tpu.pipeline_mode<synchronous>, transform_indices = @transform_4, window_bounds = array<i64: 32, 128>}, {pipeline_mode = #tpu.pipeline_mode<synchronous>, transform_indices = @transform_5, window_bounds = array<i64: 32, 128>}, {transform_indices = @transform_6, window_bounds = array<i64: 8, 64>}]} {
    %c0 = arith.constant 0 : index
    %c0_0 = arith.constant 0 : index
    %c0_1 = arith.constant 0 : index
    %0 = vector.load %arg1[%c0, %c0_0, %c0_1] : memref<8x8x32xf32, #tpu.memory_space<vmem>>, vector<8x8x32xf32>
    %1 = vector.shape_cast %0 : vector<8x8x32xf32> to vector<64x32xf32>
    %c0_2 = arith.constant 0 : index
    %c0_3 = arith.constant 0 : index
    %2 = vector.load %arg3[%c0_2, %c0_3] : memref<32x256xf32, #tpu.memory_space<vmem>>, vector<32x256xf32>
    %cst = arith.constant dense<0.000000e+00> : vector<64x256xf32>
    %3 = tpu.matmul %1, %2, %cst {dimension_numbers = #tpu.dot_dimension_numbers<[1], [0], [0], [1], [0, 0, 1, 1], [], []>} : vector<64x32xf32>, vector<32x256xf32>, vector<64x256xf32> -> vector<64x256xf32>
    %c0_4 = arith.constant 0 : index
    %c0_5 = arith.constant 0 : index
    %4 = vector.load %arg4[%c0_4, %c0_5] : memref<1x256xf32, #tpu.memory_space<vmem>>, vector<1x256xf32>
    %5 = vector.broadcast %4 : vector<1x256xf32> to vector<64x256xf32>
    %6 = arith.addf %3, %5 : vector<64x256xf32>
    %7 = vector.extract_strided_slice %6 {offsets = [0, 0], sizes = [64, 128], strides = [1, 1]} : vector<64x256xf32> to vector<64x128xf32>
    %8 = vector.shape_cast %7 : vector<64x128xf32> to vector<8x8x128xf32>
    %c0_6 = arith.constant 0 : index
    %c0_7 = arith.constant 0 : index
    %c0_8 = arith.constant 0 : index
    %9 = vector.load %arg8[%c0_6, %c0_7, %c0_8] : memref<8x8x128xf32, #tpu.memory_space<vmem>>, vector<8x8x128xf32>
    tpu.vector_store %arg8[%c0_6, %c0_7, %c0_8], %8 {strides = array<i32>} : memref<8x8x128xf32, #tpu.memory_space<vmem>>, vector<8x8x128xf32>,
    %10 = vector.extract_strided_slice %6 {offsets = [0, 128], sizes = [64, 128], strides = [1, 1]} : vector<64x256xf32> to vector<64x128xf32>
    %11 = vector.shape_cast %10 : vector<64x128xf32> to vector<8x8x128xf32>
    %c0_9 = arith.constant 0 : index
    %c0_10 = arith.constant 0 : index
    %c0_11 = arith.constant 0 : index
    %12 = vector.load %arg9[%c0_9, %c0_10, %c0_11] : memref<8x8x128xf32, #tpu.memory_space<vmem>>, vector<8x8x128xf32>
    tpu.vector_store %arg9[%c0_9, %c0_10, %c0_11], %11 {strides = array<i32>} : memref<8x8x128xf32, #tpu.memory_space<vmem>>, vector<8x8x128xf32>,
    %c0_12 = arith.constant 0 : index
    %c0_13 = arith.constant 0 : index
    %13 = vector.load %arg5[%c0_12, %c0_13] : memref<32x128xf32, #tpu.memory_space<vmem>>, vector<32x128xf32>
    %c0_14 = arith.constant 0 : index
    %c0_15 = arith.constant 0 : index
    %14 = vector.load %arg6[%c0_14, %c0_15] : memref<32x128xf32, #tpu.memory_space<vmem>>, vector<32x128xf32>
    %c0_16 = arith.constant 0 : index
    %c0_17 = arith.constant 0 : index
    %15 = vector.load %arg2[%c0_16, %c0_17] : memref<8x1xi32, #tpu.memory_space<vmem>>, vector<8x1xi32>
    %cst_18 = arith.constant 0.000000e+00 : f32
    %16 = vector.broadcast %cst_18 : f32 to vector<8x32xf32>
    %cst_19 = arith.constant 0xFF800000 : f32
    %17 = vector.broadcast %cst_19 : f32 to vector<8x32xf32>
    %c0_i32 = arith.constant 0 : i32
    %18 = arith.index_cast %c0_i32 : i32 to index
    %c0_20 = arith.constant 0 : index
    %c0_21 = arith.constant 0 : index
    %19 = vector.load %arg8[%18, %c0_20, %c0_21] : memref<8x8x128xf32, #tpu.memory_space<vmem>>, vector<1x8x128xf32>
    %20 = vector.shape_cast %19 : vector<1x8x128xf32> to vector<8x128xf32>
    %21 = vector.broadcast %c0_i32 : i32 to vector<8x1xi32>
    %22 = arith.cmpi slt, %21, %15 : vector<8x1xi32>
    %cst_22 = arith.constant dense<0.000000e+00> : vector<8x128xf32>
    %23 = tpu.matmul %16, %13, %cst_22 {dimension_numbers = #tpu.dot_dimension_numbers<[1], [0], [0], [1], [0, 0, 1, 1], [], []>} : vector<8x32xf32>, vector<32x128xf32>, vector<8x128xf32> -> vector<8x128xf32>
    %24 = arith.addf %20, %23 : vector<8x128xf32>
    %25 = vector.extract_strided_slice %24 {offsets = [0, 0], sizes = [8, 32], strides = [1, 1]} : vector<8x128xf32> to vector<8x32xf32>
    %26 = arith.negf %25 : vector<8x32xf32>
    %27 = math.exp %26 : vector<8x32xf32>
    %cst_23 = arith.constant 1.000000e+00 : f32
    %28 = vector.broadcast %cst_23 : f32 to vector<8x32xf32>
    %29 = arith.addf %28, %27 : vector<8x32xf32>
    %30 = arith.divf %28, %29 : vector<8x32xf32>
    %31 = vector.extract_strided_slice %24 {offsets = [0, 32], sizes = [8, 32], strides = [1, 1]} : vector<8x128xf32> to vector<8x32xf32>
    %32 = arith.negf %31 : vector<8x32xf32>
    %33 = math.exp %32 : vector<8x32xf32>
    %cst_24 = arith.constant 1.000000e+00 : f32
    %34 = vector.broadcast %cst_24 : f32 to vector<8x32xf32>
    %35 = arith.addf %34, %33 : vector<8x32xf32>
    %36 = arith.divf %34, %35 : vector<8x32xf32>
    %37 = vector.extract_strided_slice %24 {offsets = [0, 64], sizes = [8, 32], strides = [1, 1]} : vector<8x128xf32> to vector<8x32xf32>
    %38 = math.tanh %37 : vector<8x32xf32>
    %39 = vector.extract_strided_slice %24 {offsets = [0, 96], sizes = [8, 32], strides = [1, 1]} : vector<8x128xf32> to vector<8x32xf32>
    %40 = arith.negf %39 : vector<8x32xf32>
    %41 = math.exp %40 : vector<8x32xf32>
    %cst_25 = arith.constant 1.000000e+00 : f32
    %42 = vector.broadcast %cst_25 : f32 to vector<8x32xf32>
    %43 = arith.addf %42, %41 : vector<8x32xf32>
    %44 = arith.divf %42, %43 : vector<8x32xf32>
    %45 = arith.mulf %36, %16 : vector<8x32xf32>
    %46 = arith.mulf %30, %38 : vector<8x32xf32>
    %47 = arith.addf %45, %46 : vector<8x32xf32>
    %48 = math.tanh %47 : vector<8x32xf32>
    %49 = arith.mulf %44, %48 : vector<8x32xf32>
    %50 = vector.shape_cast %22 : vector<8x1xi1> to vector<8x1xi1>
    %51 = vector.broadcast %50 : vector<8x1xi1> to vector<8x32xi1>
    %52 = arith.select %51, %49, %16 : vector<8x32xi1>, vector<8x32xf32>
    %53 = vector.shape_cast %22 : vector<8x1xi1> to vector<8x1xi1>
    %54 = vector.broadcast %53 : vector<8x1xi1> to vector<8x32xi1>
    %55 = arith.select %54, %47, %16 : vector<8x32xi1>, vector<8x32xf32>
    %cst_26 = arith.constant 0.000000e+00 : f32
    %56 = vector.shape_cast %22 : vector<8x1xi1> to vector<8x1xi1>
    %57 = vector.broadcast %56 : vector<8x1xi1> to vector<8x32xi1>
    %58 = vector.broadcast %cst_26 : f32 to vector<8x32xf32>
    %59 = arith.select %57, %49, %58 : vector<8x32xi1>, vector<8x32xf32>
    %60 = arith.maximumf %17, %59 : vector<8x32xf32>
    %c7_i32 = arith.constant 7 : i32
    %61 = arith.subi %c7_i32, %c0_i32 : i32
    %62 = arith.index_cast %61 : i32 to index
    %c0_27 = arith.constant 0 : index
    %c0_28 = arith.constant 0 : index
    %63 = vector.load %arg9[%62, %c0_27, %c0_28] : memref<8x8x128xf32, #tpu.memory_space<vmem>>, vector<1x8x128xf32>
    %64 = vector.shape_cast %63 : vector<1x8x128xf32> to vector<8x128xf32>
    %65 = vector.broadcast %61 : i32 to vector<8x1xi32>
    %66 = arith.cmpi slt, %65, %15 : vector<8x1xi32>
    %cst_29 = arith.constant dense<0.000000e+00> : vector<8x128xf32>
    %67 = tpu.matmul %16, %14, %cst_29 {dimension_numbers = #tpu.dot_dimension_numbers<[1], [0], [0], [1], [0, 0, 1, 1], [], []>} : vector<8x32xf32>, vector<32x128xf32>, vector<8x128xf32> -> vector<8x128xf32>
    %68 = arith.addf %64, %67 : vector<8x128xf32>
    %69 = vector.extract_strided_slice %68 {offsets = [0, 0], sizes = [8, 32], strides = [1, 1]} : vector<8x128xf32> to vector<8x32xf32>
    %70 = arith.negf %69 : vector<8x32xf32>
    %71 = math.exp %70 : vector<8x32xf32>
    %cst_30 = arith.constant 1.000000e+00 : f32
    %72 = vector.broadcast %cst_30 : f32 to vector<8x32xf32>
    %73 = arith.addf %72, %71 : vector<8x32xf32>
    %74 = arith.divf %72, %73 : vector<8x32xf32>
    %75 = vector.extract_strided_slice %68 {offsets = [0, 32], sizes = [8, 32], strides = [1, 1]} : vector<8x128xf32> to vector<8x32xf32>
    %76 = arith.negf %75 : vector<8x32xf32>
    %77 = math.exp %76 : vector<8x32xf32>
    %cst_31 = arith.constant 1.000000e+00 : f32
    %78 = vector.broadcast %cst_31 : f32 to vector<8x32xf32>
    %79 = arith.addf %78, %77 : vector<8x32xf32>
    %80 = arith.divf %78, %79 : vector<8x32xf32>
    %81 = vector.extract_strided_slice %68 {offsets = [0, 64], sizes = [8, 32], strides = [1, 1]} : vector<8x128xf32> to vector<8x32xf32>
    %82 = math.tanh %81 : vector<8x32xf32>
    %83 = vector.extract_strided_slice %68 {offsets = [0, 96], sizes = [8, 32], strides = [1, 1]} : vector<8x128xf32> to vector<8x32xf32>
    %84 = arith.negf %83 : vector<8x32xf32>
    %85 = math.exp %84 : vector<8x32xf32>
    %cst_32 = arith.constant 1.000000e+00 : f32
    %86 = vector.broadcast %cst_32 : f32 to vector<8x32xf32>
    %87 = arith.addf %86, %85 : vector<8x32xf32>
    %88 = arith.divf %86, %87 : vector<8x32xf32>
    %89 = arith.mulf %80, %16 : vector<8x32xf32>
    %90 = arith.mulf %74, %82 : vector<8x32xf32>
    %91 = arith.addf %89, %90 : vector<8x32xf32>
    %92 = math.tanh %91 : vector<8x32xf32>
    %93 = arith.mulf %88, %92 : vector<8x32xf32>
    %94 = vector.shape_cast %66 : vector<8x1xi1> to vector<8x1xi1>
    %95 = vector.broadcast %94 : vector<8x1xi1> to vector<8x32xi1>
    %96 = arith.select %95, %93, %16 : vector<8x32xi1>, vector<8x32xf32>
    %97 = vector.shape_cast %66 : vector<8x1xi1> to vector<8x1xi1>
    %98 = vector.broadcast %97 : vector<8x1xi1> to vector<8x32xi1>
    %99 = arith.select %98, %91, %16 : vector<8x32xi1>, vector<8x32xf32>
    %cst_33 = arith.constant 0.000000e+00 : f32
    %100 = vector.shape_cast %66 : vector<8x1xi1> to vector<8x1xi1>
    %101 = vector.broadcast %100 : vector<8x1xi1> to vector<8x32xi1>
    %102 = vector.broadcast %cst_33 : f32 to vector<8x32xf32>
    %103 = arith.select %101, %93, %102 : vector<8x32xi1>, vector<8x32xf32>
    %104 = arith.maximumf %17, %103 : vector<8x32xf32>
    %c1_i32 = arith.constant 1 : i32
    %105 = arith.index_cast %c1_i32 : i32 to index
    %c0_34 = arith.constant 0 : index
    %c0_35 = arith.constant 0 : index
    %106 = vector.load %arg8[%105, %c0_34, %c0_35] : memref<8x8x128xf32, #tpu.memory_space<vmem>>, vector<1x8x128xf32>
    %107 = vector.shape_cast %106 : vector<1x8x128xf32> to vector<8x128xf32>
    %108 = vector.broadcast %c1_i32 : i32 to vector<8x1xi32>
    %109 = arith.cmpi slt, %108, %15 : vector<8x1xi32>
    %cst_36 = arith.constant dense<0.000000e+00> : vector<8x128xf32>
    %110 = tpu.matmul %52, %13, %cst_36 {dimension_numbers = #tpu.dot_dimension_numbers<[1], [0], [0], [1], [0, 0, 1, 1], [], []>} : vector<8x32xf32>, vector<32x128xf32>, vector<8x128xf32> -> vector<8x128xf32>
    %111 = arith.addf %107, %110 : vector<8x128xf32>
    %112 = vector.extract_strided_slice %111 {offsets = [0, 0], sizes = [8, 32], strides = [1, 1]} : vector<8x128xf32> to vector<8x32xf32>
    %113 = arith.negf %112 : vector<8x32xf32>
    %114 = math.exp %113 : vector<8x32xf32>
    %cst_37 = arith.constant 1.000000e+00 : f32
    %115 = vector.broadcast %cst_37 : f32 to vector<8x32xf32>
    %116 = arith.addf %115, %114 : vector<8x32xf32>
    %117 = arith.divf %115, %116 : vector<8x32xf32>
    %118 = vector.extract_strided_slice %111 {offsets = [0, 32], sizes = [8, 32], strides = [1, 1]} : vector<8x128xf32> to vector<8x32xf32>
    %119 = arith.negf %118 : vector<8x32xf32>
    %120 = math.exp %119 : vector<8x32xf32>
    %cst_38 = arith.constant 1.000000e+00 : f32
    %121 = vector.broadcast %cst_38 : f32 to vector<8x32xf32>
    %122 = arith.addf %121, %120 : vector<8x32xf32>
    %123 = arith.divf %121, %122 : vector<8x32xf32>
    %124 = vector.extract_strided_slice %111 {offsets = [0, 64], sizes = [8, 32], strides = [1, 1]} : vector<8x128xf32> to vector<8x32xf32>
    %125 = math.tanh %124 : vector<8x32xf32>
    %126 = vector.extract_strided_slice %111 {offsets = [0, 96], sizes = [8, 32], strides = [1, 1]} : vector<8x128xf32> to vector<8x32xf32>
    %127 = arith.negf %126 : vector<8x32xf32>
    %128 = math.exp %127 : vector<8x32xf32>
    %cst_39 = arith.constant 1.000000e+00 : f32
    %129 = vector.broadcast %cst_39 : f32 to vector<8x32xf32>
    %130 = arith.addf %129, %128 : vector<8x32xf32>
    %131 = arith.divf %129, %130 : vector<8x32xf32>
    %132 = arith.mulf %123, %55 : vector<8x32xf32>
    %133 = arith.mulf %117, %125 : vector<8x32xf32>
    %134 = arith.addf %132, %133 : vector<8x32xf32>
    %135 = math.tanh %134 : vector<8x32xf32>
    %136 = arith.mulf %131, %135 : vector<8x32xf32>
    %137 = vector.shape_cast %109 : vector<8x1xi1> to vector<8x1xi1>
    %138 = vector.broadcast %137 : vector<8x1xi1> to vector<8x32xi1>
    %139 = arith.select %138, %136, %52 : vector<8x32xi1>, vector<8x32xf32>
    %140 = vector.shape_cast %109 : vector<8x1xi1> to vector<8x1xi1>
    %141 = vector.broadcast %140 : vector<8x1xi1> to vector<8x32xi1>
    %142 = arith.select %141, %134, %55 : vector<8x32xi1>, vector<8x32xf32>
    %cst_40 = arith.constant 0.000000e+00 : f32
    %143 = vector.shape_cast %109 : vector<8x1xi1> to vector<8x1xi1>
    %144 = vector.broadcast %143 : vector<8x1xi1> to vector<8x32xi1>
    %145 = vector.broadcast %cst_40 : f32 to vector<8x32xf32>
    %146 = arith.select %144, %136, %145 : vector<8x32xi1>, vector<8x32xf32>
    %147 = arith.maximumf %60, %146 : vector<8x32xf32>
    %c7_i32_41 = arith.constant 7 : i32
    %148 = arith.subi %c7_i32_41, %c1_i32 : i32
    %149 = arith.index_cast %148 : i32 to index
    %c0_42 = arith.constant 0 : index
    %c0_43 = arith.constant 0 : index
    %150 = vector.load %arg9[%149, %c0_42, %c0_43] : memref<8x8x128xf32, #tpu.memory_space<vmem>>, vector<1x8x128xf32>
    %151 = vector.shape_cast %150 : vector<1x8x128xf32> to vector<8x128xf32>
    %152 = vector.broadcast %148 : i32 to vector<8x1xi32>
    %153 = arith.cmpi slt, %152, %15 : vector<8x1xi32>
    %cst_44 = arith.constant dense<0.000000e+00> : vector<8x128xf32>
    %154 = tpu.matmul %96, %14, %cst_44 {dimension_numbers = #tpu.dot_dimension_numbers<[1], [0], [0], [1], [0, 0, 1, 1], [], []>} : vector<8x32xf32>, vector<32x128xf32>, vector<8x128xf32> -> vector<8x128xf32>
    %155 = arith.addf %151, %154 : vector<8x128xf32>
    %156 = vector.extract_strided_slice %155 {offsets = [0, 0], sizes = [8, 32], strides = [1, 1]} : vector<8x128xf32> to vector<8x32xf32>
    %157 = arith.negf %156 : vector<8x32xf32>
    %158 = math.exp %157 : vector<8x32xf32>
    %cst_45 = arith.constant 1.000000e+00 : f32
    %159 = vector.broadcast %cst_45 : f32 to vector<8x32xf32>
    %160 = arith.addf %159, %158 : vector<8x32xf32>
    %161 = arith.divf %159, %160 : vector<8x32xf32>
    %162 = vector.extract_strided_slice %155 {offsets = [0, 32], sizes = [8, 32], strides = [1, 1]} : vector<8x128xf32> to vector<8x32xf32>
    %163 = arith.negf %162 : vector<8x32xf32>
    %164 = math.exp %163 : vector<8x32xf32>
    %cst_46 = arith.constant 1.000000e+00 : f32
    %165 = vector.broadcast %cst_46 : f32 to vector<8x32xf32>
    %166 = arith.addf %165, %164 : vector<8x32xf32>
    %167 = arith.divf %165, %166 : vector<8x32xf32>
    %168 = vector.extract_strided_slice %155 {offsets = [0, 64], sizes = [8, 32], strides = [1, 1]} : vector<8x128xf32> to vector<8x32xf32>
    %169 = math.tanh %168 : vector<8x32xf32>
    %170 = vector.extract_strided_slice %155 {offsets = [0, 96], sizes = [8, 32], strides = [1, 1]} : vector<8x128xf32> to vector<8x32xf32>
    %171 = arith.negf %170 : vector<8x32xf32>
    %172 = math.exp %171 : vector<8x32xf32>
    %cst_47 = arith.constant 1.000000e+00 : f32
    %173 = vector.broadcast %cst_47 : f32 to vector<8x32xf32>
    %174 = arith.addf %173, %172 : vector<8x32xf32>
    %175 = arith.divf %173, %174 : vector<8x32xf32>
    %176 = arith.mulf %167, %99 : vector<8x32xf32>
    %177 = arith.mulf %161, %169 : vector<8x32xf32>
    %178 = arith.addf %176, %177 : vector<8x32xf32>
    %179 = math.tanh %178 : vector<8x32xf32>
    %180 = arith.mulf %175, %179 : vector<8x32xf32>
    %181 = vector.shape_cast %153 : vector<8x1xi1> to vector<8x1xi1>
    %182 = vector.broadcast %181 : vector<8x1xi1> to vector<8x32xi1>
    %183 = arith.select %182, %180, %96 : vector<8x32xi1>, vector<8x32xf32>
    %184 = vector.shape_cast %153 : vector<8x1xi1> to vector<8x1xi1>
    %185 = vector.broadcast %184 : vector<8x1xi1> to vector<8x32xi1>
    %186 = arith.select %185, %178, %99 : vector<8x32xi1>, vector<8x32xf32>
    %cst_48 = arith.constant 0.000000e+00 : f32
    %187 = vector.shape_cast %153 : vector<8x1xi1> to vector<8x1xi1>
    %188 = vector.broadcast %187 : vector<8x1xi1> to vector<8x32xi1>
    %189 = vector.broadcast %cst_48 : f32 to vector<8x32xf32>
    %190 = arith.select %188, %180, %189 : vector<8x32xi1>, vector<8x32xf32>
    %191 = arith.maximumf %104, %190 : vector<8x32xf32>
    %c2_i32 = arith.constant 2 : i32
    %192 = arith.index_cast %c2_i32 : i32 to index
    %c0_49 = arith.constant 0 : index
    %c0_50 = arith.constant 0 : index
    %193 = vector.load %arg8[%192, %c0_49, %c0_50] : memref<8x8x128xf32, #tpu.memory_space<vmem>>, vector<1x8x128xf32>
    %194 = vector.shape_cast %193 : vector<1x8x128xf32> to vector<8x128xf32>
    %195 = vector.broadcast %c2_i32 : i32 to vector<8x1xi32>
    %196 = arith.cmpi slt, %195, %15 : vector<8x1xi32>
    %cst_51 = arith.constant dense<0.000000e+00> : vector<8x128xf32>
    %197 = tpu.matmul %139, %13, %cst_51 {dimension_numbers = #tpu.dot_dimension_numbers<[1], [0], [0], [1], [0, 0, 1, 1], [], []>} : vector<8x32xf32>, vector<32x128xf32>, vector<8x128xf32> -> vector<8x128xf32>
    %198 = arith.addf %194, %197 : vector<8x128xf32>
    %199 = vector.extract_strided_slice %198 {offsets = [0, 0], sizes = [8, 32], strides = [1, 1]} : vector<8x128xf32> to vector<8x32xf32>
    %200 = arith.negf %199 : vector<8x32xf32>
    %201 = math.exp %200 : vector<8x32xf32>
    %cst_52 = arith.constant 1.000000e+00 : f32
    %202 = vector.broadcast %cst_52 : f32 to vector<8x32xf32>
    %203 = arith.addf %202, %201 : vector<8x32xf32>
    %204 = arith.divf %202, %203 : vector<8x32xf32>
    %205 = vector.extract_strided_slice %198 {offsets = [0, 32], sizes = [8, 32], strides = [1, 1]} : vector<8x128xf32> to vector<8x32xf32>
    %206 = arith.negf %205 : vector<8x32xf32>
    %207 = math.exp %206 : vector<8x32xf32>
    %cst_53 = arith.constant 1.000000e+00 : f32
    %208 = vector.broadcast %cst_53 : f32 to vector<8x32xf32>
    %209 = arith.addf %208, %207 : vector<8x32xf32>
    %210 = arith.divf %208, %209 : vector<8x32xf32>
    %211 = vector.extract_strided_slice %198 {offsets = [0, 64], sizes = [8, 32], strides = [1, 1]} : vector<8x128xf32> to vector<8x32xf32>
    %212 = math.tanh %211 : vector<8x32xf32>
    %213 = vector.extract_strided_slice %198 {offsets = [0, 96], sizes = [8, 32], strides = [1, 1]} : vector<8x128xf32> to vector<8x32xf32>
    %214 = arith.negf %213 : vector<8x32xf32>
    %215 = math.exp %214 : vector<8x32xf32>
    %cst_54 = arith.constant 1.000000e+00 : f32
    %216 = vector.broadcast %cst_54 : f32 to vector<8x32xf32>
    %217 = arith.addf %216, %215 : vector<8x32xf32>
    %218 = arith.divf %216, %217 : vector<8x32xf32>
    %219 = arith.mulf %210, %142 : vector<8x32xf32>
    %220 = arith.mulf %204, %212 : vector<8x32xf32>
    %221 = arith.addf %219, %220 : vector<8x32xf32>
    %222 = math.tanh %221 : vector<8x32xf32>
    %223 = arith.mulf %218, %222 : vector<8x32xf32>
    %224 = vector.shape_cast %196 : vector<8x1xi1> to vector<8x1xi1>
    %225 = vector.broadcast %224 : vector<8x1xi1> to vector<8x32xi1>
    %226 = arith.select %225, %223, %139 : vector<8x32xi1>, vector<8x32xf32>
    %227 = vector.shape_cast %196 : vector<8x1xi1> to vector<8x1xi1>
    %228 = vector.broadcast %227 : vector<8x1xi1> to vector<8x32xi1>
    %229 = arith.select %228, %221, %142 : vector<8x32xi1>, vector<8x32xf32>
    %cst_55 = arith.constant 0.000000e+00 : f32
    %230 = vector.shape_cast %196 : vector<8x1xi1> to vector<8x1xi1>
    %231 = vector.broadcast %230 : vector<8x1xi1> to vector<8x32xi1>
    %232 = vector.broadcast %cst_55 : f32 to vector<8x32xf32>
    %233 = arith.select %231, %223, %232 : vector<8x32xi1>, vector<8x32xf32>
    %234 = arith.maximumf %147, %233 : vector<8x32xf32>
    %c7_i32_56 = arith.constant 7 : i32
    %235 = arith.subi %c7_i32_56, %c2_i32 : i32
    %236 = arith.index_cast %235 : i32 to index
    %c0_57 = arith.constant 0 : index
    %c0_58 = arith.constant 0 : index
    %237 = vector.load %arg9[%236, %c0_57, %c0_58] : memref<8x8x128xf32, #tpu.memory_space<vmem>>, vector<1x8x128xf32>
    %238 = vector.shape_cast %237 : vector<1x8x128xf32> to vector<8x128xf32>
    %239 = vector.broadcast %235 : i32 to vector<8x1xi32>
    %240 = arith.cmpi slt, %239, %15 : vector<8x1xi32>
    %cst_59 = arith.constant dense<0.000000e+00> : vector<8x128xf32>
    %241 = tpu.matmul %183, %14, %cst_59 {dimension_numbers = #tpu.dot_dimension_numbers<[1], [0], [0], [1], [0, 0, 1, 1], [], []>} : vector<8x32xf32>, vector<32x128xf32>, vector<8x128xf32> -> vector<8x128xf32>
    %242 = arith.addf %238, %241 : vector<8x128xf32>
    %243 = vector.extract_strided_slice %242 {offsets = [0, 0], sizes = [8, 32], strides = [1, 1]} : vector<8x128xf32> to vector<8x32xf32>
    %244 = arith.negf %243 : vector<8x32xf32>
    %245 = math.exp %244 : vector<8x32xf32>
    %cst_60 = arith.constant 1.000000e+00 : f32
    %246 = vector.broadcast %cst_60 : f32 to vector<8x32xf32>
    %247 = arith.addf %246, %245 : vector<8x32xf32>
    %248 = arith.divf %246, %247 : vector<8x32xf32>
    %249 = vector.extract_strided_slice %242 {offsets = [0, 32], sizes = [8, 32], strides = [1, 1]} : vector<8x128xf32> to vector<8x32xf32>
    %250 = arith.negf %249 : vector<8x32xf32>
    %251 = math.exp %250 : vector<8x32xf32>
    %cst_61 = arith.constant 1.000000e+00 : f32
    %252 = vector.broadcast %cst_61 : f32 to vector<8x32xf32>
    %253 = arith.addf %252, %251 : vector<8x32xf32>
    %254 = arith.divf %252, %253 : vector<8x32xf32>
    %255 = vector.extract_strided_slice %242 {offsets = [0, 64], sizes = [8, 32], strides = [1, 1]} : vector<8x128xf32> to vector<8x32xf32>
    %256 = math.tanh %255 : vector<8x32xf32>
    %257 = vector.extract_strided_slice %242 {offsets = [0, 96], sizes = [8, 32], strides = [1, 1]} : vector<8x128xf32> to vector<8x32xf32>
    %258 = arith.negf %257 : vector<8x32xf32>
    %259 = math.exp %258 : vector<8x32xf32>
    %cst_62 = arith.constant 1.000000e+00 : f32
    %260 = vector.broadcast %cst_62 : f32 to vector<8x32xf32>
    %261 = arith.addf %260, %259 : vector<8x32xf32>
    %262 = arith.divf %260, %261 : vector<8x32xf32>
    %263 = arith.mulf %254, %186 : vector<8x32xf32>
    %264 = arith.mulf %248, %256 : vector<8x32xf32>
    %265 = arith.addf %263, %264 : vector<8x32xf32>
    %266 = math.tanh %265 : vector<8x32xf32>
    %267 = arith.mulf %262, %266 : vector<8x32xf32>
    %268 = vector.shape_cast %240 : vector<8x1xi1> to vector<8x1xi1>
    %269 = vector.broadcast %268 : vector<8x1xi1> to vector<8x32xi1>
    %270 = arith.select %269, %267, %183 : vector<8x32xi1>, vector<8x32xf32>
    %271 = vector.shape_cast %240 : vector<8x1xi1> to vector<8x1xi1>
    %272 = vector.broadcast %271 : vector<8x1xi1> to vector<8x32xi1>
    %273 = arith.select %272, %265, %186 : vector<8x32xi1>, vector<8x32xf32>
    %cst_63 = arith.constant 0.000000e+00 : f32
    %274 = vector.shape_cast %240 : vector<8x1xi1> to vector<8x1xi1>
    %275 = vector.broadcast %274 : vector<8x1xi1> to vector<8x32xi1>
    %276 = vector.broadcast %cst_63 : f32 to vector<8x32xf32>
    %277 = arith.select %275, %267, %276 : vector<8x32xi1>, vector<8x32xf32>
    %278 = arith.maximumf %191, %277 : vector<8x32xf32>
    %c3_i32 = arith.constant 3 : i32
    %279 = arith.index_cast %c3_i32 : i32 to index
    %c0_64 = arith.constant 0 : index
    %c0_65 = arith.constant 0 : index
    %280 = vector.load %arg8[%279, %c0_64, %c0_65] : memref<8x8x128xf32, #tpu.memory_space<vmem>>, vector<1x8x128xf32>
    %281 = vector.shape_cast %280 : vector<1x8x128xf32> to vector<8x128xf32>
    %282 = vector.broadcast %c3_i32 : i32 to vector<8x1xi32>
    %283 = arith.cmpi slt, %282, %15 : vector<8x1xi32>
    %cst_66 = arith.constant dense<0.000000e+00> : vector<8x128xf32>
    %284 = tpu.matmul %226, %13, %cst_66 {dimension_numbers = #tpu.dot_dimension_numbers<[1], [0], [0], [1], [0, 0, 1, 1], [], []>} : vector<8x32xf32>, vector<32x128xf32>, vector<8x128xf32> -> vector<8x128xf32>
    %285 = arith.addf %281, %284 : vector<8x128xf32>
    %286 = vector.extract_strided_slice %285 {offsets = [0, 0], sizes = [8, 32], strides = [1, 1]} : vector<8x128xf32> to vector<8x32xf32>
    %287 = arith.negf %286 : vector<8x32xf32>
    %288 = math.exp %287 : vector<8x32xf32>
    %cst_67 = arith.constant 1.000000e+00 : f32
    %289 = vector.broadcast %cst_67 : f32 to vector<8x32xf32>
    %290 = arith.addf %289, %288 : vector<8x32xf32>
    %291 = arith.divf %289, %290 : vector<8x32xf32>
    %292 = vector.extract_strided_slice %285 {offsets = [0, 32], sizes = [8, 32], strides = [1, 1]} : vector<8x128xf32> to vector<8x32xf32>
    %293 = arith.negf %292 : vector<8x32xf32>
    %294 = math.exp %293 : vector<8x32xf32>
    %cst_68 = arith.constant 1.000000e+00 : f32
    %295 = vector.broadcast %cst_68 : f32 to vector<8x32xf32>
    %296 = arith.addf %295, %294 : vector<8x32xf32>
    %297 = arith.divf %295, %296 : vector<8x32xf32>
    %298 = vector.extract_strided_slice %285 {offsets = [0, 64], sizes = [8, 32], strides = [1, 1]} : vector<8x128xf32> to vector<8x32xf32>
    %299 = math.tanh %298 : vector<8x32xf32>
    %300 = vector.extract_strided_slice %285 {offsets = [0, 96], sizes = [8, 32], strides = [1, 1]} : vector<8x128xf32> to vector<8x32xf32>
    %301 = arith.negf %300 : vector<8x32xf32>
    %302 = math.exp %301 : vector<8x32xf32>
    %cst_69 = arith.constant 1.000000e+00 : f32
    %303 = vector.broadcast %cst_69 : f32 to vector<8x32xf32>
    %304 = arith.addf %303, %302 : vector<8x32xf32>
    %305 = arith.divf %303, %304 : vector<8x32xf32>
    %306 = arith.mulf %297, %229 : vector<8x32xf32>
    %307 = arith.mulf %291, %299 : vector<8x32xf32>
    %308 = arith.addf %306, %307 : vector<8x32xf32>
    %309 = math.tanh %308 : vector<8x32xf32>
    %310 = arith.mulf %305, %309 : vector<8x32xf32>
    %311 = vector.shape_cast %283 : vector<8x1xi1> to vector<8x1xi1>
    %312 = vector.broadcast %311 : vector<8x1xi1> to vector<8x32xi1>
    %313 = arith.select %312, %310, %226 : vector<8x32xi1>, vector<8x32xf32>
    %314 = vector.shape_cast %283 : vector<8x1xi1> to vector<8x1xi1>
    %315 = vector.broadcast %314 : vector<8x1xi1> to vector<8x32xi1>
    %316 = arith.select %315, %308, %229 : vector<8x32xi1>, vector<8x32xf32>
    %cst_70 = arith.constant 0.000000e+00 : f32
    %317 = vector.shape_cast %283 : vector<8x1xi1> to vector<8x1xi1>
    %318 = vector.broadcast %317 : vector<8x1xi1> to vector<8x32xi1>
    %319 = vector.broadcast %cst_70 : f32 to vector<8x32xf32>
    %320 = arith.select %318, %310, %319 : vector<8x32xi1>, vector<8x32xf32>
    %321 = arith.maximumf %234, %320 : vector<8x32xf32>
    %c7_i32_71 = arith.constant 7 : i32
    %322 = arith.subi %c7_i32_71, %c3_i32 : i32
    %323 = arith.index_cast %322 : i32 to index
    %c0_72 = arith.constant 0 : index
    %c0_73 = arith.constant 0 : index
    %324 = vector.load %arg9[%323, %c0_72, %c0_73] : memref<8x8x128xf32, #tpu.memory_space<vmem>>, vector<1x8x128xf32>
    %325 = vector.shape_cast %324 : vector<1x8x128xf32> to vector<8x128xf32>
    %326 = vector.broadcast %322 : i32 to vector<8x1xi32>
    %327 = arith.cmpi slt, %326, %15 : vector<8x1xi32>
    %cst_74 = arith.constant dense<0.000000e+00> : vector<8x128xf32>
    %328 = tpu.matmul %270, %14, %cst_74 {dimension_numbers = #tpu.dot_dimension_numbers<[1], [0], [0], [1], [0, 0, 1, 1], [], []>} : vector<8x32xf32>, vector<32x128xf32>, vector<8x128xf32> -> vector<8x128xf32>
    %329 = arith.addf %325, %328 : vector<8x128xf32>
    %330 = vector.extract_strided_slice %329 {offsets = [0, 0], sizes = [8, 32], strides = [1, 1]} : vector<8x128xf32> to vector<8x32xf32>
    %331 = arith.negf %330 : vector<8x32xf32>
    %332 = math.exp %331 : vector<8x32xf32>
    %cst_75 = arith.constant 1.000000e+00 : f32
    %333 = vector.broadcast %cst_75 : f32 to vector<8x32xf32>
    %334 = arith.addf %333, %332 : vector<8x32xf32>
    %335 = arith.divf %333, %334 : vector<8x32xf32>
    %336 = vector.extract_strided_slice %329 {offsets = [0, 32], sizes = [8, 32], strides = [1, 1]} : vector<8x128xf32> to vector<8x32xf32>
    %337 = arith.negf %336 : vector<8x32xf32>
    %338 = math.exp %337 : vector<8x32xf32>
    %cst_76 = arith.constant 1.000000e+00 : f32
    %339 = vector.broadcast %cst_76 : f32 to vector<8x32xf32>
    %340 = arith.addf %339, %338 : vector<8x32xf32>
    %341 = arith.divf %339, %340 : vector<8x32xf32>
    %342 = vector.extract_strided_slice %329 {offsets = [0, 64], sizes = [8, 32], strides = [1, 1]} : vector<8x128xf32> to vector<8x32xf32>
    %343 = math.tanh %342 : vector<8x32xf32>
    %344 = vector.extract_strided_slice %329 {offsets = [0, 96], sizes = [8, 32], strides = [1, 1]} : vector<8x128xf32> to vector<8x32xf32>
    %345 = arith.negf %344 : vector<8x32xf32>
    %346 = math.exp %345 : vector<8x32xf32>
    %cst_77 = arith.constant 1.000000e+00 : f32
    %347 = vector.broadcast %cst_77 : f32 to vector<8x32xf32>
    %348 = arith.addf %347, %346 : vector<8x32xf32>
    %349 = arith.divf %347, %348 : vector<8x32xf32>
    %350 = arith.mulf %341, %273 : vector<8x32xf32>
    %351 = arith.mulf %335, %343 : vector<8x32xf32>
    %352 = arith.addf %350, %351 : vector<8x32xf32>
    %353 = math.tanh %352 : vector<8x32xf32>
    %354 = arith.mulf %349, %353 : vector<8x32xf32>
    %355 = vector.shape_cast %327 : vector<8x1xi1> to vector<8x1xi1>
    %356 = vector.broadcast %355 : vector<8x1xi1> to vector<8x32xi1>
    %357 = arith.select %356, %354, %270 : vector<8x32xi1>, vector<8x32xf32>
    %358 = vector.shape_cast %327 : vector<8x1xi1> to vector<8x1xi1>
    %359 = vector.broadcast %358 : vector<8x1xi1> to vector<8x32xi1>
    %360 = arith.select %359, %352, %273 : vector<8x32xi1>, vector<8x32xf32>
    %cst_78 = arith.constant 0.000000e+00 : f32
    %361 = vector.shape_cast %327 : vector<8x1xi1> to vector<8x1xi1>
    %362 = vector.broadcast %361 : vector<8x1xi1> to vector<8x32xi1>
    %363 = vector.broadcast %cst_78 : f32 to vector<8x32xf32>
    %364 = arith.select %362, %354, %363 : vector<8x32xi1>, vector<8x32xf32>
    %365 = arith.maximumf %278, %364 : vector<8x32xf32>
    %c4_i32 = arith.constant 4 : i32
    %366 = arith.index_cast %c4_i32 : i32 to index
    %c0_79 = arith.constant 0 : index
    %c0_80 = arith.constant 0 : index
    %367 = vector.load %arg8[%366, %c0_79, %c0_80] : memref<8x8x128xf32, #tpu.memory_space<vmem>>, vector<1x8x128xf32>
    %368 = vector.shape_cast %367 : vector<1x8x128xf32> to vector<8x128xf32>
    %369 = vector.broadcast %c4_i32 : i32 to vector<8x1xi32>
    %370 = arith.cmpi slt, %369, %15 : vector<8x1xi32>
    %cst_81 = arith.constant dense<0.000000e+00> : vector<8x128xf32>
    %371 = tpu.matmul %313, %13, %cst_81 {dimension_numbers = #tpu.dot_dimension_numbers<[1], [0], [0], [1], [0, 0, 1, 1], [], []>} : vector<8x32xf32>, vector<32x128xf32>, vector<8x128xf32> -> vector<8x128xf32>
    %372 = arith.addf %368, %371 : vector<8x128xf32>
    %373 = vector.extract_strided_slice %372 {offsets = [0, 0], sizes = [8, 32], strides = [1, 1]} : vector<8x128xf32> to vector<8x32xf32>
    %374 = arith.negf %373 : vector<8x32xf32>
    %375 = math.exp %374 : vector<8x32xf32>
    %cst_82 = arith.constant 1.000000e+00 : f32
    %376 = vector.broadcast %cst_82 : f32 to vector<8x32xf32>
    %377 = arith.addf %376, %375 : vector<8x32xf32>
    %378 = arith.divf %376, %377 : vector<8x32xf32>
    %379 = vector.extract_strided_slice %372 {offsets = [0, 32], sizes = [8, 32], strides = [1, 1]} : vector<8x128xf32> to vector<8x32xf32>
    %380 = arith.negf %379 : vector<8x32xf32>
    %381 = math.exp %380 : vector<8x32xf32>
    %cst_83 = arith.constant 1.000000e+00 : f32
    %382 = vector.broadcast %cst_83 : f32 to vector<8x32xf32>
    %383 = arith.addf %382, %381 : vector<8x32xf32>
    %384 = arith.divf %382, %383 : vector<8x32xf32>
    %385 = vector.extract_strided_slice %372 {offsets = [0, 64], sizes = [8, 32], strides = [1, 1]} : vector<8x128xf32> to vector<8x32xf32>
    %386 = math.tanh %385 : vector<8x32xf32>
    %387 = vector.extract_strided_slice %372 {offsets = [0, 96], sizes = [8, 32], strides = [1, 1]} : vector<8x128xf32> to vector<8x32xf32>
    %388 = arith.negf %387 : vector<8x32xf32>
    %389 = math.exp %388 : vector<8x32xf32>
    %cst_84 = arith.constant 1.000000e+00 : f32
    %390 = vector.broadcast %cst_84 : f32 to vector<8x32xf32>
    %391 = arith.addf %390, %389 : vector<8x32xf32>
    %392 = arith.divf %390, %391 : vector<8x32xf32>
    %393 = arith.mulf %384, %316 : vector<8x32xf32>
    %394 = arith.mulf %378, %386 : vector<8x32xf32>
    %395 = arith.addf %393, %394 : vector<8x32xf32>
    %396 = math.tanh %395 : vector<8x32xf32>
    %397 = arith.mulf %392, %396 : vector<8x32xf32>
    %398 = vector.shape_cast %370 : vector<8x1xi1> to vector<8x1xi1>
    %399 = vector.broadcast %398 : vector<8x1xi1> to vector<8x32xi1>
    %400 = arith.select %399, %397, %313 : vector<8x32xi1>, vector<8x32xf32>
    %401 = vector.shape_cast %370 : vector<8x1xi1> to vector<8x1xi1>
    %402 = vector.broadcast %401 : vector<8x1xi1> to vector<8x32xi1>
    %403 = arith.select %402, %395, %316 : vector<8x32xi1>, vector<8x32xf32>
    %cst_85 = arith.constant 0.000000e+00 : f32
    %404 = vector.shape_cast %370 : vector<8x1xi1> to vector<8x1xi1>
    %405 = vector.broadcast %404 : vector<8x1xi1> to vector<8x32xi1>
    %406 = vector.broadcast %cst_85 : f32 to vector<8x32xf32>
    %407 = arith.select %405, %397, %406 : vector<8x32xi1>, vector<8x32xf32>
    %408 = arith.maximumf %321, %407 : vector<8x32xf32>
    %c7_i32_86 = arith.constant 7 : i32
    %409 = arith.subi %c7_i32_86, %c4_i32 : i32
    %410 = arith.index_cast %409 : i32 to index
    %c0_87 = arith.constant 0 : index
    %c0_88 = arith.constant 0 : index
    %411 = vector.load %arg9[%410, %c0_87, %c0_88] : memref<8x8x128xf32, #tpu.memory_space<vmem>>, vector<1x8x128xf32>
    %412 = vector.shape_cast %411 : vector<1x8x128xf32> to vector<8x128xf32>
    %413 = vector.broadcast %409 : i32 to vector<8x1xi32>
    %414 = arith.cmpi slt, %413, %15 : vector<8x1xi32>
    %cst_89 = arith.constant dense<0.000000e+00> : vector<8x128xf32>
    %415 = tpu.matmul %357, %14, %cst_89 {dimension_numbers = #tpu.dot_dimension_numbers<[1], [0], [0], [1], [0, 0, 1, 1], [], []>} : vector<8x32xf32>, vector<32x128xf32>, vector<8x128xf32> -> vector<8x128xf32>
    %416 = arith.addf %412, %415 : vector<8x128xf32>
    %417 = vector.extract_strided_slice %416 {offsets = [0, 0], sizes = [8, 32], strides = [1, 1]} : vector<8x128xf32> to vector<8x32xf32>
    %418 = arith.negf %417 : vector<8x32xf32>
    %419 = math.exp %418 : vector<8x32xf32>
    %cst_90 = arith.constant 1.000000e+00 : f32
    %420 = vector.broadcast %cst_90 : f32 to vector<8x32xf32>
    %421 = arith.addf %420, %419 : vector<8x32xf32>
    %422 = arith.divf %420, %421 : vector<8x32xf32>
    %423 = vector.extract_strided_slice %416 {offsets = [0, 32], sizes = [8, 32], strides = [1, 1]} : vector<8x128xf32> to vector<8x32xf32>
    %424 = arith.negf %423 : vector<8x32xf32>
    %425 = math.exp %424 : vector<8x32xf32>
    %cst_91 = arith.constant 1.000000e+00 : f32
    %426 = vector.broadcast %cst_91 : f32 to vector<8x32xf32>
    %427 = arith.addf %426, %425 : vector<8x32xf32>
    %428 = arith.divf %426, %427 : vector<8x32xf32>
    %429 = vector.extract_strided_slice %416 {offsets = [0, 64], sizes = [8, 32], strides = [1, 1]} : vector<8x128xf32> to vector<8x32xf32>
    %430 = math.tanh %429 : vector<8x32xf32>
    %431 = vector.extract_strided_slice %416 {offsets = [0, 96], sizes = [8, 32], strides = [1, 1]} : vector<8x128xf32> to vector<8x32xf32>
    %432 = arith.negf %431 : vector<8x32xf32>
    %433 = math.exp %432 : vector<8x32xf32>
    %cst_92 = arith.constant 1.000000e+00 : f32
    %434 = vector.broadcast %cst_92 : f32 to vector<8x32xf32>
    %435 = arith.addf %434, %433 : vector<8x32xf32>
    %436 = arith.divf %434, %435 : vector<8x32xf32>
    %437 = arith.mulf %428, %360 : vector<8x32xf32>
    %438 = arith.mulf %422, %430 : vector<8x32xf32>
    %439 = arith.addf %437, %438 : vector<8x32xf32>
    %440 = math.tanh %439 : vector<8x32xf32>
    %441 = arith.mulf %436, %440 : vector<8x32xf32>
    %442 = vector.shape_cast %414 : vector<8x1xi1> to vector<8x1xi1>
    %443 = vector.broadcast %442 : vector<8x1xi1> to vector<8x32xi1>
    %444 = arith.select %443, %441, %357 : vector<8x32xi1>, vector<8x32xf32>
    %445 = vector.shape_cast %414 : vector<8x1xi1> to vector<8x1xi1>
    %446 = vector.broadcast %445 : vector<8x1xi1> to vector<8x32xi1>
    %447 = arith.select %446, %439, %360 : vector<8x32xi1>, vector<8x32xf32>
    %cst_93 = arith.constant 0.000000e+00 : f32
    %448 = vector.shape_cast %414 : vector<8x1xi1> to vector<8x1xi1>
    %449 = vector.broadcast %448 : vector<8x1xi1> to vector<8x32xi1>
    %450 = vector.broadcast %cst_93 : f32 to vector<8x32xf32>
    %451 = arith.select %449, %441, %450 : vector<8x32xi1>, vector<8x32xf32>
    %452 = arith.maximumf %365, %451 : vector<8x32xf32>
    %c5_i32 = arith.constant 5 : i32
    %453 = arith.index_cast %c5_i32 : i32 to index
    %c0_94 = arith.constant 0 : index
    %c0_95 = arith.constant 0 : index
    %454 = vector.load %arg8[%453, %c0_94, %c0_95] : memref<8x8x128xf32, #tpu.memory_space<vmem>>, vector<1x8x128xf32>
    %455 = vector.shape_cast %454 : vector<1x8x128xf32> to vector<8x128xf32>
    %456 = vector.broadcast %c5_i32 : i32 to vector<8x1xi32>
    %457 = arith.cmpi slt, %456, %15 : vector<8x1xi32>
    %cst_96 = arith.constant dense<0.000000e+00> : vector<8x128xf32>
    %458 = tpu.matmul %400, %13, %cst_96 {dimension_numbers = #tpu.dot_dimension_numbers<[1], [0], [0], [1], [0, 0, 1, 1], [], []>} : vector<8x32xf32>, vector<32x128xf32>, vector<8x128xf32> -> vector<8x128xf32>
    %459 = arith.addf %455, %458 : vector<8x128xf32>
    %460 = vector.extract_strided_slice %459 {offsets = [0, 0], sizes = [8, 32], strides = [1, 1]} : vector<8x128xf32> to vector<8x32xf32>
    %461 = arith.negf %460 : vector<8x32xf32>
    %462 = math.exp %461 : vector<8x32xf32>
    %cst_97 = arith.constant 1.000000e+00 : f32
    %463 = vector.broadcast %cst_97 : f32 to vector<8x32xf32>
    %464 = arith.addf %463, %462 : vector<8x32xf32>
    %465 = arith.divf %463, %464 : vector<8x32xf32>
    %466 = vector.extract_strided_slice %459 {offsets = [0, 32], sizes = [8, 32], strides = [1, 1]} : vector<8x128xf32> to vector<8x32xf32>
    %467 = arith.negf %466 : vector<8x32xf32>
    %468 = math.exp %467 : vector<8x32xf32>
    %cst_98 = arith.constant 1.000000e+00 : f32
    %469 = vector.broadcast %cst_98 : f32 to vector<8x32xf32>
    %470 = arith.addf %469, %468 : vector<8x32xf32>
    %471 = arith.divf %469, %470 : vector<8x32xf32>
    %472 = vector.extract_strided_slice %459 {offsets = [0, 64], sizes = [8, 32], strides = [1, 1]} : vector<8x128xf32> to vector<8x32xf32>
    %473 = math.tanh %472 : vector<8x32xf32>
    %474 = vector.extract_strided_slice %459 {offsets = [0, 96], sizes = [8, 32], strides = [1, 1]} : vector<8x128xf32> to vector<8x32xf32>
    %475 = arith.negf %474 : vector<8x32xf32>
    %476 = math.exp %475 : vector<8x32xf32>
    %cst_99 = arith.constant 1.000000e+00 : f32
    %477 = vector.broadcast %cst_99 : f32 to vector<8x32xf32>
    %478 = arith.addf %477, %476 : vector<8x32xf32>
    %479 = arith.divf %477, %478 : vector<8x32xf32>
    %480 = arith.mulf %471, %403 : vector<8x32xf32>
    %481 = arith.mulf %465, %473 : vector<8x32xf32>
    %482 = arith.addf %480, %481 : vector<8x32xf32>
    %483 = math.tanh %482 : vector<8x32xf32>
    %484 = arith.mulf %479, %483 : vector<8x32xf32>
    %485 = vector.shape_cast %457 : vector<8x1xi1> to vector<8x1xi1>
    %486 = vector.broadcast %485 : vector<8x1xi1> to vector<8x32xi1>
    %487 = arith.select %486, %484, %400 : vector<8x32xi1>, vector<8x32xf32>
    %488 = vector.shape_cast %457 : vector<8x1xi1> to vector<8x1xi1>
    %489 = vector.broadcast %488 : vector<8x1xi1> to vector<8x32xi1>
    %490 = arith.select %489, %482, %403 : vector<8x32xi1>, vector<8x32xf32>
    %cst_100 = arith.constant 0.000000e+00 : f32
    %491 = vector.shape_cast %457 : vector<8x1xi1> to vector<8x1xi1>
    %492 = vector.broadcast %491 : vector<8x1xi1> to vector<8x32xi1>
    %493 = vector.broadcast %cst_100 : f32 to vector<8x32xf32>
    %494 = arith.select %492, %484, %493 : vector<8x32xi1>, vector<8x32xf32>
    %495 = arith.maximumf %408, %494 : vector<8x32xf32>
    %c7_i32_101 = arith.constant 7 : i32
    %496 = arith.subi %c7_i32_101, %c5_i32 : i32
    %497 = arith.index_cast %496 : i32 to index
    %c0_102 = arith.constant 0 : index
    %c0_103 = arith.constant 0 : index
    %498 = vector.load %arg9[%497, %c0_102, %c0_103] : memref<8x8x128xf32, #tpu.memory_space<vmem>>, vector<1x8x128xf32>
    %499 = vector.shape_cast %498 : vector<1x8x128xf32> to vector<8x128xf32>
    %500 = vector.broadcast %496 : i32 to vector<8x1xi32>
    %501 = arith.cmpi slt, %500, %15 : vector<8x1xi32>
    %cst_104 = arith.constant dense<0.000000e+00> : vector<8x128xf32>
    %502 = tpu.matmul %444, %14, %cst_104 {dimension_numbers = #tpu.dot_dimension_numbers<[1], [0], [0], [1], [0, 0, 1, 1], [], []>} : vector<8x32xf32>, vector<32x128xf32>, vector<8x128xf32> -> vector<8x128xf32>
    %503 = arith.addf %499, %502 : vector<8x128xf32>
    %504 = vector.extract_strided_slice %503 {offsets = [0, 0], sizes = [8, 32], strides = [1, 1]} : vector<8x128xf32> to vector<8x32xf32>
    %505 = arith.negf %504 : vector<8x32xf32>
    %506 = math.exp %505 : vector<8x32xf32>
    %cst_105 = arith.constant 1.000000e+00 : f32
    %507 = vector.broadcast %cst_105 : f32 to vector<8x32xf32>
    %508 = arith.addf %507, %506 : vector<8x32xf32>
    %509 = arith.divf %507, %508 : vector<8x32xf32>
    %510 = vector.extract_strided_slice %503 {offsets = [0, 32], sizes = [8, 32], strides = [1, 1]} : vector<8x128xf32> to vector<8x32xf32>
    %511 = arith.negf %510 : vector<8x32xf32>
    %512 = math.exp %511 : vector<8x32xf32>
    %cst_106 = arith.constant 1.000000e+00 : f32
    %513 = vector.broadcast %cst_106 : f32 to vector<8x32xf32>
    %514 = arith.addf %513, %512 : vector<8x32xf32>
    %515 = arith.divf %513, %514 : vector<8x32xf32>
    %516 = vector.extract_strided_slice %503 {offsets = [0, 64], sizes = [8, 32], strides = [1, 1]} : vector<8x128xf32> to vector<8x32xf32>
    %517 = math.tanh %516 : vector<8x32xf32>
    %518 = vector.extract_strided_slice %503 {offsets = [0, 96], sizes = [8, 32], strides = [1, 1]} : vector<8x128xf32> to vector<8x32xf32>
    %519 = arith.negf %518 : vector<8x32xf32>
    %520 = math.exp %519 : vector<8x32xf32>
    %cst_107 = arith.constant 1.000000e+00 : f32
    %521 = vector.broadcast %cst_107 : f32 to vector<8x32xf32>
    %522 = arith.addf %521, %520 : vector<8x32xf32>
    %523 = arith.divf %521, %522 : vector<8x32xf32>
    %524 = arith.mulf %515, %447 : vector<8x32xf32>
    %525 = arith.mulf %509, %517 : vector<8x32xf32>
    %526 = arith.addf %524, %525 : vector<8x32xf32>
    %527 = math.tanh %526 : vector<8x32xf32>
    %528 = arith.mulf %523, %527 : vector<8x32xf32>
    %529 = vector.shape_cast %501 : vector<8x1xi1> to vector<8x1xi1>
    %530 = vector.broadcast %529 : vector<8x1xi1> to vector<8x32xi1>
    %531 = arith.select %530, %528, %444 : vector<8x32xi1>, vector<8x32xf32>
    %532 = vector.shape_cast %501 : vector<8x1xi1> to vector<8x1xi1>
    %533 = vector.broadcast %532 : vector<8x1xi1> to vector<8x32xi1>
    %534 = arith.select %533, %526, %447 : vector<8x32xi1>, vector<8x32xf32>
    %cst_108 = arith.constant 0.000000e+00 : f32
    %535 = vector.shape_cast %501 : vector<8x1xi1> to vector<8x1xi1>
    %536 = vector.broadcast %535 : vector<8x1xi1> to vector<8x32xi1>
    %537 = vector.broadcast %cst_108 : f32 to vector<8x32xf32>
    %538 = arith.select %536, %528, %537 : vector<8x32xi1>, vector<8x32xf32>
    %539 = arith.maximumf %452, %538 : vector<8x32xf32>
    %c6_i32 = arith.constant 6 : i32
    %540 = arith.index_cast %c6_i32 : i32 to index
    %c0_109 = arith.constant 0 : index
    %c0_110 = arith.constant 0 : index
    %541 = vector.load %arg8[%540, %c0_109, %c0_110] : memref<8x8x128xf32, #tpu.memory_space<vmem>>, vector<1x8x128xf32>
    %542 = vector.shape_cast %541 : vector<1x8x128xf32> to vector<8x128xf32>
    %543 = vector.broadcast %c6_i32 : i32 to vector<8x1xi32>
    %544 = arith.cmpi slt, %543, %15 : vector<8x1xi32>
    %cst_111 = arith.constant dense<0.000000e+00> : vector<8x128xf32>
    %545 = tpu.matmul %487, %13, %cst_111 {dimension_numbers = #tpu.dot_dimension_numbers<[1], [0], [0], [1], [0, 0, 1, 1], [], []>} : vector<8x32xf32>, vector<32x128xf32>, vector<8x128xf32> -> vector<8x128xf32>
    %546 = arith.addf %542, %545 : vector<8x128xf32>
    %547 = vector.extract_strided_slice %546 {offsets = [0, 0], sizes = [8, 32], strides = [1, 1]} : vector<8x128xf32> to vector<8x32xf32>
    %548 = arith.negf %547 : vector<8x32xf32>
    %549 = math.exp %548 : vector<8x32xf32>
    %cst_112 = arith.constant 1.000000e+00 : f32
    %550 = vector.broadcast %cst_112 : f32 to vector<8x32xf32>
    %551 = arith.addf %550, %549 : vector<8x32xf32>
    %552 = arith.divf %550, %551 : vector<8x32xf32>
    %553 = vector.extract_strided_slice %546 {offsets = [0, 32], sizes = [8, 32], strides = [1, 1]} : vector<8x128xf32> to vector<8x32xf32>
    %554 = arith.negf %553 : vector<8x32xf32>
    %555 = math.exp %554 : vector<8x32xf32>
    %cst_113 = arith.constant 1.000000e+00 : f32
    %556 = vector.broadcast %cst_113 : f32 to vector<8x32xf32>
    %557 = arith.addf %556, %555 : vector<8x32xf32>
    %558 = arith.divf %556, %557 : vector<8x32xf32>
    %559 = vector.extract_strided_slice %546 {offsets = [0, 64], sizes = [8, 32], strides = [1, 1]} : vector<8x128xf32> to vector<8x32xf32>
    %560 = math.tanh %559 : vector<8x32xf32>
    %561 = vector.extract_strided_slice %546 {offsets = [0, 96], sizes = [8, 32], strides = [1, 1]} : vector<8x128xf32> to vector<8x32xf32>
    %562 = arith.negf %561 : vector<8x32xf32>
    %563 = math.exp %562 : vector<8x32xf32>
    %cst_114 = arith.constant 1.000000e+00 : f32
    %564 = vector.broadcast %cst_114 : f32 to vector<8x32xf32>
    %565 = arith.addf %564, %563 : vector<8x32xf32>
    %566 = arith.divf %564, %565 : vector<8x32xf32>
    %567 = arith.mulf %558, %490 : vector<8x32xf32>
    %568 = arith.mulf %552, %560 : vector<8x32xf32>
    %569 = arith.addf %567, %568 : vector<8x32xf32>
    %570 = math.tanh %569 : vector<8x32xf32>
    %571 = arith.mulf %566, %570 : vector<8x32xf32>
    %572 = vector.shape_cast %544 : vector<8x1xi1> to vector<8x1xi1>
    %573 = vector.broadcast %572 : vector<8x1xi1> to vector<8x32xi1>
    %574 = arith.select %573, %571, %487 : vector<8x32xi1>, vector<8x32xf32>
    %575 = vector.shape_cast %544 : vector<8x1xi1> to vector<8x1xi1>
    %576 = vector.broadcast %575 : vector<8x1xi1> to vector<8x32xi1>
    %577 = arith.select %576, %569, %490 : vector<8x32xi1>, vector<8x32xf32>
    %cst_115 = arith.constant 0.000000e+00 : f32
    %578 = vector.shape_cast %544 : vector<8x1xi1> to vector<8x1xi1>
    %579 = vector.broadcast %578 : vector<8x1xi1> to vector<8x32xi1>
    %580 = vector.broadcast %cst_115 : f32 to vector<8x32xf32>
    %581 = arith.select %579, %571, %580 : vector<8x32xi1>, vector<8x32xf32>
    %582 = arith.maximumf %495, %581 : vector<8x32xf32>
    %c7_i32_116 = arith.constant 7 : i32
    %583 = arith.subi %c7_i32_116, %c6_i32 : i32
    %584 = arith.index_cast %583 : i32 to index
    %c0_117 = arith.constant 0 : index
    %c0_118 = arith.constant 0 : index
    %585 = vector.load %arg9[%584, %c0_117, %c0_118] : memref<8x8x128xf32, #tpu.memory_space<vmem>>, vector<1x8x128xf32>
    %586 = vector.shape_cast %585 : vector<1x8x128xf32> to vector<8x128xf32>
    %587 = vector.broadcast %583 : i32 to vector<8x1xi32>
    %588 = arith.cmpi slt, %587, %15 : vector<8x1xi32>
    %cst_119 = arith.constant dense<0.000000e+00> : vector<8x128xf32>
    %589 = tpu.matmul %531, %14, %cst_119 {dimension_numbers = #tpu.dot_dimension_numbers<[1], [0], [0], [1], [0, 0, 1, 1], [], []>} : vector<8x32xf32>, vector<32x128xf32>, vector<8x128xf32> -> vector<8x128xf32>
    %590 = arith.addf %586, %589 : vector<8x128xf32>
    %591 = vector.extract_strided_slice %590 {offsets = [0, 0], sizes = [8, 32], strides = [1, 1]} : vector<8x128xf32> to vector<8x32xf32>
    %592 = arith.negf %591 : vector<8x32xf32>
    %593 = math.exp %592 : vector<8x32xf32>
    %cst_120 = arith.constant 1.000000e+00 : f32
    %594 = vector.broadcast %cst_120 : f32 to vector<8x32xf32>
    %595 = arith.addf %594, %593 : vector<8x32xf32>
    %596 = arith.divf %594, %595 : vector<8x32xf32>
    %597 = vector.extract_strided_slice %590 {offsets = [0, 32], sizes = [8, 32], strides = [1, 1]} : vector<8x128xf32> to vector<8x32xf32>
    %598 = arith.negf %597 : vector<8x32xf32>
    %599 = math.exp %598 : vector<8x32xf32>
    %cst_121 = arith.constant 1.000000e+00 : f32
    %600 = vector.broadcast %cst_121 : f32 to vector<8x32xf32>
    %601 = arith.addf %600, %599 : vector<8x32xf32>
    %602 = arith.divf %600, %601 : vector<8x32xf32>
    %603 = vector.extract_strided_slice %590 {offsets = [0, 64], sizes = [8, 32], strides = [1, 1]} : vector<8x128xf32> to vector<8x32xf32>
    %604 = math.tanh %603 : vector<8x32xf32>
    %605 = vector.extract_strided_slice %590 {offsets = [0, 96], sizes = [8, 32], strides = [1, 1]} : vector<8x128xf32> to vector<8x32xf32>
    %606 = arith.negf %605 : vector<8x32xf32>
    %607 = math.exp %606 : vector<8x32xf32>
    %cst_122 = arith.constant 1.000000e+00 : f32
    %608 = vector.broadcast %cst_122 : f32 to vector<8x32xf32>
    %609 = arith.addf %608, %607 : vector<8x32xf32>
    %610 = arith.divf %608, %609 : vector<8x32xf32>
    %611 = arith.mulf %602, %534 : vector<8x32xf32>
    %612 = arith.mulf %596, %604 : vector<8x32xf32>
    %613 = arith.addf %611, %612 : vector<8x32xf32>
    %614 = math.tanh %613 : vector<8x32xf32>
    %615 = arith.mulf %610, %614 : vector<8x32xf32>
    %616 = vector.shape_cast %588 : vector<8x1xi1> to vector<8x1xi1>
    %617 = vector.broadcast %616 : vector<8x1xi1> to vector<8x32xi1>
    %618 = arith.select %617, %615, %531 : vector<8x32xi1>, vector<8x32xf32>
    %619 = vector.shape_cast %588 : vector<8x1xi1> to vector<8x1xi1>
    %620 = vector.broadcast %619 : vector<8x1xi1> to vector<8x32xi1>
    %621 = arith.select %620, %613, %534 : vector<8x32xi1>, vector<8x32xf32>
    %cst_123 = arith.constant 0.000000e+00 : f32
    %622 = vector.shape_cast %588 : vector<8x1xi1> to vector<8x1xi1>
    %623 = vector.broadcast %622 : vector<8x1xi1> to vector<8x32xi1>
    %624 = vector.broadcast %cst_123 : f32 to vector<8x32xf32>
    %625 = arith.select %623, %615, %624 : vector<8x32xi1>, vector<8x32xf32>
    %626 = arith.maximumf %539, %625 : vector<8x32xf32>
    %c7_i32_124 = arith.constant 7 : i32
    %627 = arith.index_cast %c7_i32_124 : i32 to index
    %c0_125 = arith.constant 0 : index
    %c0_126 = arith.constant 0 : index
    %628 = vector.load %arg8[%627, %c0_125, %c0_126] : memref<8x8x128xf32, #tpu.memory_space<vmem>>, vector<1x8x128xf32>
    %629 = vector.shape_cast %628 : vector<1x8x128xf32> to vector<8x128xf32>
    %630 = vector.broadcast %c7_i32_124 : i32 to vector<8x1xi32>
    %631 = arith.cmpi slt, %630, %15 : vector<8x1xi32>
    %cst_127 = arith.constant dense<0.000000e+00> : vector<8x128xf32>
    %632 = tpu.matmul %574, %13, %cst_127 {dimension_numbers = #tpu.dot_dimension_numbers<[1], [0], [0], [1], [0, 0, 1, 1], [], []>} : vector<8x32xf32>, vector<32x128xf32>, vector<8x128xf32> -> vector<8x128xf32>
    %633 = arith.addf %629, %632 : vector<8x128xf32>
    %634 = vector.extract_strided_slice %633 {offsets = [0, 0], sizes = [8, 32], strides = [1, 1]} : vector<8x128xf32> to vector<8x32xf32>
    %635 = arith.negf %634 : vector<8x32xf32>
    %636 = math.exp %635 : vector<8x32xf32>
    %cst_128 = arith.constant 1.000000e+00 : f32
    %637 = vector.broadcast %cst_128 : f32 to vector<8x32xf32>
    %638 = arith.addf %637, %636 : vector<8x32xf32>
    %639 = arith.divf %637, %638 : vector<8x32xf32>
    %640 = vector.extract_strided_slice %633 {offsets = [0, 32], sizes = [8, 32], strides = [1, 1]} : vector<8x128xf32> to vector<8x32xf32>
    %641 = arith.negf %640 : vector<8x32xf32>
    %642 = math.exp %641 : vector<8x32xf32>
    %cst_129 = arith.constant 1.000000e+00 : f32
    %643 = vector.broadcast %cst_129 : f32 to vector<8x32xf32>
    %644 = arith.addf %643, %642 : vector<8x32xf32>
    %645 = arith.divf %643, %644 : vector<8x32xf32>
    %646 = vector.extract_strided_slice %633 {offsets = [0, 64], sizes = [8, 32], strides = [1, 1]} : vector<8x128xf32> to vector<8x32xf32>
    %647 = math.tanh %646 : vector<8x32xf32>
    %648 = vector.extract_strided_slice %633 {offsets = [0, 96], sizes = [8, 32], strides = [1, 1]} : vector<8x128xf32> to vector<8x32xf32>
    %649 = arith.negf %648 : vector<8x32xf32>
    %650 = math.exp %649 : vector<8x32xf32>
    %cst_130 = arith.constant 1.000000e+00 : f32
    %651 = vector.broadcast %cst_130 : f32 to vector<8x32xf32>
    %652 = arith.addf %651, %650 : vector<8x32xf32>
    %653 = arith.divf %651, %652 : vector<8x32xf32>
    %654 = arith.mulf %645, %577 : vector<8x32xf32>
    %655 = arith.mulf %639, %647 : vector<8x32xf32>
    %656 = arith.addf %654, %655 : vector<8x32xf32>
    %657 = math.tanh %656 : vector<8x32xf32>
    %658 = arith.mulf %653, %657 : vector<8x32xf32>
    %659 = vector.shape_cast %631 : vector<8x1xi1> to vector<8x1xi1>
    %660 = vector.broadcast %659 : vector<8x1xi1> to vector<8x32xi1>
    %661 = arith.select %660, %658, %574 : vector<8x32xi1>, vector<8x32xf32>
    %662 = vector.shape_cast %631 : vector<8x1xi1> to vector<8x1xi1>
    %663 = vector.broadcast %662 : vector<8x1xi1> to vector<8x32xi1>
    %664 = arith.select %663, %656, %577 : vector<8x32xi1>, vector<8x32xf32>
    %cst_131 = arith.constant 0.000000e+00 : f32
    %665 = vector.shape_cast %631 : vector<8x1xi1> to vector<8x1xi1>
    %666 = vector.broadcast %665 : vector<8x1xi1> to vector<8x32xi1>
    %667 = vector.broadcast %cst_131 : f32 to vector<8x32xf32>
    %668 = arith.select %666, %658, %667 : vector<8x32xi1>, vector<8x32xf32>
    %669 = arith.maximumf %582, %668 : vector<8x32xf32>
    %c7_i32_132 = arith.constant 7 : i32
    %670 = arith.subi %c7_i32_132, %c7_i32_124 : i32
    %671 = arith.index_cast %670 : i32 to index
    %c0_133 = arith.constant 0 : index
    %c0_134 = arith.constant 0 : index
    %672 = vector.load %arg9[%671, %c0_133, %c0_134] : memref<8x8x128xf32, #tpu.memory_space<vmem>>, vector<1x8x128xf32>
    %673 = vector.shape_cast %672 : vector<1x8x128xf32> to vector<8x128xf32>
    %674 = vector.broadcast %670 : i32 to vector<8x1xi32>
    %675 = arith.cmpi slt, %674, %15 : vector<8x1xi32>
    %cst_135 = arith.constant dense<0.000000e+00> : vector<8x128xf32>
    %676 = tpu.matmul %618, %14, %cst_135 {dimension_numbers = #tpu.dot_dimension_numbers<[1], [0], [0], [1], [0, 0, 1, 1], [], []>} : vector<8x32xf32>, vector<32x128xf32>, vector<8x128xf32> -> vector<8x128xf32>
    %677 = arith.addf %673, %676 : vector<8x128xf32>
    %678 = vector.extract_strided_slice %677 {offsets = [0, 0], sizes = [8, 32], strides = [1, 1]} : vector<8x128xf32> to vector<8x32xf32>
    %679 = arith.negf %678 : vector<8x32xf32>
    %680 = math.exp %679 : vector<8x32xf32>
    %cst_136 = arith.constant 1.000000e+00 : f32
    %681 = vector.broadcast %cst_136 : f32 to vector<8x32xf32>
    %682 = arith.addf %681, %680 : vector<8x32xf32>
    %683 = arith.divf %681, %682 : vector<8x32xf32>
    %684 = vector.extract_strided_slice %677 {offsets = [0, 32], sizes = [8, 32], strides = [1, 1]} : vector<8x128xf32> to vector<8x32xf32>
    %685 = arith.negf %684 : vector<8x32xf32>
    %686 = math.exp %685 : vector<8x32xf32>
    %cst_137 = arith.constant 1.000000e+00 : f32
    %687 = vector.broadcast %cst_137 : f32 to vector<8x32xf32>
    %688 = arith.addf %687, %686 : vector<8x32xf32>
    %689 = arith.divf %687, %688 : vector<8x32xf32>
    %690 = vector.extract_strided_slice %677 {offsets = [0, 64], sizes = [8, 32], strides = [1, 1]} : vector<8x128xf32> to vector<8x32xf32>
    %691 = math.tanh %690 : vector<8x32xf32>
    %692 = vector.extract_strided_slice %677 {offsets = [0, 96], sizes = [8, 32], strides = [1, 1]} : vector<8x128xf32> to vector<8x32xf32>
    %693 = arith.negf %692 : vector<8x32xf32>
    %694 = math.exp %693 : vector<8x32xf32>
    %cst_138 = arith.constant 1.000000e+00 : f32
    %695 = vector.broadcast %cst_138 : f32 to vector<8x32xf32>
    %696 = arith.addf %695, %694 : vector<8x32xf32>
    %697 = arith.divf %695, %696 : vector<8x32xf32>
    %698 = arith.mulf %689, %621 : vector<8x32xf32>
    %699 = arith.mulf %683, %691 : vector<8x32xf32>
    %700 = arith.addf %698, %699 : vector<8x32xf32>
    %701 = math.tanh %700 : vector<8x32xf32>
    %702 = arith.mulf %697, %701 : vector<8x32xf32>
    %703 = vector.shape_cast %675 : vector<8x1xi1> to vector<8x1xi1>
    %704 = vector.broadcast %703 : vector<8x1xi1> to vector<8x32xi1>
    %705 = arith.select %704, %702, %618 : vector<8x32xi1>, vector<8x32xf32>
    %706 = vector.shape_cast %675 : vector<8x1xi1> to vector<8x1xi1>
    %707 = vector.broadcast %706 : vector<8x1xi1> to vector<8x32xi1>
    %708 = arith.select %707, %700, %621 : vector<8x32xi1>, vector<8x32xf32>
    %cst_139 = arith.constant 0.000000e+00 : f32
    %709 = vector.shape_cast %675 : vector<8x1xi1> to vector<8x1xi1>
    %710 = vector.broadcast %709 : vector<8x1xi1> to vector<8x32xi1>
    %711 = vector.broadcast %cst_139 : f32 to vector<8x32xf32>
    %712 = arith.select %710, %702, %711 : vector<8x32xi1>, vector<8x32xf32>
    %713 = arith.maximumf %626, %712 : vector<8x32xf32>
    %c8_i32 = arith.constant 8 : i32
    %c0_140 = arith.constant 0 : index
    %c0_141 = arith.constant 0 : index
    %714 = vector.load %arg7[%c0_140, %c0_141] : memref<8x64xf32, #tpu.memory_space<vmem>>, vector<8x32xf32>
    tpu.vector_store %arg7[%c0_140, %c0_141], %669 {strides = array<i32>} : memref<8x64xf32, #tpu.memory_space<vmem>>, vector<8x32xf32>,
    %c0_142 = arith.constant 0 : index
    %c32 = arith.constant 32 : index
    %715 = vector.load %arg7[%c0_142, %c32] : memref<8x64xf32, #tpu.memory_space<vmem>>, vector<8x32xf32>
    tpu.vector_store %arg7[%c0_142, %c32], %713 {strides = array<i32>} : memref<8x64xf32, #tpu.memory_space<vmem>>, vector<8x32xf32>,
    return
  }
  func.func @transform_0(%arg0: i32) -> (i32, i32, i32) {
    %c0_i32 = arith.constant 0 : i32
    %c0_i32_0 = arith.constant 0 : i32
    %c0_i32_1 = arith.constant 0 : i32
    return %c0_i32, %arg0, %c0_i32_0 : i32, i32, i32
  }
  func.func @transform_1(%arg0: i32) -> (i32, i32) {
    %c0_i32 = arith.constant 0 : i32
    %c0_i32_0 = arith.constant 0 : i32
    return %arg0, %c0_i32 : i32, i32
  }
  func.func @transform_2(%arg0: i32) -> (i32, i32) {
    %c0_i32 = arith.constant 0 : i32
    %c0_i32_0 = arith.constant 0 : i32
    %c0_i32_1 = arith.constant 0 : i32
    return %c0_i32, %c0_i32_0 : i32, i32
  }
  func.func @transform_3(%arg0: i32) -> (i32, i32) {
    %c0_i32 = arith.constant 0 : i32
    %c0_i32_0 = arith.constant 0 : i32
    %c0_i32_1 = arith.constant 0 : i32
    return %c0_i32, %c0_i32_0 : i32, i32
  }
  func.func @transform_4(%arg0: i32) -> (i32, i32) {
    %c0_i32 = arith.constant 0 : i32
    %c0_i32_0 = arith.constant 0 : i32
    %c0_i32_1 = arith.constant 0 : i32
    return %c0_i32, %c0_i32_0 : i32, i32
  }
  func.func @transform_5(%arg0: i32) -> (i32, i32) {
    %c0_i32 = arith.constant 0 : i32
    %c0_i32_0 = arith.constant 0 : i32
    %c0_i32_1 = arith.constant 0 : i32
    return %c0_i32, %c0_i32_0 : i32, i32
  }
  func.func @transform_6(%arg0: i32) -> (i32, i32) {
    %c0_i32 = arith.constant 0 : i32
    %c0_i32_0 = arith.constant 0 : i32
    return %arg0, %c0_i32 : i32, i32
  }
}

</mosaic_0001>

<llo_original>
// kernel: bilstm_maxpool_nli_forward.3
$region0: #{bilstm_maxpool_nli_forward.3}
  #allocation0 [shape = 'u32[]', space=smem, size = 0x4, offset = 0x4, fixed_abs, tag = 'smem constant byte address 0x4 - core index']
  #allocation1 [shape = 'u32[144,128]{1,0:T(1,128)}', space=vmem, size = 0x12000, scoped, tag = 'internal scratch']
  %s0 = inlined_call_operand.vmem [shape: f32[2,64], index: 0, kind: input, shape index: {}]
  %s1 = inlined_call_operand.vmem [shape: f32[2,64], index: 1, kind: input, shape index: {}]
  %s2 = inlined_call_operand.vmem [shape: f32[64,32], index: 2, kind: input, shape index: {}]
  %s3 = inlined_call_operand.vmem [shape: f32[64,32], index: 3, kind: input, shape index: {}]
  %s4 = inlined_call_operand.vmem [shape: f32[64,32], index: 4, kind: input, shape index: {}]
  %s5 = inlined_call_operand.vmem [shape: f32[64,32], index: 5, kind: input, shape index: {}]
  %s6 = inlined_call_operand.vmem [shape: f32[1,32], index: 6, kind: input, shape index: {}]
  %s7 = inlined_call_operand.vmem [shape: f32[32,32], index: 7, kind: input, shape index: {}]
  %s8 = inlined_call_operand.vmem [shape: f32[1,32], index: 8, kind: input, shape index: {}]
  %s9 = inlined_call_operand.vmem [shape: f32[32,3], index: 9, kind: input, shape index: {}]
  %s10 = inlined_call_operand.vmem [shape: f32[1,3], index: 10, kind: input, shape index: {}]
  %s11 = inlined_call_operand.hbm [shape: f32[2,3], index: 11, kind: output, shape index: {}]
  %s12 = sld [smem:[#allocation0]]
  $region54: #{bilstm_maxpool_nli_forward.3} parent=0
    _
  %s14 = ssub.s32 1, %s12
  %s15 = scalar_select 0, %s14, %s12
  $region1: #{bilstm_maxpool_nli_forward.3} parent=0
    #allocation2 [shape = 'u8[1024]{0}', space=vmem, size = 0x400, scoped, tag = 'output window, operand 0, single buffered']
    #allocation3 [shape = 's32[1]{0}', space=sflag, size = 0x4, scoped, tag = 'scoped memory for bilstm_maxpool_nli_forward.3']
    %16 = vsyncpa [#allocation3], 0
    // Predicated region
    $region2: #{bilstm_maxpool_nli_forward.3} parent=1 // pred_check
      _
    $region3: #{bilstm_maxpool_nli_forward.3} parent=1 // pred_check_branch
      %18 = sbr.rel (0) target = $region5
    $region4: #{bilstm_maxpool_nli_forward.3} parent=1 // pred_region
      _
    $region5: #{bilstm_maxpool_nli_forward.3} parent=1 // pred_fallthru
      _
    // Predicated region
    $region6: #{bilstm_maxpool_nli_forward.3} parent=1 // pred_check
      _
    $region7: #{bilstm_maxpool_nli_forward.3} parent=1 // pred_check_branch
      %20 = sbr.rel (0) target = $region9
    $region8: #{bilstm_maxpool_nli_forward.3} parent=1 // pred_region
      _
    $region9: #{bilstm_maxpool_nli_forward.3} parent=1 // pred_fallthru
      _
    // Predicated region
    $region10: #{bilstm_maxpool_nli_forward.3} parent=1 // pred_check
      _
    $region11: #{bilstm_maxpool_nli_forward.3} parent=1 // pred_check_branch
      %22 = sbr.rel (0) target = $region13
    $region12: #{bilstm_maxpool_nli_forward.3} parent=1 // pred_region
      _
    $region13: #{bilstm_maxpool_nli_forward.3} parent=1 // pred_fallthru
      _
    // Predicated region
    $region14: #{bilstm_maxpool_nli_forward.3} parent=1 // pred_check
      _
    $region15: #{bilstm_maxpool_nli_forward.3} parent=1 // pred_check_branch
      %24 = sbr.rel (0) target = $region17
    $region16: #{bilstm_maxpool_nli_forward.3} parent=1 // pred_region
      _
    $region17: #{bilstm_maxpool_nli_forward.3} parent=1 // pred_fallthru
      _
    // Predicated region
    $region18: #{bilstm_maxpool_nli_forward.3} parent=1 // pred_check
      _
    $region19: #{bilstm_maxpool_nli_forward.3} parent=1 // pred_check_branch
      %26 = sbr.rel (0) target = $region21
    $region20: #{bilstm_maxpool_nli_forward.3} parent=1 // pred_region
      _
    $region21: #{bilstm_maxpool_nli_forward.3} parent=1 // pred_fallthru
      _
    // Predicated region
    $region22: #{bilstm_maxpool_nli_forward.3} parent=1 // pred_check
      _
    $region23: #{bilstm_maxpool_nli_forward.3} parent=1 // pred_check_branch
      %28 = sbr.rel (0) target = $region25
    $region24: #{bilstm_maxpool_nli_forward.3} parent=1 // pred_region
      _
    $region25: #{bilstm_maxpool_nli_forward.3} parent=1 // pred_fallthru
      _
    // Predicated region
    $region26: #{bilstm_maxpool_nli_forward.3} parent=1 // pred_check
      _
    $region27: #{bilstm_maxpool_nli_forward.3} parent=1 // pred_check_branch
      %30 = sbr.rel (0) target = $region29
    $region28: #{bilstm_maxpool_nli_forward.3} parent=1 // pred_region
      _
    $region29: #{bilstm_maxpool_nli_forward.3} parent=1 // pred_fallthru
      _
    // Predicated region
    $region30: #{bilstm_maxpool_nli_forward.3} parent=1 // pred_check
      _
    $region31: #{bilstm_maxpool_nli_forward.3} parent=1 // pred_check_branch
      %32 = sbr.rel (0) target = $region33
    $region32: #{bilstm_maxpool_nli_forward.3} parent=1 // pred_region
      _
    $region33: #{bilstm_maxpool_nli_forward.3} parent=1 // pred_fallthru
      _
    // Predicated region
    $region34: #{bilstm_maxpool_nli_forward.3} parent=1 // pred_check
      _
    $region35: #{bilstm_maxpool_nli_forward.3} parent=1 // pred_check_branch
      %34 = sbr.rel (0) target = $region37
    $region36: #{bilstm_maxpool_nli_forward.3} parent=1 // pred_region
      _
    $region37: #{bilstm_maxpool_nli_forward.3} parent=1 // pred_fallthru
      _
    // Predicated region
    $region38: #{bilstm_maxpool_nli_forward.3} parent=1 // pred_check
      _
    $region39: #{bilstm_maxpool_nli_forward.3} parent=1 // pred_check_branch
      %36 = sbr.rel (0) target = $region41
    $region40: #{bilstm_maxpool_nli_forward.3} parent=1 // pred_region
      _
    $region41: #{bilstm_maxpool_nli_forward.3} parent=1 // pred_fallthru
      _
    // Predicated region
    $region42: #{bilstm_maxpool_nli_forward.3} parent=1 // pred_check
      _
    $region43: #{bilstm_maxpool_nli_forward.3} parent=1 // pred_check_branch
      %38 = sbr.rel (0) target = $region45
    $region44: #{bilstm_maxpool_nli_forward.3} parent=1 // pred_region
      _
    $region45: #{bilstm_maxpool_nli_forward.3} parent=1 // pred_fallthru
      _
    %v39 = vld [vmem:[%s0] sm:$0x3]
    %v40 = vld [vmem:[%s1] sm:$0x3]
    %v41 = vld [vmem:[%s2] sm:$0xff]
    %v42 = vld [vmem:[%s2 + $0x8] sm:$0xff]
    %v43 = vld [vmem:[%s2 + $0x10] sm:$0xff]
    %v44 = vld [vmem:[%s2 + $0x18] sm:$0xff]
    %v45 = vld [vmem:[%s2 + $0x20] sm:$0xff]
    %v46 = vld [vmem:[%s2 + $0x28] sm:$0xff]
    %v47 = vld [vmem:[%s2 + $0x30] sm:$0xff]
    %v48 = vld [vmem:[%s2 + $0x38] sm:$0xff]
    %v49 = vld [vmem:[%s3] sm:$0xff]
    %v50 = vld [vmem:[%s3 + $0x8] sm:$0xff]
    %v51 = vld [vmem:[%s3 + $0x10] sm:$0xff]
    %v52 = vld [vmem:[%s3 + $0x18] sm:$0xff]
    %v53 = vld [vmem:[%s3 + $0x20] sm:$0xff]
    %v54 = vld [vmem:[%s3 + $0x28] sm:$0xff]
    %v55 = vld [vmem:[%s3 + $0x30] sm:$0xff]
    %v56 = vld [vmem:[%s3 + $0x38] sm:$0xff]
    %vm57 = vcmask 523264
    %v59 = vsel %vm57, %v40, 0
    %61 = vmatprep.subr.mxu0 0.0
    %62 = vmatpush1.msra.mxu0 %v49
    %63 = vmatprep.subr.mxu0 0.0
    %64 = vmatpush1.msra.mxu0 %v50
    %65 = vmatprep.subr.mxu0 0.0
    %66 = vmatpush1.msra.mxu0 %v51
    %67 = vmatprep.subr.mxu0 0.0
    %68 = vmatpush1.msra.mxu0 %v52
    %69 = vmatprep.subr.mxu0 0.0
    %70 = vmatpush1.msra.mxu0 %v53
    %71 = vmatprep.subr.mxu0 0.0
    %72 = vmatpush1.msra.mxu0 %v54
    %73 = vmatprep.subr.mxu0 0.0
    %74 = vmatpush1.msra.mxu0 %v55
    %75 = vmatprep.subr.mxu0 0.0
    %76 = vmatpush1.msra.mxu0 %v56
    %77 = vmatprep.subr.mxu0 0.0
    %78 = vmatpush1.msra.mxu0 0.0
    %79 = vmatprep.subr.mxu0 0.0
    %80 = vmatpush1.msra.mxu0 0.0
    %81 = vmatprep.subr.mxu0 0.0
    %82 = vmatpush1.msra.mxu0 0.0
    %83 = vmatprep.subr.mxu0 0.0
    %84 = vmatpush1.msra.mxu0 0.0
    %85 = vmatprep.subr.mxu0 0.0
    %86 = vmatpush1.msra.mxu0 0.0
    %87 = vmatprep.subr.mxu0 0.0
    %88 = vmatpush1.msra.mxu0 0.0
    %89 = vmatprep.subr.mxu0 0.0
    %90 = vmatpush1.msra.mxu0 0.0
    %91 = vmatprep.subr.mxu0 0.0
    %92 = vmatpush1.msra.mxu0 0.0
    %93 = vmatprep.subr.mxu0 0.0
    %94 = vmatpush1.msra.mxu0 0.0
    %95 = vmatprep.subr.mxu0 0.0
    %96 = vmatpush1.msra.mxu0 0.0
    %97 = vmatprep.subr.mxu0 0.0
    %98 = vmatpush1.msra.mxu0 0.0
    %99 = vmatprep.subr.mxu0 0.0
    %100 = vmatpush1.msra.mxu0 0.0
    %101 = vmatprep.subr.mxu0 0.0
    %102 = vmatpush1.msra.mxu0 0.0
    %103 = vmatprep.subr.mxu0 0.0
    %104 = vmatpush1.msra.mxu0 0.0
    %105 = vmatprep.subr.mxu0 0.0
    %106 = vmatpush1.msra.mxu0 0.0
    %107 = vmatprep.subr.mxu0 0.0
    %108 = vmatpush1.msra.mxu0 0.0
    %109 = vmatprep.subr.mxu0 0.0
    %110 = vmatpush1.msra.mxu0 0.0
    %111 = vmatprep.subr.mxu0 0.0
    %112 = vmatpush1.msra.mxu0 0.0
    %113 = vmatprep.subr.mxu0 0.0
    %114 = vmatpush1.msra.mxu0 0.0
    %115 = vmatprep.subr.mxu0 0.0
    %116 = vmatpush1.msra.mxu0 0.0
    %117 = vmatprep.subr.mxu0 0.0
    %118 = vmatpush1.msra.mxu0 0.0
    %119 = vmatprep.subr.mxu0 0.0
    %120 = vmatpush1.msra.mxu0 0.0
    %121 = vmatprep.subr.mxu0 0.0
    %122 = vmatpush1.msra.mxu0 0.0
    %123 = vmatprep.subr.mxu0 0.0
    %124 = vmatpush1.msra.mxu0 0.0
    %125 = vmatprep.mubr.f32.mxu0 0.0
    %126 = vmatmul.mubr.f32.gmra.mrb[0].mxu0 %v59
    %v127 = vpop.f32.mrb[0].mxu0
    %v128 = vadd.f32 0.0, %v127
    %v129 = vpop.f32.mrb[0].mxu0
    %130 = vdwg.mxu0
    %v132 = vsel %vm57, %v39, 0
    %134 = vmatprep.subr.mxu0 0.0
    %135 = vmatpush1.msra.mxu0 %v41
    %136 = vmatprep.subr.mxu0 0.0
    %137 = vmatpush1.msra.mxu0 %v42
    %138 = vmatprep.subr.mxu0 0.0
    %139 = vmatpush1.msra.mxu0 %v43
    %140 = vmatprep.subr.mxu0 0.0
    %141 = vmatpush1.msra.mxu0 %v44
    %142 = vmatprep.subr.mxu0 0.0
    %143 = vmatpush1.msra.mxu0 %v45
    %144 = vmatprep.subr.mxu0 0.0
    %145 = vmatpush1.msra.mxu0 %v46
    %146 = vmatprep.subr.mxu0 0.0
    %147 = vmatpush1.msra.mxu0 %v47
    %148 = vmatprep.subr.mxu0 0.0
    %149 = vmatpush1.msra.mxu0 %v48
    %150 = vmatprep.subr.mxu0 0.0
    %151 = vmatpush1.msra.mxu0 0.0
    %152 = vmatprep.subr.mxu0 0.0
    %153 = vmatpush1.msra.mxu0 0.0
    %154 = vmatprep.subr.mxu0 0.0
    %155 = vmatpush1.msra.mxu0 0.0
    %156 = vmatprep.subr.mxu0 0.0
    %157 = vmatpush1.msra.mxu0 0.0
    %158 = vmatprep.subr.mxu0 0.0
    %159 = vmatpush1.msra.mxu0 0.0
    %160 = vmatprep.subr.mxu0 0.0
    %161 = vmatpush1.msra.mxu0 0.0
    %162 = vmatprep.subr.mxu0 0.0
    %163 = vmatpush1.msra.mxu0 0.0
    %164 = vmatprep.subr.mxu0 0.0
    %165 = vmatpush1.msra.mxu0 0.0
    %166 = vmatprep.subr.mxu0 0.0
    %167 = vmatpush1.msra.mxu0 0.0
    %168 = vmatprep.subr.mxu0 0.0
    %169 = vmatpush1.msra.mxu0 0.0
    %170 = vmatprep.subr.mxu0 0.0
    %171 = vmatpush1.msra.mxu0 0.0
    %172 = vmatprep.subr.mxu0 0.0
    %173 = vmatpush1.msra.mxu0 0.0
    %174 = vmatprep.subr.mxu0 0.0
    %175 = vmatpush1.msra.mxu0 0.0
    %176 = vmatprep.subr.mxu0 0.0
    %177 = vmatpush1.msra.mxu0 0.0
    %178 = vmatprep.subr.mxu0 0.0
    %179 = vmatpush1.msra.mxu0 0.0
    %180 = vmatprep.subr.mxu0 0.0
    %181 = vmatpush1.msra.mxu0 0.0
    %182 = vmatprep.subr.mxu0 0.0
    %183 = vmatpush1.msra.mxu0 0.0
    %184 = vmatprep.subr.mxu0 0.0
    %185 = vmatpush1.msra.mxu0 0.0
    %186 = vmatprep.subr.mxu0 0.0
    %187 = vmatpush1.msra.mxu0 0.0
    %188 = vmatprep.subr.mxu0 0.0
    %189 = vmatpush1.msra.mxu0 0.0
    %190 = vmatprep.subr.mxu0 0.0
    %191 = vmatpush1.msra.mxu0 0.0
    %192 = vmatprep.subr.mxu0 0.0
    %193 = vmatpush1.msra.mxu0 0.0
    %194 = vmatprep.subr.mxu0 0.0
    %195 = vmatpush1.msra.mxu0 0.0
    %196 = vmatprep.subr.mxu0 0.0
    %197 = vmatpush1.msra.mxu0 0.0
    %198 = vmatprep.mubr.f32.mxu0 0.0
    %199 = vmatmul.mubr.f32.gmra.mrb[0].mxu0 %v132
    %v200 = vpop.f32.mrb[0].mxu0
    %v201 = vadd.f32 %v128, %v200
    %v202 = vpop.f32.mrb[0].mxu0
    %203 = vdwg.mxu0
    %v204 = vsub.f32 %v39, %v40
    %v205 = vand.u32 2147483647, %v204
    %v206 = vld [vmem:[%s4] sm:$0xff]
    %v207 = vld [vmem:[%s4 + $0x8] sm:$0xff]
    %v208 = vld [vmem:[%s4 + $0x10] sm:$0xff]
    %v209 = vld [vmem:[%s4 + $0x18] sm:$0xff]
    %v210 = vld [vmem:[%s4 + $0x20] sm:$0xff]
    %v211 = vld [vmem:[%s4 + $0x28] sm:$0xff]
    %v212 = vld [vmem:[%s4 + $0x30] sm:$0xff]
    %v213 = vld [vmem:[%s4 + $0x38] sm:$0xff]
    %v215 = vsel %vm57, %v205, 0
    %217 = vmatprep.subr.mxu0 0.0
    %218 = vmatpush1.msra.mxu0 %v206
    %219 = vmatprep.subr.mxu0 0.0
    %220 = vmatpush1.msra.mxu0 %v207
    %221 = vmatprep.subr.mxu0 0.0
    %222 = vmatpush1.msra.mxu0 %v208
    %223 = vmatprep.subr.mxu0 0.0
    %224 = vmatpush1.msra.mxu0 %v209
    %225 = vmatprep.subr.mxu0 0.0
    %226 = vmatpush1.msra.mxu0 %v210
    %227 = vmatprep.subr.mxu0 0.0
    %228 = vmatpush1.msra.mxu0 %v211
    %229 = vmatprep.subr.mxu0 0.0
    %230 = vmatpush1.msra.mxu0 %v212
    %231 = vmatprep.subr.mxu0 0.0
    %232 = vmatpush1.msra.mxu0 %v213
    %233 = vmatprep.subr.mxu0 0.0
    %234 = vmatpush1.msra.mxu0 0.0
    %235 = vmatprep.subr.mxu0 0.0
    %236 = vmatpush1.msra.mxu0 0.0
    %237 = vmatprep.subr.mxu0 0.0
    %238 = vmatpush1.msra.mxu0 0.0
    %239 = vmatprep.subr.mxu0 0.0
    %240 = vmatpush1.msra.mxu0 0.0
    %241 = vmatprep.subr.mxu0 0.0
    %242 = vmatpush1.msra.mxu0 0.0
    %243 = vmatprep.subr.mxu0 0.0
    %244 = vmatpush1.msra.mxu0 0.0
    %245 = vmatprep.subr.mxu0 0.0
    %246 = vmatpush1.msra.mxu0 0.0
    %247 = vmatprep.subr.mxu0 0.0
    %248 = vmatpush1.msra.mxu0 0.0
    %249 = vmatprep.subr.mxu0 0.0
    %250 = vmatpush1.msra.mxu0 0.0
    %251 = vmatprep.subr.mxu0 0.0
    %252 = vmatpush1.msra.mxu0 0.0
    %253 = vmatprep.subr.mxu0 0.0
    %254 = vmatpush1.msra.mxu0 0.0
    %255 = vmatprep.subr.mxu0 0.0
    %256 = vmatpush1.msra.mxu0 0.0
    %257 = vmatprep.subr.mxu0 0.0
    %258 = vmatpush1.msra.mxu0 0.0
    %259 = vmatprep.subr.mxu0 0.0
    %260 = vmatpush1.msra.mxu0 0.0
    %261 = vmatprep.subr.mxu0 0.0
    %262 = vmatpush1.msra.mxu0 0.0
    %263 = vmatprep.subr.mxu0 0.0
    %264 = vmatpush1.msra.mxu0 0.0
    %265 = vmatprep.subr.mxu0 0.0
    %266 = vmatpush1.msra.mxu0 0.0
    %267 = vmatprep.subr.mxu0 0.0
    %268 = vmatpush1.msra.mxu0 0.0
    %269 = vmatprep.subr.mxu0 0.0
    %270 = vmatpush1.msra.mxu0 0.0
    %271 = vmatprep.subr.mxu0 0.0
    %272 = vmatpush1.msra.mxu0 0.0
    %273 = vmatprep.subr.mxu0 0.0
    %274 = vmatpush1.msra.mxu0 0.0
    %275 = vmatprep.subr.mxu0 0.0
    %276 = vmatpush1.msra.mxu0 0.0
    %277 = vmatprep.subr.mxu0 0.0
    %278 = vmatpush1.msra.mxu0 0.0
    %279 = vmatprep.subr.mxu0 0.0
    %280 = vmatpush1.msra.mxu0 0.0
    %281 = vmatprep.mubr.f32.mxu0 0.0
    %282 = vmatmul.mubr.f32.gmra.mrb[0].mxu0 %v215
    %v283 = vpop.f32.mrb[0].mxu0
    %v284 = vadd.f32 0.0, %v283
    %v285 = vpop.f32.mrb[0].mxu0
    %286 = vdwg.mxu0
    %v287 = vadd.f32 %v201, %v284
    %v288 = vmul.f32 %v39, %v40
    %v289 = vld [vmem:[%s5] sm:$0xff]
    %v290 = vld [vmem:[%s5 + $0x8] sm:$0xff]
    %v291 = vld [vmem:[%s5 + $0x10] sm:$0xff]
    %v292 = vld [vmem:[%s5 + $0x18] sm:$0xff]
    %v293 = vld [vmem:[%s5 + $0x20] sm:$0xff]
    %v294 = vld [vmem:[%s5 + $0x28] sm:$0xff]
    %v295 = vld [vmem:[%s5 + $0x30] sm:$0xff]
    %v296 = vld [vmem:[%s5 + $0x38] sm:$0xff]
    %v298 = vsel %vm57, %v288, 0
    %300 = vmatprep.subr.mxu0 0.0
    %301 = vmatpush1.msra.mxu0 %v289
    %302 = vmatprep.subr.mxu0 0.0
    %303 = vmatpush1.msra.mxu0 %v290
    %304 = vmatprep.subr.mxu0 0.0
    %305 = vmatpush1.msra.mxu0 %v291
    %306 = vmatprep.subr.mxu0 0.0
    %307 = vmatpush1.msra.mxu0 %v292
    %308 = vmatprep.subr.mxu0 0.0
    %309 = vmatpush1.msra.mxu0 %v293
    %310 = vmatprep.subr.mxu0 0.0
    %311 = vmatpush1.msra.mxu0 %v294
    %312 = vmatprep.subr.mxu0 0.0
    %313 = vmatpush1.msra.mxu0 %v295
    %314 = vmatprep.subr.mxu0 0.0
    %315 = vmatpush1.msra.mxu0 %v296
    %316 = vmatprep.subr.mxu0 0.0
    %317 = vmatpush1.msra.mxu0 0.0
    %318 = vmatprep.subr.mxu0 0.0
    %319 = vmatpush1.msra.mxu0 0.0
    %320 = vmatprep.subr.mxu0 0.0
    %321 = vmatpush1.msra.mxu0 0.0
    %322 = vmatprep.subr.mxu0 0.0
    %323 = vmatpush1.msra.mxu0 0.0
    %324 = vmatprep.subr.mxu0 0.0
    %325 = vmatpush1.msra.mxu0 0.0
    %326 = vmatprep.subr.mxu0 0.0
    %327 = vmatpush1.msra.mxu0 0.0
    %328 = vmatprep.subr.mxu0 0.0
    %329 = vmatpush1.msra.mxu0 0.0
    %330 = vmatprep.subr.mxu0 0.0
    %331 = vmatpush1.msra.mxu0 0.0
    %332 = vmatprep.subr.mxu0 0.0
    %333 = vmatpush1.msra.mxu0 0.0
    %334 = vmatprep.subr.mxu0 0.0
    %335 = vmatpush1.msra.mxu0 0.0
    %336 = vmatprep.subr.mxu0 0.0
    %337 = vmatpush1.msra.mxu0 0.0
    %338 = vmatprep.subr.mxu0 0.0
    %339 = vmatpush1.msra.mxu0 0.0
    %340 = vmatprep.subr.mxu0 0.0
    %341 = vmatpush1.msra.mxu0 0.0
    %342 = vmatprep.subr.mxu0 0.0
    %343 = vmatpush1.msra.mxu0 0.0
    %344 = vmatprep.subr.mxu0 0.0
    %345 = vmatpush1.msra.mxu0 0.0
    %346 = vmatprep.subr.mxu0 0.0
    %347 = vmatpush1.msra.mxu0 0.0
    %348 = vmatprep.subr.mxu0 0.0
    %349 = vmatpush1.msra.mxu0 0.0
    %350 = vmatprep.subr.mxu0 0.0
    %351 = vmatpush1.msra.mxu0 0.0
    %352 = vmatprep.subr.mxu0 0.0
    %353 = vmatpush1.msra.mxu0 0.0
    %354 = vmatprep.subr.mxu0 0.0
    %355 = vmatpush1.msra.mxu0 0.0
    %356 = vmatprep.subr.mxu0 0.0
    %357 = vmatpush1.msra.mxu0 0.0
    %358 = vmatprep.subr.mxu0 0.0
    %359 = vmatpush1.msra.mxu0 0.0
    %360 = vmatprep.subr.mxu0 0.0
    %361 = vmatpush1.msra.mxu0 0.0
    %362 = vmatprep.subr.mxu0 0.0
    %363 = vmatpush1.msra.mxu0 0.0
    %364 = vmatprep.mubr.f32.mxu0 0.0
    %365 = vmatmul.mubr.f32.gmra.mrb[0].mxu0 %v298
    %v366 = vpop.f32.mrb[0].mxu0
    %v367 = vadd.f32 0.0, %v366
    %v368 = vpop.f32.mrb[0].mxu0
    %369 = vdwg.mxu0
    %v370 = vadd.f32 %v287, %v367
    %v371 = vld [vmem:[%s6] sm:$0x1]
    %v373 = vlaneseq
    %v374 = vshrl.u32 %v373, 7
    %v375 = vsub.s32 0, %v374
    %v376 = vrot.slane %v371, %v375
    %v378 = vadd.f32 %v370, %v376
    %v379 = vld [vmem:[%s7] sm:$0xff]
    %v380 = vld [vmem:[%s7 + $0x8] sm:$0xff]
    %v381 = vld [vmem:[%s7 + $0x10] sm:$0xff]
    %v382 = vld [vmem:[%s7 + $0x18] sm:$0xff]
    %v383 = vld [vmem:[%s8] sm:$0x1]
    %v385 = vlaneseq
    %v386 = vshrl.u32 %v385, 7
    %v387 = vsub.s32 0, %v386
    %v388 = vrot.slane %v383, %v387
    %vm390 = vcmask 261120
    %v392 = vsel %vm390, %v378, 0
    %394 = vmatprep.subr.mxu0 0.0
    %395 = vmatpush1.msra.mxu0 %v379
    %396 = vmatprep.subr.mxu0 0.0
    %397 = vmatpush1.msra.mxu0 %v380
    %398 = vmatprep.subr.mxu0 0.0
    %399 = vmatpush1.msra.mxu0 %v381
    %400 = vmatprep.subr.mxu0 0.0
    %401 = vmatpush1.msra.mxu0 %v382
    %402 = vmatprep.subr.mxu0 0.0
    %403 = vmatpush1.msra.mxu0 0.0
    %404 = vmatprep.subr.mxu0 0.0
    %405 = vmatpush1.msra.mxu0 0.0
    %406 = vmatprep.subr.mxu0 0.0
    %407 = vmatpush1.msra.mxu0 0.0
    %408 = vmatprep.subr.mxu0 0.0
    %409 = vmatpush1.msra.mxu0 0.0
    %410 = vmatprep.subr.mxu0 0.0
    %411 = vmatpush1.msra.mxu0 0.0
    %412 = vmatprep.subr.mxu0 0.0
    %413 = vmatpush1.msra.mxu0 0.0
    %414 = vmatprep.subr.mxu0 0.0
    %415 = vmatpush1.msra.mxu0 0.0
    %416 = vmatprep.subr.mxu0 0.0
    %417 = vmatpush1.msra.mxu0 0.0
    %418 = vmatprep.subr.mxu0 0.0
    %419 = vmatpush1.msra.mxu0 0.0
    %420 = vmatprep.subr.mxu0 0.0
    %421 = vmatpush1.msra.mxu0 0.0
    %422 = vmatprep.subr.mxu0 0.0
    %423 = vmatpush1.msra.mxu0 0.0
    %424 = vmatprep.subr.mxu0 0.0
    %425 = vmatpush1.msra.mxu0 0.0
    %426 = vmatprep.subr.mxu0 0.0
    %427 = vmatpush1.msra.mxu0 0.0
    %428 = vmatprep.subr.mxu0 0.0
    %429 = vmatpush1.msra.mxu0 0.0
    %430 = vmatprep.subr.mxu0 0.0
    %431 = vmatpush1.msra.mxu0 0.0
    %432 = vmatprep.subr.mxu0 0.0
    %433 = vmatpush1.msra.mxu0 0.0
    %434 = vmatprep.subr.mxu0 0.0
    %435 = vmatpush1.msra.mxu0 0.0
    %436 = vmatprep.subr.mxu0 0.0
    %437 = vmatpush1.msra.mxu0 0.0
    %438 = vmatprep.subr.mxu0 0.0
    %439 = vmatpush1.msra.mxu0 0.0
    %440 = vmatprep.subr.mxu0 0.0
    %441 = vmatpush1.msra.mxu0 0.0
    %442 = vmatprep.subr.mxu0 0.0
    %443 = vmatpush1.msra.mxu0 0.0
    %444 = vmatprep.subr.mxu0 0.0
    %445 = vmatpush1.msra.mxu0 0.0
    %446 = vmatprep.subr.mxu0 0.0
    %447 = vmatpush1.msra.mxu0 0.0
    %448 = vmatprep.subr.mxu0 0.0
    %449 = vmatpush1.msra.mxu0 0.0
    %450 = vmatprep.subr.mxu0 0.0
    %451 = vmatpush1.msra.mxu0 0.0
    %452 = vmatprep.subr.mxu0 0.0
    %453 = vmatpush1.msra.mxu0 0.0
    %454 = vmatprep.subr.mxu0 0.0
    %455 = vmatpush1.msra.mxu0 0.0
    %456 = vmatprep.subr.mxu0 0.0
    %457 = vmatpush1.msra.mxu0 0.0
    %458 = vmatprep.mubr.f32.mxu0 0.0
    %459 = vmatmul.mubr.f32.gmra.mrb[0].mxu0 %v392
    %v460 = vpop.f32.mrb[0].mxu0
    %v461 = vadd.f32 %v388, %v460
    %v462 = vpop.f32.mrb[0].mxu0
    %463 = vdwg.mxu0
    %v464 = vld [vmem:[%s9] sm:$0xff]
    %v465 = vld [vmem:[%s9 + $0x8] sm:$0xff]
    %v466 = vld [vmem:[%s9 + $0x10] sm:$0xff]
    %v467 = vld [vmem:[%s9 + $0x18] sm:$0xff]
    %v468 = vld [vmem:[%s10] sm:$0x1]
    %v470 = vlaneseq
    %v471 = vshrl.u32 %v470, 7
    %v472 = vsub.s32 0, %v471
    %v473 = vrot.slane %v468, %v472
    %v476 = vsel %vm390, %v461, 0
    %478 = vmatprep.subr.mxu0 0.0
    %479 = vmatpush1.msra.mxu0 %v464
    %480 = vmatprep.subr.mxu0 0.0
    %481 = vmatpush1.msra.mxu0 %v465
    %482 = vmatprep.subr.mxu0 0.0
    %483 = vmatpush1.msra.mxu0 %v466
    %484 = vmatprep.subr.mxu0 0.0
    %485 = vmatpush1.msra.mxu0 %v467
    %486 = vmatprep.subr.mxu0 0.0
    %487 = vmatpush1.msra.mxu0 0.0
    %488 = vmatprep.subr.mxu0 0.0
    %489 = vmatpush1.msra.mxu0 0.0
    %490 = vmatprep.subr.mxu0 0.0
    %491 = vmatpush1.msra.mxu0 0.0
    %492 = vmatprep.subr.mxu0 0.0
    %493 = vmatpush1.msra.mxu0 0.0
    %494 = vmatprep.subr.mxu0 0.0
    %495 = vmatpush1.msra.mxu0 0.0
    %496 = vmatprep.subr.mxu0 0.0
    %497 = vmatpush1.msra.mxu0 0.0
    %498 = vmatprep.subr.mxu0 0.0
    %499 = vmatpush1.msra.mxu0 0.0
    %500 = vmatprep.subr.mxu0 0.0
    %501 = vmatpush1.msra.mxu0 0.0
    %502 = vmatprep.subr.mxu0 0.0
    %503 = vmatpush1.msra.mxu0 0.0
    %504 = vmatprep.subr.mxu0 0.0
    %505 = vmatpush1.msra.mxu0 0.0
    %506 = vmatprep.subr.mxu0 0.0
    %507 = vmatpush1.msra.mxu0 0.0
    %508 = vmatprep.subr.mxu0 0.0
    %509 = vmatpush1.msra.mxu0 0.0
    %510 = vmatprep.subr.mxu0 0.0
    %511 = vmatpush1.msra.mxu0 0.0
    %512 = vmatprep.subr.mxu0 0.0
    %513 = vmatpush1.msra.mxu0 0.0
    %514 = vmatprep.subr.mxu0 0.0
    %515 = vmatpush1.msra.mxu0 0.0
    %516 = vmatprep.subr.mxu0 0.0
    %517 = vmatpush1.msra.mxu0 0.0
    %518 = vmatprep.subr.mxu0 0.0
    %519 = vmatpush1.msra.mxu0 0.0
    %520 = vmatprep.subr.mxu0 0.0
    %521 = vmatpush1.msra.mxu0 0.0
    %522 = vmatprep.subr.mxu0 0.0
    %523 = vmatpush1.msra.mxu0 0.0
    %524 = vmatprep.subr.mxu0 0.0
    %525 = vmatpush1.msra.mxu0 0.0
    %526 = vmatprep.subr.mxu0 0.0
    %527 = vmatpush1.msra.mxu0 0.0
    %528 = vmatprep.subr.mxu0 0.0
    %529 = vmatpush1.msra.mxu0 0.0
    %530 = vmatprep.subr.mxu0 0.0
    %531 = vmatpush1.msra.mxu0 0.0
    %532 = vmatprep.subr.mxu0 0.0
    %533 = vmatpush1.msra.mxu0 0.0
    %534 = vmatprep.subr.mxu0 0.0
    %535 = vmatpush1.msra.mxu0 0.0
    %536 = vmatprep.subr.mxu0 0.0
    %537 = vmatpush1.msra.mxu0 0.0
    %538 = vmatprep.subr.mxu0 0.0
    %539 = vmatpush1.msra.mxu0 0.0
    %540 = vmatprep.subr.mxu0 0.0
    %541 = vmatpush1.msra.mxu0 0.0
    %542 = vmatprep.mubr.f32.mxu0 0.0
    %543 = vmatmul.mubr.f32.gmra.mrb[0].mxu0 %v476
    %v544 = vpop.f32.mrb[0].mxu0
    %v545 = vadd.f32 %v473, %v544
    %v546 = vpop.f32.mrb[0].mxu0
    %547 = vdwg.mxu0
    %vm548 = vcmask 17408
    %549 = vst.msk [vmem:[#allocation2] sm:$0x3] %vm548, %v545
    // Predicated region
    $region46: #{bilstm_maxpool_nli_forward.3} parent=1 // pred_check
      _
    $region47: #{bilstm_maxpool_nli_forward.3} parent=1 // pred_check_branch
      %551 = sbr.rel (0) target = $region49
    $region48: #{bilstm_maxpool_nli_forward.3} parent=1 // pred_region
      %s553 = ssub.s32 32, 32
      %554 = vsyncadd [#allocation3], %s553
      %s556 = sshll.u32 [#allocation2], 4
      %s557 = int_to_ptr.vmem [resolvable:$true] %s556
      %559 = dma.vmem_to_hbm [thread:$0]  %s557, 32, %s11, [#allocation3]
    $region49: #{bilstm_maxpool_nli_forward.3} parent=1 // pred_fallthru
      _
    // Predicated region
    $region50: #{bilstm_maxpool_nli_forward.3} parent=1 // pred_check
      _
    $region51: #{bilstm_maxpool_nli_forward.3} parent=1 // pred_check_branch
      %561 = sbr.rel (0) target = $region53
    $region52: #{bilstm_maxpool_nli_forward.3} parent=1 // pred_region
      %562 = dma.done [#allocation3], 32
    $region53: #{bilstm_maxpool_nli_forward.3} parent=1 // pred_fallthru
      _
    %563 = vsyncpa [#allocation3], 1

// kernel: bilstm_maxpool_nli_forward.2
$region0: #{bilstm_maxpool_nli_forward.2}
  #allocation0 [shape = 'u32[]', space=smem, size = 0x4, offset = 0x4, fixed_abs, tag = 'smem constant byte address 0x4 - core index']
  #allocation1 [shape = 'u32[144,128]{1,0:T(1,128)}', space=vmem, size = 0x12000, scoped, tag = 'internal scratch']
  #allocation2 [shape = 'f32[8,8,128]{2,1,0:T(8,128)}', space=vmem, size = 0x8000, scoped, tag = 'scratch operand']
  #allocation3 [shape = 'f32[8,8,128]{2,1,0:T(8,128)}', space=vmem, size = 0x8000, scoped, tag = 'scratch operand']
  %s0 = inlined_call_operand.vmem [shape: f32[8,8,32], index: 0, kind: input, shape index: {}]
  %s1 = inlined_call_operand.vmem [shape: s32[8,1], index: 1, kind: input, shape index: {}]
  %s2 = inlined_call_operand.vmem [shape: f32[32,256], index: 2, kind: input, shape index: {}]
  %s3 = inlined_call_operand.vmem [shape: f32[1,256], index: 3, kind: input, shape index: {}]
  %s4 = inlined_call_operand.vmem [shape: f32[32,128], index: 4, kind: input, shape index: {}]
  %s5 = inlined_call_operand.vmem [shape: f32[32,128], index: 5, kind: input, shape index: {}]
  %s6 = inlined_call_operand.vmem [shape: f32[8,64], index: 6, kind: output, shape index: {}]
  %s7 = sld [smem:[#allocation0]]
  $region34: #{bilstm_maxpool_nli_forward.2} parent=0
    _
  %s9 = ssub.s32 1, %s7
  %s10 = scalar_select 0, %s9, %s7
  // Predicated region
  $region2: #{bilstm_maxpool_nli_forward.2} parent=0 // pred_check
    _
  $region3: #{bilstm_maxpool_nli_forward.2} parent=0 // pred_check_branch
    %12 = sbr.rel (0) target = $region5
  $region4: #{bilstm_maxpool_nli_forward.2} parent=0 // pred_region
    _
  $region5: #{bilstm_maxpool_nli_forward.2} parent=0 // pred_fallthru
    _
  // Predicated region
  $region6: #{bilstm_maxpool_nli_forward.2} parent=0 // pred_check
    _
  $region7: #{bilstm_maxpool_nli_forward.2} parent=0 // pred_check_branch
    %14 = sbr.rel (0) target = $region9
  $region8: #{bilstm_maxpool_nli_forward.2} parent=0 // pred_region
    _
  $region9: #{bilstm_maxpool_nli_forward.2} parent=0 // pred_fallthru
    _
  // Predicated region
  $region10: #{bilstm_maxpool_nli_forward.2} parent=0 // pred_check
    _
  $region11: #{bilstm_maxpool_nli_forward.2} parent=0 // pred_check_branch
    %16 = sbr.rel (0) target = $region13
  $region12: #{bilstm_maxpool_nli_forward.2} parent=0 // pred_region
    _
  $region13: #{bilstm_maxpool_nli_forward.2} parent=0 // pred_fallthru
    _
  // Predicated region
  $region14: #{bilstm_maxpool_nli_forward.2} parent=0 // pred_check
    _
  $region15: #{bilstm_maxpool_nli_forward.2} parent=0 // pred_check_branch
    %18 = sbr.rel (0) target = $region17
  $region16: #{bilstm_maxpool_nli_forward.2} parent=0 // pred_region
    _
  $region17: #{bilstm_maxpool_nli_forward.2} parent=0 // pred_fallthru
    _
  // Predicated region
  $region18: #{bilstm_maxpool_nli_forward.2} parent=0 // pred_check
    _
  $region19: #{bilstm_maxpool_nli_forward.2} parent=0 // pred_check_branch
    %20 = sbr.rel (0) target = $region21
  $region20: #{bilstm_maxpool_nli_forward.2} parent=0 // pred_region
    _
  $region21: #{bilstm_maxpool_nli_forward.2} parent=0 // pred_fallthru
    _
  // Predicated region
  $region22: #{bilstm_maxpool_nli_forward.2} parent=0 // pred_check
    _
  $region23: #{bilstm_maxpool_nli_forward.2} parent=0 // pred_check_branch
    %22 = sbr.rel (0) target = $region25
  $region24: #{bilstm_maxpool_nli_forward.2} parent=0 // pred_region
    _
  $region25: #{bilstm_maxpool_nli_forward.2} parent=0 // pred_fallthru
    _
  %v23 = vld [vmem:[%s0] sm:$0xff]
  %v24 = vld [vmem:[%s0 + $0x8] sm:$0xff]
  %v25 = vld [vmem:[%s0 + $0x10] sm:$0xff]
  %v26 = vld [vmem:[%s0 + $0x18] sm:$0xff]
  %v27 = vld [vmem:[%s0 + $0x20] sm:$0xff]
  %v28 = vld [vmem:[%s0 + $0x28] sm:$0xff]
  %v29 = vld [vmem:[%s0 + $0x30] sm:$0xff]
  %v30 = vld [vmem:[%s0 + $0x38] sm:$0xff]
  %v31 = vld [vmem:[%s2] sm:$0xff]
  %v32 = vld [vmem:[%s2 + $0x8] sm:$0xff]
  %v33 = vld [vmem:[%s2 + $0x10] sm:$0xff]
  %v34 = vld [vmem:[%s2 + $0x18] sm:$0xff]
  %v35 = vld [vmem:[%s2 + $0x20] sm:$0xff]
  %v36 = vld [vmem:[%s2 + $0x28] sm:$0xff]
  %v37 = vld [vmem:[%s2 + $0x30] sm:$0xff]
  %v38 = vld [vmem:[%s2 + $0x38] sm:$0xff]
  %v39 = vld [vmem:[%s3] sm:$0x3]
  %v41 = vlaneseq
  %v42 = vshrl.u32 %v41, 7
  %v43 = vsub.s32 0, %v42
  %v44 = vrot.slane %v39, %v43
  %v45 = vlaneseq
  %v46 = vshrl.u32 %v45, 7
  %v47 = vsub.s32 1, %v46
  %v48 = vrot.slane %v39, %v47
  %vm51 = vcmask 261120
  %v53 = vsel %vm51, %v23, 0
  %v56 = vsel %vm51, %v24, 0
  %v59 = vsel %vm51, %v25, 0
  %v62 = vsel %vm51, %v26, 0
  %v65 = vsel %vm51, %v27, 0
  %v68 = vsel %vm51, %v28, 0
  %v71 = vsel %vm51, %v29, 0
  %v74 = vsel %vm51, %v30, 0
  %76 = vmatprep.subr.mxu0 %v32
  %77 = vmatpush1.msra.mxu0 %v31
  %78 = vmatprep.subr.mxu0 %v34
  %79 = vmatpush1.msra.mxu0 %v33
  %80 = vmatprep.subr.mxu0 %v36
  %81 = vmatpush1.msra.mxu0 %v35
  %82 = vmatprep.subr.mxu0 %v38
  %83 = vmatpush1.msra.mxu0 %v37
  %84 = vmatprep.subr.mxu0 0.0
  %85 = vmatpush1.msra.mxu0 0.0
  %86 = vmatprep.subr.mxu0 0.0
  %87 = vmatpush1.msra.mxu0 0.0
  %88 = vmatprep.subr.mxu0 0.0
  %89 = vmatpush1.msra.mxu0 0.0
  %90 = vmatprep.subr.mxu0 0.0
  %91 = vmatpush1.msra.mxu0 0.0
  %92 = vmatprep.subr.mxu0 0.0
  %93 = vmatpush1.msra.mxu0 0.0
  %94 = vmatprep.subr.mxu0 0.0
  %95 = vmatpush1.msra.mxu0 0.0
  %96 = vmatprep.subr.mxu0 0.0
  %97 = vmatpush1.msra.mxu0 0.0
  %98 = vmatprep.subr.mxu0 0.0
  %99 = vmatpush1.msra.mxu0 0.0
  %100 = vmatprep.subr.mxu0 0.0
  %101 = vmatpush1.msra.mxu0 0.0
  %102 = vmatprep.subr.mxu0 0.0
  %103 = vmatpush1.msra.mxu0 0.0
  %104 = vmatprep.subr.mxu0 0.0
  %105 = vmatpush1.msra.mxu0 0.0
  %106 = vmatprep.subr.mxu0 0.0
  %107 = vmatpush1.msra.mxu0 0.0
  %108 = vmatprep.subr.mxu0 0.0
  %109 = vmatpush1.msra.mxu0 0.0
  %110 = vmatprep.subr.mxu0 0.0
  %111 = vmatpush1.msra.mxu0 0.0
  %112 = vmatprep.subr.mxu0 0.0
  %113 = vmatpush1.msra.mxu0 0.0
  %114 = vmatprep.subr.mxu0 0.0
  %115 = vmatpush1.msra.mxu0 0.0
  %116 = vmatprep.subr.mxu0 0.0
  %117 = vmatpush1.msra.mxu0 0.0
  %118 = vmatprep.subr.mxu0 0.0
  %119 = vmatpush1.msra.mxu0 0.0
  %120 = vmatprep.subr.mxu0 0.0
  %121 = vmatpush1.msra.mxu0 0.0
  %122 = vmatprep.subr.mxu0 0.0
  %123 = vmatpush1.msra.mxu0 0.0
  %124 = vmatprep.subr.mxu0 0.0
  %125 = vmatpush1.msra.mxu0 0.0
  %126 = vmatprep.subr.mxu0 0.0
  %127 = vmatpush1.msra.mxu0 0.0
  %128 = vmatprep.subr.mxu0 0.0
  %129 = vmatpush1.msra.mxu0 0.0
  %130 = vmatprep.subr.mxu0 0.0
  %131 = vmatpush1.msra.mxu0 0.0
  %132 = vmatprep.subr.mxu0 0.0
  %133 = vmatpush1.msra.mxu0 0.0
  %134 = vmatprep.subr.mxu0 0.0
  %135 = vmatpush1.msra.mxu0 0.0
  %136 = vmatprep.subr.mxu0 0.0
  %137 = vmatpush1.msra.mxu0 0.0
  %138 = vmatprep.subr.mxu0 0.0
  %139 = vmatpush1.msra.mxu0 0.0
  %140 = vmatprep.mubr.f32.mxu0 0.0
  %141 = vmatmul.mubr.f32.gmra.mrb[0].mxu0 %v53
  %v142 = vpop.f32.mrb[0].mxu0
  %v143 = vadd.f32 %v44, %v142
  %v144 = vpop.f32.mrb[0].mxu0
  %v145 = vadd.f32 %v48, %v144
  %146 = vmatprep.mubr.f32.mxu0 0.0
  %147 = vmatmul.mubr.f32.gmra.mrb[0].mxu0 %v56
  %v148 = vpop.f32.mrb[0].mxu0
  %v149 = vadd.f32 %v44, %v148
  %v150 = vpop.f32.mrb[0].mxu0
  %v151 = vadd.f32 %v48, %v150
  %152 = vmatprep.mubr.f32.mxu0 0.0
  %153 = vmatmul.mubr.f32.gmra.mrb[0].mxu0 %v59
  %v154 = vpop.f32.mrb[0].mxu0
  %v155 = vadd.f32 %v44, %v154
  %v156 = vpop.f32.mrb[0].mxu0
  %v157 = vadd.f32 %v48, %v156
  %158 = vmatprep.mubr.f32.mxu0 0.0
  %159 = vmatmul.mubr.f32.gmra.mrb[0].mxu0 %v62
  %v160 = vpop.f32.mrb[0].mxu0
  %v161 = vadd.f32 %v44, %v160
  %v162 = vpop.f32.mrb[0].mxu0
  %v163 = vadd.f32 %v48, %v162
  %164 = vmatprep.mubr.f32.mxu0 0.0
  %165 = vmatmul.mubr.f32.gmra.mrb[0].mxu0 %v65
  %v166 = vpop.f32.mrb[0].mxu0
  %v167 = vadd.f32 %v44, %v166
  %v168 = vpop.f32.mrb[0].mxu0
  %v169 = vadd.f32 %v48, %v168
  %170 = vmatprep.mubr.f32.mxu0 0.0
  %171 = vmatmul.mubr.f32.gmra.mrb[0].mxu0 %v68
  %v172 = vpop.f32.mrb[0].mxu0
  %v173 = vadd.f32 %v44, %v172
  %v174 = vpop.f32.mrb[0].mxu0
  %v175 = vadd.f32 %v48, %v174
  %176 = vmatprep.mubr.f32.mxu0 0.0
  %177 = vmatmul.mubr.f32.gmra.mrb[0].mxu0 %v71
  %v178 = vpop.f32.mrb[0].mxu0
  %v179 = vadd.f32 %v44, %v178
  %v180 = vpop.f32.mrb[0].mxu0
  %v181 = vadd.f32 %v48, %v180
  %182 = vmatprep.mubr.f32.mxu0 0.0
  %183 = vmatmul.mubr.f32.gmra.mrb[0].mxu0 %v74
  %v184 = vpop.f32.mrb[0].mxu0
  %v185 = vadd.f32 %v44, %v184
  %v186 = vpop.f32.mrb[0].mxu0
  %v187 = vadd.f32 %v48, %v186
  %188 = vdwg.mxu0
  %189 = vst [vmem:[#allocation2] sm:$0xff] %v143
  %190 = vst [vmem:[#allocation2 + $0x8] sm:$0xff] %v149
  %191 = vst [vmem:[#allocation2 + $0x10] sm:$0xff] %v155
  %192 = vst [vmem:[#allocation2 + $0x18] sm:$0xff] %v161
  %193 = vst [vmem:[#allocation2 + $0x20] sm:$0xff] %v167
  %194 = vst [vmem:[#allocation2 + $0x28] sm:$0xff] %v173
  %195 = vst [vmem:[#allocation2 + $0x30] sm:$0xff] %v179
  %196 = vst [vmem:[#allocation2 + $0x38] sm:$0xff] %v185
  %197 = vst [vmem:[#allocation3] sm:$0xff] %v145
  %198 = vst [vmem:[#allocation3 + $0x8] sm:$0xff] %v151
  %199 = vst [vmem:[#allocation3 + $0x10] sm:$0xff] %v157
  %200 = vst [vmem:[#allocation3 + $0x18] sm:$0xff] %v163
  %201 = vst [vmem:[#allocation3 + $0x20] sm:$0xff] %v169
  %202 = vst [vmem:[#allocation3 + $0x28] sm:$0xff] %v175
  %203 = vst [vmem:[#allocation3 + $0x30] sm:$0xff] %v181
  %204 = vst [vmem:[#allocation3 + $0x38] sm:$0xff] %v187
  %v205 = vld [vmem:[%s4] sm:$0xff]
  %v206 = vld [vmem:[%s4 + $0x8] sm:$0xff]
  %v207 = vld [vmem:[%s4 + $0x10] sm:$0xff]
  %v208 = vld [vmem:[%s4 + $0x18] sm:$0xff]
  %v209 = vld [vmem:[%s5] sm:$0xff]
  %v210 = vld [vmem:[%s5 + $0x8] sm:$0xff]
  %v211 = vld [vmem:[%s5 + $0x10] sm:$0xff]
  %v212 = vld [vmem:[%s5 + $0x18] sm:$0xff]
  %v213 = vld [vmem:[%s1] sm:$0xff]
  %v214 = vld [vmem:[#allocation2] sm:$0xff]
  %vm215 = vcmp.gt.s32.totalorder %v213, 0
  %v217 = vsel %vm51, 0.0, 0
  %219 = vmatprep.subr.mxu0 0.0
  %220 = vmatpush1.msra.mxu0 %v205
  %221 = vmatprep.subr.mxu0 0.0
  %222 = vmatpush1.msra.mxu0 %v206
  %223 = vmatprep.subr.mxu0 0.0
  %224 = vmatpush1.msra.mxu0 %v207
  %225 = vmatprep.subr.mxu0 0.0
  %226 = vmatpush1.msra.mxu0 %v208
  %227 = vmatprep.subr.mxu0 0.0
  %228 = vmatpush1.msra.mxu0 0.0
  %229 = vmatprep.subr.mxu0 0.0
  %230 = vmatpush1.msra.mxu0 0.0
  %231 = vmatprep.subr.mxu0 0.0
  %232 = vmatpush1.msra.mxu0 0.0
  %233 = vmatprep.subr.mxu0 0.0
  %234 = vmatpush1.msra.mxu0 0.0
  %235 = vmatprep.subr.mxu0 0.0
  %236 = vmatpush1.msra.mxu0 0.0
  %237 = vmatprep.subr.mxu0 0.0
  %238 = vmatpush1.msra.mxu0 0.0
  %239 = vmatprep.subr.mxu0 0.0
  %240 = vmatpush1.msra.mxu0 0.0
  %241 = vmatprep.subr.mxu0 0.0
  %242 = vmatpush1.msra.mxu0 0.0
  %243 = vmatprep.subr.mxu0 0.0
  %244 = vmatpush1.msra.mxu0 0.0
  %245 = vmatprep.subr.mxu0 0.0
  %246 = vmatpush1.msra.mxu0 0.0
  %247 = vmatprep.subr.mxu0 0.0
  %248 = vmatpush1.msra.mxu0 0.0
  %249 = vmatprep.subr.mxu0 0.0
  %250 = vmatpush1.msra.mxu0 0.0
  %251 = vmatprep.subr.mxu0 0.0
  %252 = vmatpush1.msra.mxu0 0.0
  %253 = vmatprep.subr.mxu0 0.0
  %254 = vmatpush1.msra.mxu0 0.0
  %255 = vmatprep.subr.mxu0 0.0
  %256 = vmatpush1.msra.mxu0 0.0
  %257 = vmatprep.subr.mxu0 0.0
  %258 = vmatpush1.msra.mxu0 0.0
  %259 = vmatprep.subr.mxu0 0.0
  %260 = vmatpush1.msra.mxu0 0.0
  %261 = vmatprep.subr.mxu0 0.0
  %262 = vmatpush1.msra.mxu0 0.0
  %263 = vmatprep.subr.mxu0 0.0
  %264 = vmatpush1.msra.mxu0 0.0
  %265 = vmatprep.subr.mxu0 0.0
  %266 = vmatpush1.msra.mxu0 0.0
  %267 = vmatprep.subr.mxu0 0.0
  %268 = vmatpush1.msra.mxu0 0.0
  %269 = vmatprep.subr.mxu0 0.0
  %270 = vmatpush1.msra.mxu0 0.0
  %271 = vmatprep.subr.mxu0 0.0
  %272 = vmatpush1.msra.mxu0 0.0
  %273 = vmatprep.subr.mxu0 0.0
  %274 = vmatpush1.msra.mxu0 0.0
  %275 = vmatprep.subr.mxu0 0.0
  %276 = vmatpush1.msra.mxu0 0.0
  %277 = vmatprep.subr.mxu0 0.0
  %278 = vmatpush1.msra.mxu0 0.0
  %279 = vmatprep.subr.mxu0 0.0
  %280 = vmatpush1.msra.mxu0 0.0
  %281 = vmatprep.subr.mxu0 0.0
  %282 = vmatpush1.msra.mxu0 0.0
  %283 = vmatprep.mubr.f32.mxu0 0.0
  %284 = vmatmul.mubr.f32.gmra.mrb[0].mxu0 %v217
  %v285 = vpop.f32.mrb[0].mxu0
  %v286 = vadd.f32 0.0, %v285
  %v287 = vpop.f32.mrb[0].mxu0
  %288 = vdwg.mxu0
  %v289 = vadd.f32 %v214, %v286
  %v290 = vxor.u32 %v289, 2147483648
  %v291 = vmul.f32 %v290, 1.442695
  %v292 = vpow.pop %v291
  %v293 = vadd.f32 %v292, 1.0
  %v294 = vrcp.pop %v293
  %v295 = vmul.f32 1.0, %v294
  %v296 = vtanh.pop %v289
  %v297 = vmul.f32 %v295, 0.0
  %299 = vrot.lane.b32.xlu0 %v296, 64
  %v300 = vpop.permute.xlu0 %299
  %v302 = vmul.f32 %v295, %v300
  %304 = vrot.lane.b32.xlu0 %v302, 32
  %v305 = vpop.permute.xlu0 %304
  %v307 = vadd.f32 %v297, %v305
  %v308 = vtanh.pop %v307
  %310 = vrot.lane.b32.xlu0 %v308, 64
  %v311 = vpop.permute.xlu0 %310
  %v313 = vmul.f32 %v295, %v311
  %v314 = vsel %vm215, 1, 0
  %315 = vset.pattern.permute.xlu0 0
  %316 = vperm.xlu0 %315, %v314
  %v317 = vpop.permute.xlu0 %316
  %vm318 = vcmp.eq.s32.totalorder %v317, 1
  %v319 = vsel %vm318, %v313, 0.0
  %v320 = vsel %vm318, %v307, 0.0
  %s321 = scalar_lea.vmem [#allocation3], 56
  %v322 = vld [vmem:[%s321] sm:$0xff]
  %vm323 = vcmp.gt.s32.totalorder %v213, 7
  %324 = vmatprep.subr.mxu0 0.0
  %325 = vmatpush1.msra.mxu0 %v209
  %326 = vmatprep.subr.mxu0 0.0
  %327 = vmatpush1.msra.mxu0 %v210
  %328 = vmatprep.subr.mxu0 0.0
  %329 = vmatpush1.msra.mxu0 %v211
  %330 = vmatprep.subr.mxu0 0.0
  %331 = vmatpush1.msra.mxu0 %v212
  %332 = vmatprep.subr.mxu0 0.0
  %333 = vmatpush1.msra.mxu0 0.0
  %334 = vmatprep.subr.mxu0 0.0
  %335 = vmatpush1.msra.mxu0 0.0
  %336 = vmatprep.subr.mxu0 0.0
  %337 = vmatpush1.msra.mxu0 0.0
  %338 = vmatprep.subr.mxu0 0.0
  %339 = vmatpush1.msra.mxu0 0.0
  %340 = vmatprep.subr.mxu0 0.0
  %341 = vmatpush1.msra.mxu0 0.0
  %342 = vmatprep.subr.mxu0 0.0
  %343 = vmatpush1.msra.mxu0 0.0
  %344 = vmatprep.subr.mxu0 0.0
  %345 = vmatpush1.msra.mxu0 0.0
  %346 = vmatprep.subr.mxu0 0.0
  %347 = vmatpush1.msra.mxu0 0.0
  %348 = vmatprep.subr.mxu0 0.0
  %349 = vmatpush1.msra.mxu0 0.0
  %350 = vmatprep.subr.mxu0 0.0
  %351 = vmatpush1.msra.mxu0 0.0
  %352 = vmatprep.subr.mxu0 0.0
  %353 = vmatpush1.msra.mxu0 0.0
  %354 = vmatprep.subr.mxu0 0.0
  %355 = vmatpush1.msra.mxu0 0.0
  %356 = vmatprep.subr.mxu0 0.0
  %357 = vmatpush1.msra.mxu0 0.0
  %358 = vmatprep.subr.mxu0 0.0
  %359 = vmatpush1.msra.mxu0 0.0
  %360 = vmatprep.subr.mxu0 0.0
  %361 = vmatpush1.msra.mxu0 0.0
  %362 = vmatprep.subr.mxu0 0.0
  %363 = vmatpush1.msra.mxu0 0.0
  %364 = vmatprep.subr.mxu0 0.0
  %365 = vmatpush1.msra.mxu0 0.0
  %366 = vmatprep.subr.mxu0 0.0
  %367 = vmatpush1.msra.mxu0 0.0
  %368 = vmatprep.subr.mxu0 0.0
  %369 = vmatpush1.msra.mxu0 0.0
  %370 = vmatprep.subr.mxu0 0.0
  %371 = vmatpush1.msra.mxu0 0.0
  %372 = vmatprep.subr.mxu0 0.0
  %373 = vmatpush1.msra.mxu0 0.0
  %374 = vmatprep.subr.mxu0 0.0
  %375 = vmatpush1.msra.mxu0 0.0
  %376 = vmatprep.subr.mxu0 0.0
  %377 = vmatpush1.msra.mxu0 0.0
  %378 = vmatprep.subr.mxu0 0.0
  %379 = vmatpush1.msra.mxu0 0.0
  %380 = vmatprep.subr.mxu0 0.0
  %381 = vmatpush1.msra.mxu0 0.0
  %382 = vmatprep.subr.mxu0 0.0
  %383 = vmatpush1.msra.mxu0 0.0
  %384 = vmatprep.subr.mxu0 0.0
  %385 = vmatpush1.msra.mxu0 0.0
  %386 = vmatprep.subr.mxu0 0.0
  %387 = vmatpush1.msra.mxu0 0.0
  %388 = vmatprep.mubr.f32.mxu0 0.0
  %389 = vmatmul.mubr.f32.gmra.mrb[0].mxu0 %v217
  %v390 = vpop.f32.mrb[0].mxu0
  %v391 = vadd.f32 0.0, %v390
  %v392 = vpop.f32.mrb[0].mxu0
  %393 = vdwg.mxu0
  %v394 = vadd.f32 %v322, %v391
  %v395 = vxor.u32 %v394, 2147483648
  %v396 = vmul.f32 %v395, 1.442695
  %v397 = vpow.pop %v396
  %v398 = vadd.f32 %v397, 1.0
  %v399 = vrcp.pop %v398
  %v400 = vmul.f32 1.0, %v399
  %v401 = vtanh.pop %v394
  %v402 = vmul.f32 %v400, 0.0
  %404 = vrot.lane.b32.xlu0 %v401, 64
  %v405 = vpop.permute.xlu0 %404
  %v407 = vmul.f32 %v400, %v405
  %409 = vrot.lane.b32.xlu0 %v407, 32
  %v410 = vpop.permute.xlu0 %409
  %v412 = vadd.f32 %v402, %v410
  %v413 = vtanh.pop %v412
  %415 = vrot.lane.b32.xlu0 %v413, 64
  %v416 = vpop.permute.xlu0 %415
  %v418 = vmul.f32 %v400, %v416
  %v419 = vsel %vm323, 1, 0
  %420 = vset.pattern.permute.xlu0 0
  %421 = vperm.xlu0 %420, %v419
  %v422 = vpop.permute.xlu0 %421
  %vm423 = vcmp.eq.s32.totalorder %v422, 1
  %v424 = vsel %vm423, %v418, 0.0
  %v425 = vsel %vm423, %v412, 0.0
  %s426 = scalar_lea.vmem [#allocation2], 8
  %v427 = vld [vmem:[%s426] sm:$0xff]
  %vm428 = vcmp.gt.s32.totalorder %v213, 1
  %430 = vrot.lane.b32.xlu0 %v319, 32
  %v431 = vpop.permute.xlu0 %430
  %v432 = vsel %vm51, %v431, 0
  %434 = vmatprep.subr.mxu0 0.0
  %435 = vmatpush1.msra.mxu0 %v205
  %436 = vmatprep.subr.mxu0 0.0
  %437 = vmatpush1.msra.mxu0 %v206
  %438 = vmatprep.subr.mxu0 0.0
  %439 = vmatpush1.msra.mxu0 %v207
  %440 = vmatprep.subr.mxu0 0.0
  %441 = vmatpush1.msra.mxu0 %v208
  %442 = vmatprep.subr.mxu0 0.0
  %443 = vmatpush1.msra.mxu0 0.0
  %444 = vmatprep.subr.mxu0 0.0
  %445 = vmatpush1.msra.mxu0 0.0
  %446 = vmatprep.subr.mxu0 0.0
  %447 = vmatpush1.msra.mxu0 0.0
  %448 = vmatprep.subr.mxu0 0.0
  %449 = vmatpush1.msra.mxu0 0.0
  %450 = vmatprep.subr.mxu0 0.0
  %451 = vmatpush1.msra.mxu0 0.0
  %452 = vmatprep.subr.mxu0 0.0
  %453 = vmatpush1.msra.mxu0 0.0
  %454 = vmatprep.subr.mxu0 0.0
  %455 = vmatpush1.msra.mxu0 0.0
  %456 = vmatprep.subr.mxu0 0.0
  %457 = vmatpush1.msra.mxu0 0.0
  %458 = vmatprep.subr.mxu0 0.0
  %459 = vmatpush1.msra.mxu0 0.0
  %460 = vmatprep.subr.mxu0 0.0
  %461 = vmatpush1.msra.mxu0 0.0
  %462 = vmatprep.subr.mxu0 0.0
  %463 = vmatpush1.msra.mxu0 0.0
  %464 = vmatprep.subr.mxu0 0.0
  %465 = vmatpush1.msra.mxu0 0.0
  %466 = vmatprep.subr.mxu0 0.0
  %467 = vmatpush1.msra.mxu0 0.0
  %468 = vmatprep.subr.mxu0 0.0
  %469 = vmatpush1.msra.mxu0 0.0
  %470 = vmatprep.subr.mxu0 0.0
  %471 = vmatpush1.msra.mxu0 0.0
  %472 = vmatprep.subr.mxu0 0.0
  %473 = vmatpush1.msra.mxu0 0.0
  %474 = vmatprep.subr.mxu0 0.0
  %475 = vmatpush1.msra.mxu0 0.0
  %476 = vmatprep.subr.mxu0 0.0
  %477 = vmatpush1.msra.mxu0 0.0
  %478 = vmatprep.subr.mxu0 0.0
  %479 = vmatpush1.msra.mxu0 0.0
  %480 = vmatprep.subr.mxu0 0.0
  %481 = vmatpush1.msra.mxu0 0.0
  %482 = vmatprep.subr.mxu0 0.0
  %483 = vmatpush1.msra.mxu0 0.0
  %484 = vmatprep.subr.mxu0 0.0
  %485 = vmatpush1.msra.mxu0 0.0
  %486 = vmatprep.subr.mxu0 0.0
  %487 = vmatpush1.msra.mxu0 0.0
  %488 = vmatprep.subr.mxu0 0.0
  %489 = vmatpush1.msra.mxu0 0.0
  %490 = vmatprep.subr.mxu0 0.0
  %491 = vmatpush1.msra.mxu0 0.0
  %492 = vmatprep.subr.mxu0 0.0
  %493 = vmatpush1.msra.mxu0 0.0
  %494 = vmatprep.subr.mxu0 0.0
  %495 = vmatpush1.msra.mxu0 0.0
  %496 = vmatprep.subr.mxu0 0.0
  %497 = vmatpush1.msra.mxu0 0.0
  %498 = vmatprep.mubr.f32.mxu0 0.0
  %499 = vmatmul.mubr.f32.gmra.mrb[0].mxu0 %v432
  %v500 = vpop.f32.mrb[0].mxu0
  %v501 = vadd.f32 0.0, %v500
  %v502 = vpop.f32.mrb[0].mxu0
  %503 = vdwg.mxu0
  %v504 = vadd.f32 %v427, %v501
  %v505 = vxor.u32 %v504, 2147483648
  %v506 = vmul.f32 %v505, 1.442695
  %v507 = vpow.pop %v506
  %v508 = vadd.f32 %v507, 1.0
  %v509 = vrcp.pop %v508
  %v510 = vmul.f32 1.0, %v509
  %v511 = vtanh.pop %v504
  %v512 = vmul.f32 %v510, %v320
  %514 = vrot.lane.b32.xlu0 %v511, 64
  %v515 = vpop.permute.xlu0 %514
  %v517 = vmul.f32 %v510, %v515
  %519 = vrot.lane.b32.xlu0 %v517, 32
  %v520 = vpop.permute.xlu0 %519
  %v522 = vadd.f32 %v512, %v520
  %v523 = vtanh.pop %v522
  %525 = vrot.lane.b32.xlu0 %v523, 64
  %v526 = vpop.permute.xlu0 %525
  %v528 = vmul.f32 %v510, %v526
  %v529 = vsel %vm428, 1, 0
  %530 = vset.pattern.permute.xlu0 0
  %531 = vperm.xlu0 %530, %v529
  %v532 = vpop.permute.xlu0 %531
  %vm533 = vcmp.eq.s32.totalorder %v532, 1
  %v534 = vsel %vm533, %v528, %v319
  %v535 = vsel %vm533, %v522, %v320
  %v536 = vsel %vm533, %v528, 0.0
  %v537 = vmax.f32 %v319, %v536
  %s538 = scalar_lea.vmem [#allocation3], 48
  %v539 = vld [vmem:[%s538] sm:$0xff]
  %vm540 = vcmp.gt.s32.totalorder %v213, 6
  %542 = vrot.lane.b32.xlu0 %v424, 32
  %v543 = vpop.permute.xlu0 %542
  %v544 = vsel %vm51, %v543, 0
  %546 = vmatprep.subr.mxu0 0.0
  %547 = vmatpush1.msra.mxu0 %v209
  %548 = vmatprep.subr.mxu0 0.0
  %549 = vmatpush1.msra.mxu0 %v210
  %550 = vmatprep.subr.mxu0 0.0
  %551 = vmatpush1.msra.mxu0 %v211
  %552 = vmatprep.subr.mxu0 0.0
  %553 = vmatpush1.msra.mxu0 %v212
  %554 = vmatprep.subr.mxu0 0.0
  %555 = vmatpush1.msra.mxu0 0.0
  %556 = vmatprep.subr.mxu0 0.0
  %557 = vmatpush1.msra.mxu0 0.0
  %558 = vmatprep.subr.mxu0 0.0
  %559 = vmatpush1.msra.mxu0 0.0
  %560 = vmatprep.subr.mxu0 0.0
  %561 = vmatpush1.msra.mxu0 0.0
  %562 = vmatprep.subr.mxu0 0.0
  %563 = vmatpush1.msra.mxu0 0.0
  %564 = vmatprep.subr.mxu0 0.0
  %565 = vmatpush1.msra.mxu0 0.0
  %566 = vmatprep.subr.mxu0 0.0
  %567 = vmatpush1.msra.mxu0 0.0
  %568 = vmatprep.subr.mxu0 0.0
  %569 = vmatpush1.msra.mxu0 0.0
  %570 = vmatprep.subr.mxu0 0.0
  %571 = vmatpush1.msra.mxu0 0.0
  %572 = vmatprep.subr.mxu0 0.0
  %573 = vmatpush1.msra.mxu0 0.0
  %574 = vmatprep.subr.mxu0 0.0
  %575 = vmatpush1.msra.mxu0 0.0
  %576 = vmatprep.subr.mxu0 0.0
  %577 = vmatpush1.msra.mxu0 0.0
  %578 = vmatprep.subr.mxu0 0.0
  %579 = vmatpush1.msra.mxu0 0.0
  %580 = vmatprep.subr.mxu0 0.0
  %581 = vmatpush1.msra.mxu0 0.0
  %582 = vmatprep.subr.mxu0 0.0
  %583 = vmatpush1.msra.mxu0 0.0
  %584 = vmatprep.subr.mxu0 0.0
  %585 = vmatpush1.msra.mxu0 0.0
  %586 = vmatprep.subr.mxu0 0.0
  %587 = vmatpush1.msra.mxu0 0.0
  %588 = vmatprep.subr.mxu0 0.0
  %589 = vmatpush1.msra.mxu0 0.0
  %590 = vmatprep.subr.mxu0 0.0
  %591 = vmatpush1.msra.mxu0 0.0
  %592 = vmatprep.subr.mxu0 0.0
  %593 = vmatpush1.msra.mxu0 0.0
  %594 = vmatprep.subr.mxu0 0.0
  %595 = vmatpush1.msra.mxu0 0.0
  %596 = vmatprep.subr.mxu0 0.0
  %597 = vmatpush1.msra.mxu0 0.0
  %598 = vmatprep.subr.mxu0 0.0
  %599 = vmatpush1.msra.mxu0 0.0
  %600 = vmatprep.subr.mxu0 0.0
  %601 = vmatpush1.msra.mxu0 0.0
  %602 = vmatprep.subr.mxu0 0.0
  %603 = vmatpush1.msra.mxu0 0.0
  %604 = vmatprep.subr.mxu0 0.0
  %605 = vmatpush1.msra.mxu0 0.0
  %606 = vmatprep.subr.mxu0 0.0
  %607 = vmatpush1.msra.mxu0 0.0
  %608 = vmatprep.subr.mxu0 0.0
  %609 = vmatpush1.msra.mxu0 0.0
  %610 = vmatprep.mubr.f32.mxu0 0.0
  %611 = vmatmul.mubr.f32.gmra.mrb[0].mxu0 %v544
  %v612 = vpop.f32.mrb[0].mxu0
  %v613 = vadd.f32 0.0, %v612
  %v614 = vpop.f32.mrb[0].mxu0
  %615 = vdwg.mxu0
  %v616 = vadd.f32 %v539, %v613
  %v617 = vxor.u32 %v616, 2147483648
  %v618 = vmul.f32 %v617, 1.442695
  %v619 = vpow.pop %v618
  %v620 = vadd.f32 %v619, 1.0
  %v621 = vrcp.pop %v620
  %v622 = vmul.f32 1.0, %v621
  %v623 = vtanh.pop %v616
  %v624 = vmul.f32 %v622, %v425
  %626 = vrot.lane.b32.xlu0 %v623, 64
  %v627 = vpop.permute.xlu0 %626
  %v629 = vmul.f32 %v622, %v627
  %631 = vrot.lane.b32.xlu0 %v629, 32
  %v632 = vpop.permute.xlu0 %631
  %v634 = vadd.f32 %v624, %v632
  %v635 = vtanh.pop %v634
  %637 = vrot.lane.b32.xlu0 %v635, 64
  %v638 = vpop.permute.xlu0 %637
  %v640 = vmul.f32 %v622, %v638
  %v641 = vsel %vm540, 1, 0
  %642 = vset.pattern.permute.xlu0 0
  %643 = vperm.xlu0 %642, %v641
  %v644 = vpop.permute.xlu0 %643
  %vm645 = vcmp.eq.s32.totalorder %v644, 1
  %v646 = vsel %vm645, %v640, %v424
  %v647 = vsel %vm645, %v634, %v425
  %v648 = vsel %vm645, %v640, 0.0
  %v649 = vmax.f32 %v424, %v648
  %s650 = scalar_lea.vmem [#allocation2], 16
  %v651 = vld [vmem:[%s650] sm:$0xff]
  %vm652 = vcmp.gt.s32.totalorder %v213, 2
  %654 = vrot.lane.b32.xlu0 %v534, 32
  %v655 = vpop.permute.xlu0 %654
  %v656 = vsel %vm51, %v655, 0
  %658 = vmatprep.subr.mxu0 0.0
  %659 = vmatpush1.msra.mxu0 %v205
  %660 = vmatprep.subr.mxu0 0.0
  %661 = vmatpush1.msra.mxu0 %v206
  %662 = vmatprep.subr.mxu0 0.0
  %663 = vmatpush1.msra.mxu0 %v207
  %664 = vmatprep.subr.mxu0 0.0
  %665 = vmatpush1.msra.mxu0 %v208
  %666 = vmatprep.subr.mxu0 0.0
  %667 = vmatpush1.msra.mxu0 0.0
  %668 = vmatprep.subr.mxu0 0.0
  %669 = vmatpush1.msra.mxu0 0.0
  %670 = vmatprep.subr.mxu0 0.0
  %671 = vmatpush1.msra.mxu0 0.0
  %672 = vmatprep.subr.mxu0 0.0
  %673 = vmatpush1.msra.mxu0 0.0
  %674 = vmatprep.subr.mxu0 0.0
  %675 = vmatpush1.msra.mxu0 0.0
  %676 = vmatprep.subr.mxu0 0.0
  %677 = vmatpush1.msra.mxu0 0.0
  %678 = vmatprep.subr.mxu0 0.0
  %679 = vmatpush1.msra.mxu0 0.0
  %680 = vmatprep.subr.mxu0 0.0
  %681 = vmatpush1.msra.mxu0 0.0
  %682 = vmatprep.subr.mxu0 0.0
  %683 = vmatpush1.msra.mxu0 0.0
  %684 = vmatprep.subr.mxu0 0.0
  %685 = vmatpush1.msra.mxu0 0.0
  %686 = vmatprep.subr.mxu0 0.0
  %687 = vmatpush1.msra.mxu0 0.0
  %688 = vmatprep.subr.mxu0 0.0
  %689 = vmatpush1.msra.mxu0 0.0
  %690 = vmatprep.subr.mxu0 0.0
  %691 = vmatpush1.msra.mxu0 0.0
  %692 = vmatprep.subr.mxu0 0.0
  %693 = vmatpush1.msra.mxu0 0.0
  %694 = vmatprep.subr.mxu0 0.0
  %695 = vmatpush1.msra.mxu0 0.0
  %696 = vmatprep.subr.mxu0 0.0
  %697 = vmatpush1.msra.mxu0 0.0
  %698 = vmatprep.subr.mxu0 0.0
  %699 = vmatpush1.msra.mxu0 0.0
  %700 = vmatprep.subr.mxu0 0.0
  %701 = vmatpush1.msra.mxu0 0.0
  %702 = vmatprep.subr.mxu0 0.0
  %703 = vmatpush1.msra.mxu0 0.0
  %704 = vmatprep.subr.mxu0 0.0
  %705 = vmatpush1.msra.mxu0 0.0
  %706 = vmatprep.subr.mxu0 0.0
  %707 = vmatpush1.msra.mxu0 0.0
  %708 = vmatprep.subr.mxu0 0.0
  %709 = vmatpush1.msra.mxu0 0.0
  %710 = vmatprep.subr.mxu0 0.0
  %711 = vmatpush1.msra.mxu0 0.0
  %712 = vmatprep.subr.mxu0 0.0
  %713 = vmatpush1.msra.mxu0 0.0
  %714 = vmatprep.subr.mxu0 0.0
  %715 = vmatpush1.msra.mxu0 0.0
  %716 = vmatprep.subr.mxu0 0.0
  %717 = vmatpush1.msra.mxu0 0.0
  %718 = vmatprep.subr.mxu0 0.0
  %719 = vmatpush1.msra.mxu0 0.0
  %720 = vmatprep.subr.mxu0 0.0
  %721 = vmatpush1.msra.mxu0 0.0
  %722 = vmatprep.mubr.f32.mxu0 0.0
  %723 = vmatmul.mubr.f32.gmra.mrb[0].mxu0 %v656
  %v724 = vpop.f32.mrb[0].mxu0
  %v725 = vadd.f32 0.0, %v724
  %v726 = vpop.f32.mrb[0].mxu0
  %727 = vdwg.mxu0
  %v728 = vadd.f32 %v651, %v725
  %v729 = vxor.u32 %v728, 2147483648
  %v730 = vmul.f32 %v729, 1.442695
  %v731 = vpow.pop %v730
  %v732 = vadd.f32 %v731, 1.0
  %v733 = vrcp.pop %v732
  %v734 = vmul.f32 1.0, %v733
  %v735 = vtanh.pop %v728
  %v736 = vmul.f32 %v734, %v535
  %738 = vrot.lane.b32.xlu0 %v735, 64
  %v739 = vpop.permute.xlu0 %738
  %v741 = vmul.f32 %v734, %v739
  %743 = vrot.lane.b32.xlu0 %v741, 32
  %v744 = vpop.permute.xlu0 %743
  %v746 = vadd.f32 %v736, %v744
  %v747 = vtanh.pop %v746
  %749 = vrot.lane.b32.xlu0 %v747, 64
  %v750 = vpop.permute.xlu0 %749
  %v752 = vmul.f32 %v734, %v750
  %v753 = vsel %vm652, 1, 0
  %754 = vset.pattern.permute.xlu0 0
  %755 = vperm.xlu0 %754, %v753
  %v756 = vpop.permute.xlu0 %755
  %vm757 = vcmp.eq.s32.totalorder %v756, 1
  %v758 = vsel %vm757, %v752, %v534
  %v759 = vsel %vm757, %v746, %v535
  %v760 = vsel %vm757, %v752, 0.0
  %v761 = vmax.f32 %v537, %v760
  %s762 = scalar_lea.vmem [#allocation3], 40
  %v763 = vld [vmem:[%s762] sm:$0xff]
  %vm764 = vcmp.gt.s32.totalorder %v213, 5
  %766 = vrot.lane.b32.xlu0 %v646, 32
  %v767 = vpop.permute.xlu0 %766
  %v768 = vsel %vm51, %v767, 0
  %770 = vmatprep.subr.mxu0 0.0
  %771 = vmatpush1.msra.mxu0 %v209
  %772 = vmatprep.subr.mxu0 0.0
  %773 = vmatpush1.msra.mxu0 %v210
  %774 = vmatprep.subr.mxu0 0.0
  %775 = vmatpush1.msra.mxu0 %v211
  %776 = vmatprep.subr.mxu0 0.0
  %777 = vmatpush1.msra.mxu0 %v212
  %778 = vmatprep.subr.mxu0 0.0
  %779 = vmatpush1.msra.mxu0 0.0
  %780 = vmatprep.subr.mxu0 0.0
  %781 = vmatpush1.msra.mxu0 0.0
  %782 = vmatprep.subr.mxu0 0.0
  %783 = vmatpush1.msra.mxu0 0.0
  %784 = vmatprep.subr.mxu0 0.0
  %785 = vmatpush1.msra.mxu0 0.0
  %786 = vmatprep.subr.mxu0 0.0
  %787 = vmatpush1.msra.mxu0 0.0
  %788 = vmatprep.subr.mxu0 0.0
  %789 = vmatpush1.msra.mxu0 0.0
  %790 = vmatprep.subr.mxu0 0.0
  %791 = vmatpush1.msra.mxu0 0.0
  %792 = vmatprep.subr.mxu0 0.0
  %793 = vmatpush1.msra.mxu0 0.0
  %794 = vmatprep.subr.mxu0 0.0
  %795 = vmatpush1.msra.mxu0 0.0
  %796 = vmatprep.subr.mxu0 0.0
  %797 = vmatpush1.msra.mxu0 0.0
  %798 = vmatprep.subr.mxu0 0.0
  %799 = vmatpush1.msra.mxu0 0.0
  %800 = vmatprep.subr.mxu0 0.0
  %801 = vmatpush1.msra.mxu0 0.0
  %802 = vmatprep.subr.mxu0 0.0
  %803 = vmatpush1.msra.mxu0 0.0
  %804 = vmatprep.subr.mxu0 0.0
  %805 = vmatpush1.msra.mxu0 0.0
  %806 = vmatprep.subr.mxu0 0.0
  %807 = vmatpush1.msra.mxu0 0.0
  %808 = vmatprep.subr.mxu0 0.0
  %809 = vmatpush1.msra.mxu0 0.0
  %810 = vmatprep.subr.mxu0 0.0
  %811 = vmatpush1.msra.mxu0 0.0
  %812 = vmatprep.subr.mxu0 0.0
  %813 = vmatpush1.msra.mxu0 0.0
  %814 = vmatprep.subr.mxu0 0.0
  %815 = vmatpush1.msra.mxu0 0.0
  %816 = vmatprep.subr.mxu0 0.0
  %817 = vmatpush1.msra.mxu0 0.0
  %818 = vmatprep.subr.mxu0 0.0
  %819 = vmatpush1.msra.mxu0 0.0
  %820 = vmatprep.subr.mxu0 0.0
  %821 = vmatpush1.msra.mxu0 0.0
  %822 = vmatprep.subr.mxu0 0.0
  %823 = vmatpush1.msra.mxu0 0.0
  %824 = vmatprep.subr.mxu0 0.0
  %825 = vmatpush1.msra.mxu0 0.0
  %826 = vmatprep.subr.mxu0 0.0
  %827 = vmatpush1.msra.mxu0 0.0
  %828 = vmatprep.subr.mxu0 0.0
  %829 = vmatpush1.msra.mxu0 0.0
  %830 = vmatprep.subr.mxu0 0.0
  %831 = vmatpush1.msra.mxu0 0.0
  %832 = vmatprep.subr.mxu0 0.0
  %833 = vmatpush1.msra.mxu0 0.0
  %834 = vmatprep.mubr.f32.mxu0 0.0
  %835 = vmatmul.mubr.f32.gmra.mrb[0].mxu0 %v768
  %v836 = vpop.f32.mrb[0].mxu0
  %v837 = vadd.f32 0.0, %v836
  %v838 = vpop.f32.mrb[0].mxu0
  %839 = vdwg.mxu0
  %v840 = vadd.f32 %v763, %v837
  %v841 = vxor.u32 %v840, 2147483648
  %v842 = vmul.f32 %v841, 1.442695
  %v843 = vpow.pop %v842
  %v844 = vadd.f32 %v843, 1.0
  %v845 = vrcp.pop %v844
  %v846 = vmul.f32 1.0, %v845
  %v847 = vtanh.pop %v840
  %v848 = vmul.f32 %v846, %v647
  %850 = vrot.lane.b32.xlu0 %v847, 64
  %v851 = vpop.permute.xlu0 %850
  %v853 = vmul.f32 %v846, %v851
  %855 = vrot.lane.b32.xlu0 %v853, 32
  %v856 = vpop.permute.xlu0 %855
  %v858 = vadd.f32 %v848, %v856
  %v859 = vtanh.pop %v858
  %861 = vrot.lane.b32.xlu0 %v859, 64
  %v862 = vpop.permute.xlu0 %861
  %v864 = vmul.f32 %v846, %v862
  %v865 = vsel %vm764, 1, 0
  %866 = vset.pattern.permute.xlu0 0
  %867 = vperm.xlu0 %866, %v865
  %v868 = vpop.permute.xlu0 %867
  %vm869 = vcmp.eq.s32.totalorder %v868, 1
  %v870 = vsel %vm869, %v864, %v646
  %v871 = vsel %vm869, %v858, %v647
  %v872 = vsel %vm869, %v864, 0.0
  %v873 = vmax.f32 %v649, %v872
  %s874 = scalar_lea.vmem [#allocation2], 24
  %v875 = vld [vmem:[%s874] sm:$0xff]
  %vm876 = vcmp.gt.s32.totalorder %v213, 3
  %878 = vrot.lane.b32.xlu0 %v758, 32
  %v879 = vpop.permute.xlu0 %878
  %v880 = vsel %vm51, %v879, 0
  %882 = vmatprep.subr.mxu0 0.0
  %883 = vmatpush1.msra.mxu0 %v205
  %884 = vmatprep.subr.mxu0 0.0
  %885 = vmatpush1.msra.mxu0 %v206
  %886 = vmatprep.subr.mxu0 0.0
  %887 = vmatpush1.msra.mxu0 %v207
  %888 = vmatprep.subr.mxu0 0.0
  %889 = vmatpush1.msra.mxu0 %v208
  %890 = vmatprep.subr.mxu0 0.0
  %891 = vmatpush1.msra.mxu0 0.0
  %892 = vmatprep.subr.mxu0 0.0
  %893 = vmatpush1.msra.mxu0 0.0
  %894 = vmatprep.subr.mxu0 0.0
  %895 = vmatpush1.msra.mxu0 0.0
  %896 = vmatprep.subr.mxu0 0.0
  %897 = vmatpush1.msra.mxu0 0.0
  %898 = vmatprep.subr.mxu0 0.0
  %899 = vmatpush1.msra.mxu0 0.0
  %900 = vmatprep.subr.mxu0 0.0
  %901 = vmatpush1.msra.mxu0 0.0
  %902 = vmatprep.subr.mxu0 0.0
  %903 = vmatpush1.msra.mxu0 0.0
  %904 = vmatprep.subr.mxu0 0.0
  %905 = vmatpush1.msra.mxu0 0.0
  %906 = vmatprep.subr.mxu0 0.0
  %907 = vmatpush1.msra.mxu0 0.0
  %908 = vmatprep.subr.mxu0 0.0
  %909 = vmatpush1.msra.mxu0 0.0
  %910 = vmatprep.subr.mxu0 0.0
  %911 = vmatpush1.msra.mxu0 0.0
  %912 = vmatprep.subr.mxu0 0.0
  %913 = vmatpush1.msra.mxu0 0.0
  %914 = vmatprep.subr.mxu0 0.0
  %915 = vmatpush1.msra.mxu0 0.0
  %916 = vmatprep.subr.mxu0 0.0
  %917 = vmatpush1.msra.mxu0 0.0
  %918 = vmatprep.subr.mxu0 0.0
  %919 = vmatpush1.msra.mxu0 0.0
  %920 = vmatprep.subr.mxu0 0.0
  %921 = vmatpush1.msra.mxu0 0.0
  %922 = vmatprep.subr.mxu0 0.0
  %923 = vmatpush1.msra.mxu0 0.0
  %924 = vmatprep.subr.mxu0 0.0
  %925 = vmatpush1.msra.mxu0 0.0
  %926 = vmatprep.subr.mxu0 0.0
  %927 = vmatpush1.msra.mxu0 0.0
  %928 = vmatprep.subr.mxu0 0.0
  %929 = vmatpush1.msra.mxu0 0.0
  %930 = vmatprep.subr.mxu0 0.0
  %931 = vmatpush1.msra.mxu0 0.0
  %932 = vmatprep.subr.mxu0 0.0
  %933 = vmatpush1.msra.mxu0 0.0
  %934 = vmatprep.subr.mxu0 0.0
  %935 = vmatpush1.msra.mxu0 0.0
  %936 = vmatprep.subr.mxu0 0.0
  %937 = vmatpush1.msra.mxu0 0.0
  %938 = vmatprep.subr.mxu0 0.0
  %939 = vmatpush1.msra.mxu0 0.0
  %940 = vmatprep.subr.mxu0 0.0
  %941 = vmatpush1.msra.mxu0 0.0
  %942 = vmatprep.subr.mxu0 0.0
  %943 = vmatpush1.msra.mxu0 0.0
  %944 = vmatprep.subr.mxu0 0.0
  %945 = vmatpush1.msra.mxu0 0.0
  %946 = vmatprep.mubr.f32.mxu0 0.0
  %947 = vmatmul.mubr.f32.gmra.mrb[0].mxu0 %v880
  %v948 = vpop.f32.mrb[0].mxu0
  %v949 = vadd.f32 0.0, %v948
  %v950 = vpop.f32.mrb[0].mxu0
  %951 = vdwg.mxu0
  %v952 = vadd.f32 %v875, %v949
  %v953 = vxor.u32 %v952, 2147483648
  %v954 = vmul.f32 %v953, 1.442695
  %v955 = vpow.pop %v954
  %v956 = vadd.f32 %v955, 1.0
  %v957 = vrcp.pop %v956
  %v958 = vmul.f32 1.0, %v957
  %v959 = vtanh.pop %v952
  %v960 = vmul.f32 %v958, %v759
  %962 = vrot.lane.b32.xlu0 %v959, 64
  %v963 = vpop.permute.xlu0 %962
  %v965 = vmul.f32 %v958, %v963
  %967 = vrot.lane.b32.xlu0 %v965, 32
  %v968 = vpop.permute.xlu0 %967
  %v970 = vadd.f32 %v960, %v968
  %v971 = vtanh.pop %v970
  %973 = vrot.lane.b32.xlu0 %v971, 64
  %v974 = vpop.permute.xlu0 %973
  %v976 = vmul.f32 %v958, %v974
  %v977 = vsel %vm876, 1, 0
  %978 = vset.pattern.permute.xlu0 0
  %979 = vperm.xlu0 %978, %v977
  %v980 = vpop.permute.xlu0 %979
  %vm981 = vcmp.eq.s32.totalorder %v980, 1
  %v982 = vsel %vm981, %v976, %v758
  %v983 = vsel %vm981, %v970, %v759
  %v984 = vsel %vm981, %v976, 0.0
  %v985 = vmax.f32 %v761, %v984
  %s986 = scalar_lea.vmem [#allocation3], 32
  %v987 = vld [vmem:[%s986] sm:$0xff]
  %vm988 = vcmp.gt.s32.totalorder %v213, 4
  %990 = vrot.lane.b32.xlu0 %v870, 32
  %v991 = vpop.permute.xlu0 %990
  %v992 = vsel %vm51, %v991, 0
  %994 = vmatprep.subr.mxu0 0.0
  %995 = vmatpush1.msra.mxu0 %v209
  %996 = vmatprep.subr.mxu0 0.0
  %997 = vmatpush1.msra.mxu0 %v210
  %998 = vmatprep.subr.mxu0 0.0
  %999 = vmatpush1.msra.mxu0 %v211
  %1000 = vmatprep.subr.mxu0 0.0
  %1001 = vmatpush1.msra.mxu0 %v212
  %1002 = vmatprep.subr.mxu0 0.0
  %1003 = vmatpush1.msra.mxu0 0.0
  %1004 = vmatprep.subr.mxu0 0.0
  %1005 = vmatpush1.msra.mxu0 0.0
  %1006 = vmatprep.subr.mxu0 0.0
  %1007 = vmatpush1.msra.mxu0 0.0
  %1008 = vmatprep.subr.mxu0 0.0
  %1009 = vmatpush1.msra.mxu0 0.0
  %1010 = vmatprep.subr.mxu0 0.0
  %1011 = vmatpush1.msra.mxu0 0.0
  %1012 = vmatprep.subr.mxu0 0.0
  %1013 = vmatpush1.msra.mxu0 0.0
  %1014 = vmatprep.subr.mxu0 0.0
  %1015 = vmatpush1.msra.mxu0 0.0
  %1016 = vmatprep.subr.mxu0 0.0
  %1017 = vmatpush1.msra.mxu0 0.0
  %1018 = vmatprep.subr.mxu0 0.0
  %1019 = vmatpush1.msra.mxu0 0.0
  %1020 = vmatprep.subr.mxu0 0.0
  %1021 = vmatpush1.msra.mxu0 0.0
  %1022 = vmatprep.subr.mxu0 0.0
  %1023 = vmatpush1.msra.mxu0 0.0
  %1024 = vmatprep.subr.mxu0 0.0
  %1025 = vmatpush1.msra.mxu0 0.0
  %1026 = vmatprep.subr.mxu0 0.0
  %1027 = vmatpush1.msra.mxu0 0.0
  %1028 = vmatprep.subr.mxu0 0.0
  %1029 = vmatpush1.msra.mxu0 0.0
  %1030 = vmatprep.subr.mxu0 0.0
  %1031 = vmatpush1.msra.mxu0 0.0
  %1032 = vmatprep.subr.mxu0 0.0
  %1033 = vmatpush1.msra.mxu0 0.0
  %1034 = vmatprep.subr.mxu0 0.0
  %1035 = vmatpush1.msra.mxu0 0.0
  %1036 = vmatprep.subr.mxu0 0.0
  %1037 = vmatpush1.msra.mxu0 0.0
  %1038 = vmatprep.subr.mxu0 0.0
  %1039 = vmatpush1.msra.mxu0 0.0
  %1040 = vmatprep.subr.mxu0 0.0
  %1041 = vmatpush1.msra.mxu0 0.0
  %1042 = vmatprep.subr.mxu0 0.0
  %1043 = vmatpush1.msra.mxu0 0.0
  %1044 = vmatprep.subr.mxu0 0.0
  %1045 = vmatpush1.msra.mxu0 0.0
  %1046 = vmatprep.subr.mxu0 0.0
  %1047 = vmatpush1.msra.mxu0 0.0
  %1048 = vmatprep.subr.mxu0 0.0
  %1049 = vmatpush1.msra.mxu0 0.0
  %1050 = vmatprep.subr.mxu0 0.0
  %1051 = vmatpush1.msra.mxu0 0.0
  %1052 = vmatprep.subr.mxu0 0.0
  %1053 = vmatpush1.msra.mxu0 0.0
  %1054 = vmatprep.subr.mxu0 0.0
  %1055 = vmatpush1.msra.mxu0 0.0
  %1056 = vmatprep.subr.mxu0 0.0
  %1057 = vmatpush1.msra.mxu0 0.0
  %1058 = vmatprep.mubr.f32.mxu0 0.0
  %1059 = vmatmul.mubr.f32.gmra.mrb[0].mxu0 %v992
  %v1060 = vpop.f32.mrb[0].mxu0
  %v1061 = vadd.f32 0.0, %v1060
  %v1062 = vpop.f32.mrb[0].mxu0
  %1063 = vdwg.mxu0
  %v1064 = vadd.f32 %v987, %v1061
  %v1065 = vxor.u32 %v1064, 2147483648
  %v1066 = vmul.f32 %v1065, 1.442695
  %v1067 = vpow.pop %v1066
  %v1068 = vadd.f32 %v1067, 1.0
  %v1069 = vrcp.pop %v1068
  %v1070 = vmul.f32 1.0, %v1069
  %v1071 = vtanh.pop %v1064
  %v1072 = vmul.f32 %v1070, %v871
  %1074 = vrot.lane.b32.xlu0 %v1071, 64
  %v1075 = vpop.permute.xlu0 %1074
  %v1077 = vmul.f32 %v1070, %v1075
  %1079 = vrot.lane.b32.xlu0 %v1077, 32
  %v1080 = vpop.permute.xlu0 %1079
  %v1082 = vadd.f32 %v1072, %v1080
  %v1083 = vtanh.pop %v1082
  %1085 = vrot.lane.b32.xlu0 %v1083, 64
  %v1086 = vpop.permute.xlu0 %1085
  %v1088 = vmul.f32 %v1070, %v1086
  %v1089 = vsel %vm988, 1, 0
  %1090 = vset.pattern.permute.xlu0 0
  %1091 = vperm.xlu0 %1090, %v1089
  %v1092 = vpop.permute.xlu0 %1091
  %vm1093 = vcmp.eq.s32.totalorder %v1092, 1
  %v1094 = vsel %vm1093, %v1088, %v870
  %v1095 = vsel %vm1093, %v1082, %v871
  %v1096 = vsel %vm1093, %v1088, 0.0
  %v1097 = vmax.f32 %v873, %v1096
  %s1098 = scalar_lea.vmem [#allocation2], 32
  %v1099 = vld [vmem:[%s1098] sm:$0xff]
  %1101 = vrot.lane.b32.xlu0 %v982, 32
  %v1102 = vpop.permute.xlu0 %1101
  %v1103 = vsel %vm51, %v1102, 0
  %1105 = vmatprep.subr.mxu0 0.0
  %1106 = vmatpush1.msra.mxu0 %v205
  %1107 = vmatprep.subr.mxu0 0.0
  %1108 = vmatpush1.msra.mxu0 %v206
  %1109 = vmatprep.subr.mxu0 0.0
  %1110 = vmatpush1.msra.mxu0 %v207
  %1111 = vmatprep.subr.mxu0 0.0
  %1112 = vmatpush1.msra.mxu0 %v208
  %1113 = vmatprep.subr.mxu0 0.0
  %1114 = vmatpush1.msra.mxu0 0.0
  %1115 = vmatprep.subr.mxu0 0.0
  %1116 = vmatpush1.msra.mxu0 0.0
  %1117 = vmatprep.subr.mxu0 0.0
  %1118 = vmatpush1.msra.mxu0 0.0
  %1119 = vmatprep.subr.mxu0 0.0
  %1120 = vmatpush1.msra.mxu0 0.0
  %1121 = vmatprep.subr.mxu0 0.0
  %1122 = vmatpush1.msra.mxu0 0.0
  %1123 = vmatprep.subr.mxu0 0.0
  %1124 = vmatpush1.msra.mxu0 0.0
  %1125 = vmatprep.subr.mxu0 0.0
  %1126 = vmatpush1.msra.mxu0 0.0
  %1127 = vmatprep.subr.mxu0 0.0
  %1128 = vmatpush1.msra.mxu0 0.0
  %1129 = vmatprep.subr.mxu0 0.0
  %1130 = vmatpush1.msra.mxu0 0.0
  %1131 = vmatprep.subr.mxu0 0.0
  %1132 = vmatpush1.msra.mxu0 0.0
  %1133 = vmatprep.subr.mxu0 0.0
  %1134 = vmatpush1.msra.mxu0 0.0
  %1135 = vmatprep.subr.mxu0 0.0
  %1136 = vmatpush1.msra.mxu0 0.0
  %1137 = vmatprep.subr.mxu0 0.0
  %1138 = vmatpush1.msra.mxu0 0.0
  %1139 = vmatprep.subr.mxu0 0.0
  %1140 = vmatpush1.msra.mxu0 0.0
  %1141 = vmatprep.subr.mxu0 0.0
  %1142 = vmatpush1.msra.mxu0 0.0
  %1143 = vmatprep.subr.mxu0 0.0
  %1144 = vmatpush1.msra.mxu0 0.0
  %1145 = vmatprep.subr.mxu0 0.0
  %1146 = vmatpush1.msra.mxu0 0.0
  %1147 = vmatprep.subr.mxu0 0.0
  %1148 = vmatpush1.msra.mxu0 0.0
  %1149 = vmatprep.subr.mxu0 0.0
  %1150 = vmatpush1.msra.mxu0 0.0
  %1151 = vmatprep.subr.mxu0 0.0
  %1152 = vmatpush1.msra.mxu0 0.0
  %1153 = vmatprep.subr.mxu0 0.0
  %1154 = vmatpush1.msra.mxu0 0.0
  %1155 = vmatprep.subr.mxu0 0.0
  %1156 = vmatpush1.msra.mxu0 0.0
  %1157 = vmatprep.subr.mxu0 0.0
  %1158 = vmatpush1.msra.mxu0 0.0
  %1159 = vmatprep.subr.mxu0 0.0
  %1160 = vmatpush1.msra.mxu0 0.0
  %1161 = vmatprep.subr.mxu0 0.0
  %1162 = vmatpush1.msra.mxu0 0.0
  %1163 = vmatprep.subr.mxu0 0.0
  %1164 = vmatpush1.msra.mxu0 0.0
  %1165 = vmatprep.subr.mxu0 0.0
  %1166 = vmatpush1.msra.mxu0 0.0
  %1167 = vmatprep.subr.mxu0 0.0
  %1168 = vmatpush1.msra.mxu0 0.0
  %1169 = vmatprep.mubr.f32.mxu0 0.0
  %1170 = vmatmul.mubr.f32.gmra.mrb[0].mxu0 %v1103
  %v1171 = vpop.f32.mrb[0].mxu0
  %v1172 = vadd.f32 0.0, %v1171
  %v1173 = vpop.f32.mrb[0].mxu0
  %1174 = vdwg.mxu0
  %v1175 = vadd.f32 %v1099, %v1172
  %v1176 = vxor.u32 %v1175, 2147483648
  %v1177 = vmul.f32 %v1176, 1.442695
  %v1178 = vpow.pop %v1177
  %v1179 = vadd.f32 %v1178, 1.0
  %v1180 = vrcp.pop %v1179
  %v1181 = vmul.f32 1.0, %v1180
  %v1182 = vtanh.pop %v1175
  %v1183 = vmul.f32 %v1181, %v983
  %1185 = vrot.lane.b32.xlu0 %v1182, 64
  %v1186 = vpop.permute.xlu0 %1185
  %v1188 = vmul.f32 %v1181, %v1186
  %1190 = vrot.lane.b32.xlu0 %v1188, 32
  %v1191 = vpop.permute.xlu0 %1190
  %v1193 = vadd.f32 %v1183, %v1191
  %v1194 = vtanh.pop %v1193
  %1196 = vrot.lane.b32.xlu0 %v1194, 64
  %v1197 = vpop.permute.xlu0 %1196
  %v1199 = vmul.f32 %v1181, %v1197
  %v1200 = vsel %vm1093, %v1199, %v982
  %v1201 = vsel %vm1093, %v1193, %v983
  %v1202 = vsel %vm1093, %v1199, 0.0
  %v1203 = vmax.f32 %v985, %v1202
  %s1204 = scalar_lea.vmem [#allocation3], 24
  %v1205 = vld [vmem:[%s1204] sm:$0xff]
  %1207 = vrot.lane.b32.xlu0 %v1094, 32
  %v1208 = vpop.permute.xlu0 %1207
  %v1209 = vsel %vm51, %v1208, 0
  %1211 = vmatprep.subr.mxu0 0.0
  %1212 = vmatpush1.msra.mxu0 %v209
  %1213 = vmatprep.subr.mxu0 0.0
  %1214 = vmatpush1.msra.mxu0 %v210
  %1215 = vmatprep.subr.mxu0 0.0
  %1216 = vmatpush1.msra.mxu0 %v211
  %1217 = vmatprep.subr.mxu0 0.0
  %1218 = vmatpush1.msra.mxu0 %v212
  %1219 = vmatprep.subr.mxu0 0.0
  %1220 = vmatpush1.msra.mxu0 0.0
  %1221 = vmatprep.subr.mxu0 0.0
  %1222 = vmatpush1.msra.mxu0 0.0
  %1223 = vmatprep.subr.mxu0 0.0
  %1224 = vmatpush1.msra.mxu0 0.0
  %1225 = vmatprep.subr.mxu0 0.0
  %1226 = vmatpush1.msra.mxu0 0.0
  %1227 = vmatprep.subr.mxu0 0.0
  %1228 = vmatpush1.msra.mxu0 0.0
  %1229 = vmatprep.subr.mxu0 0.0
  %1230 = vmatpush1.msra.mxu0 0.0
  %1231 = vmatprep.subr.mxu0 0.0
  %1232 = vmatpush1.msra.mxu0 0.0
  %1233 = vmatprep.subr.mxu0 0.0
  %1234 = vmatpush1.msra.mxu0 0.0
  %1235 = vmatprep.subr.mxu0 0.0
  %1236 = vmatpush1.msra.mxu0 0.0
  %1237 = vmatprep.subr.mxu0 0.0
  %1238 = vmatpush1.msra.mxu0 0.0
  %1239 = vmatprep.subr.mxu0 0.0
  %1240 = vmatpush1.msra.mxu0 0.0
  %1241 = vmatprep.subr.mxu0 0.0
  %1242 = vmatpush1.msra.mxu0 0.0
  %1243 = vmatprep.subr.mxu0 0.0
  %1244 = vmatpush1.msra.mxu0 0.0
  %1245 = vmatprep.subr.mxu0 0.0
  %1246 = vmatpush1.msra.mxu0 0.0
  %1247 = vmatprep.subr.mxu0 0.0
  %1248 = vmatpush1.msra.mxu0 0.0
  %1249 = vmatprep.subr.mxu0 0.0
  %1250 = vmatpush1.msra.mxu0 0.0
  %1251 = vmatprep.subr.mxu0 0.0
  %1252 = vmatpush1.msra.mxu0 0.0
  %1253 = vmatprep.subr.mxu0 0.0
  %1254 = vmatpush1.msra.mxu0 0.0
  %1255 = vmatprep.subr.mxu0 0.0
  %1256 = vmatpush1.msra.mxu0 0.0
  %1257 = vmatprep.subr.mxu0 0.0
  %1258 = vmatpush1.msra.mxu0 0.0
  %1259 = vmatprep.subr.mxu0 0.0
  %1260 = vmatpush1.msra.mxu0 0.0
  %1261 = vmatprep.subr.mxu0 0.0
  %1262 = vmatpush1.msra.mxu0 0.0
  %1263 = vmatprep.subr.mxu0 0.0
  %1264 = vmatpush1.msra.mxu0 0.0
  %1265 = vmatprep.subr.mxu0 0.0
  %1266 = vmatpush1.msra.mxu0 0.0
  %1267 = vmatprep.subr.mxu0 0.0
  %1268 = vmatpush1.msra.mxu0 0.0
  %1269 = vmatprep.subr.mxu0 0.0
  %1270 = vmatpush1.msra.mxu0 0.0
  %1271 = vmatprep.subr.mxu0 0.0
  %1272 = vmatpush1.msra.mxu0 0.0
  %1273 = vmatprep.subr.mxu0 0.0
  %1274 = vmatpush1.msra.mxu0 0.0
  %1275 = vmatprep.mubr.f32.mxu0 0.0
  %1276 = vmatmul.mubr.f32.gmra.mrb[0].mxu0 %v1209
  %v1277 = vpop.f32.mrb[0].mxu0
  %v1278 = vadd.f32 0.0, %v1277
  %v1279 = vpop.f32.mrb[0].mxu0
  %1280 = vdwg.mxu0
  %v1281 = vadd.f32 %v1205, %v1278
  %v1282 = vxor.u32 %v1281, 2147483648
  %v1283 = vmul.f32 %v1282, 1.442695
  %v1284 = vpow.pop %v1283
  %v1285 = vadd.f32 %v1284, 1.0
  %v1286 = vrcp.pop %v1285
  %v1287 = vmul.f32 1.0, %v1286
  %v1288 = vtanh.pop %v1281
  %v1289 = vmul.f32 %v1287, %v1095
  %1291 = vrot.lane.b32.xlu0 %v1288, 64
  %v1292 = vpop.permute.xlu0 %1291
  %v1294 = vmul.f32 %v1287, %v1292
  %1296 = vrot.lane.b32.xlu0 %v1294, 32
  %v1297 = vpop.permute.xlu0 %1296
  %v1299 = vadd.f32 %v1289, %v1297
  %v1300 = vtanh.pop %v1299
  %1302 = vrot.lane.b32.xlu0 %v1300, 64
  %v1303 = vpop.permute.xlu0 %1302
  %v1305 = vmul.f32 %v1287, %v1303
  %v1306 = vsel %vm981, %v1305, %v1094
  %v1307 = vsel %vm981, %v1299, %v1095
  %v1308 = vsel %vm981, %v1305, 0.0
  %v1309 = vmax.f32 %v1097, %v1308
  %s1310 = scalar_lea.vmem [#allocation2], 40
  %v1311 = vld [vmem:[%s1310] sm:$0xff]
  %1313 = vrot.lane.b32.xlu0 %v1200, 32
  %v1314 = vpop.permute.xlu0 %1313
  %v1315 = vsel %vm51, %v1314, 0
  %1317 = vmatprep.subr.mxu0 0.0
  %1318 = vmatpush1.msra.mxu0 %v205
  %1319 = vmatprep.subr.mxu0 0.0
  %1320 = vmatpush1.msra.mxu0 %v206
  %1321 = vmatprep.subr.mxu0 0.0
  %1322 = vmatpush1.msra.mxu0 %v207
  %1323 = vmatprep.subr.mxu0 0.0
  %1324 = vmatpush1.msra.mxu0 %v208
  %1325 = vmatprep.subr.mxu0 0.0
  %1326 = vmatpush1.msra.mxu0 0.0
  %1327 = vmatprep.subr.mxu0 0.0
  %1328 = vmatpush1.msra.mxu0 0.0
  %1329 = vmatprep.subr.mxu0 0.0
  %1330 = vmatpush1.msra.mxu0 0.0
  %1331 = vmatprep.subr.mxu0 0.0
  %1332 = vmatpush1.msra.mxu0 0.0
  %1333 = vmatprep.subr.mxu0 0.0
  %1334 = vmatpush1.msra.mxu0 0.0
  %1335 = vmatprep.subr.mxu0 0.0
  %1336 = vmatpush1.msra.mxu0 0.0
  %1337 = vmatprep.subr.mxu0 0.0
  %1338 = vmatpush1.msra.mxu0 0.0
  %1339 = vmatprep.subr.mxu0 0.0
  %1340 = vmatpush1.msra.mxu0 0.0
  %1341 = vmatprep.subr.mxu0 0.0
  %1342 = vmatpush1.msra.mxu0 0.0
  %1343 = vmatprep.subr.mxu0 0.0
  %1344 = vmatpush1.msra.mxu0 0.0
  %1345 = vmatprep.subr.mxu0 0.0
  %1346 = vmatpush1.msra.mxu0 0.0
  %1347 = vmatprep.subr.mxu0 0.0
  %1348 = vmatpush1.msra.mxu0 0.0
  %1349 = vmatprep.subr.mxu0 0.0
  %1350 = vmatpush1.msra.mxu0 0.0
  %1351 = vmatprep.subr.mxu0 0.0
  %1352 = vmatpush1.msra.mxu0 0.0
  %1353 = vmatprep.subr.mxu0 0.0
  %1354 = vmatpush1.msra.mxu0 0.0
  %1355 = vmatprep.subr.mxu0 0.0
  %1356 = vmatpush1.msra.mxu0 0.0
  %1357 = vmatprep.subr.mxu0 0.0
  %1358 = vmatpush1.msra.mxu0 0.0
  %1359 = vmatprep.subr.mxu0 0.0
  %1360 = vmatpush1.msra.mxu0 0.0
  %1361 = vmatprep.subr.mxu0 0.0
  %1362 = vmatpush1.msra.mxu0 0.0
  %1363 = vmatprep.subr.mxu0 0.0
  %1364 = vmatpush1.msra.mxu0 0.0
  %1365 = vmatprep.subr.mxu0 0.0
  %1366 = vmatpush1.msra.mxu0 0.0
  %1367 = vmatprep.subr.mxu0 0.0
  %1368 = vmatpush1.msra.mxu0 0.0
  %1369 = vmatprep.subr.mxu0 0.0
  %1370 = vmatpush1.msra.mxu0 0.0
  %1371 = vmatprep.subr.mxu0 0.0
  %1372 = vmatpush1.msra.mxu0 0.0
  %1373 = vmatprep.subr.mxu0 0.0
  %1374 = vmatpush1.msra.mxu0 0.0
  %1375 = vmatprep.subr.mxu0 0.0
  %1376 = vmatpush1.msra.mxu0 0.0
  %1377 = vmatprep.subr.mxu0 0.0
  %1378 = vmatpush1.msra.mxu0 0.0
  %1379 = vmatprep.subr.mxu0 0.0
  %1380 = vmatpush1.msra.mxu0 0.0
  %1381 = vmatprep.mubr.f32.mxu0 0.0
  %1382 = vmatmul.mubr.f32.gmra.mrb[0].mxu0 %v1315
  %v1383 = vpop.f32.mrb[0].mxu0
  %v1384 = vadd.f32 0.0, %v1383
  %v1385 = vpop.f32.mrb[0].mxu0
  %1386 = vdwg.mxu0
  %v1387 = vadd.f32 %v1311, %v1384
  %v1388 = vxor.u32 %v1387, 2147483648
  %v1389 = vmul.f32 %v1388, 1.442695
  %v1390 = vpow.pop %v1389
  %v1391 = vadd.f32 %v1390, 1.0
  %v1392 = vrcp.pop %v1391
  %v1393 = vmul.f32 1.0, %v1392
  %v1394 = vtanh.pop %v1387
  %v1395 = vmul.f32 %v1393, %v1201
  %1397 = vrot.lane.b32.xlu0 %v1394, 64
  %v1398 = vpop.permute.xlu0 %1397
  %v1400 = vmul.f32 %v1393, %v1398
  %1402 = vrot.lane.b32.xlu0 %v1400, 32
  %v1403 = vpop.permute.xlu0 %1402
  %v1405 = vadd.f32 %v1395, %v1403
  %v1406 = vtanh.pop %v1405
  %1408 = vrot.lane.b32.xlu0 %v1406, 64
  %v1409 = vpop.permute.xlu0 %1408
  %v1411 = vmul.f32 %v1393, %v1409
  %v1412 = vsel %vm869, %v1411, %v1200
  %v1413 = vsel %vm869, %v1405, %v1201
  %v1414 = vsel %vm869, %v1411, 0.0
  %v1415 = vmax.f32 %v1203, %v1414
  %s1416 = scalar_lea.vmem [#allocation3], 16
  %v1417 = vld [vmem:[%s1416] sm:$0xff]
  %1419 = vrot.lane.b32.xlu0 %v1306, 32
  %v1420 = vpop.permute.xlu0 %1419
  %v1421 = vsel %vm51, %v1420, 0
  %1423 = vmatprep.subr.mxu0 0.0
  %1424 = vmatpush1.msra.mxu0 %v209
  %1425 = vmatprep.subr.mxu0 0.0
  %1426 = vmatpush1.msra.mxu0 %v210
  %1427 = vmatprep.subr.mxu0 0.0
  %1428 = vmatpush1.msra.mxu0 %v211
  %1429 = vmatprep.subr.mxu0 0.0
  %1430 = vmatpush1.msra.mxu0 %v212
  %1431 = vmatprep.subr.mxu0 0.0
  %1432 = vmatpush1.msra.mxu0 0.0
  %1433 = vmatprep.subr.mxu0 0.0
  %1434 = vmatpush1.msra.mxu0 0.0
  %1435 = vmatprep.subr.mxu0 0.0
  %1436 = vmatpush1.msra.mxu0 0.0
  %1437 = vmatprep.subr.mxu0 0.0
  %1438 = vmatpush1.msra.mxu0 0.0
  %1439 = vmatprep.subr.mxu0 0.0
  %1440 = vmatpush1.msra.mxu0 0.0
  %1441 = vmatprep.subr.mxu0 0.0
  %1442 = vmatpush1.msra.mxu0 0.0
  %1443 = vmatprep.subr.mxu0 0.0
  %1444 = vmatpush1.msra.mxu0 0.0
  %1445 = vmatprep.subr.mxu0 0.0
  %1446 = vmatpush1.msra.mxu0 0.0
  %1447 = vmatprep.subr.mxu0 0.0
  %1448 = vmatpush1.msra.mxu0 0.0
  %1449 = vmatprep.subr.mxu0 0.0
  %1450 = vmatpush1.msra.mxu0 0.0
  %1451 = vmatprep.subr.mxu0 0.0
  %1452 = vmatpush1.msra.mxu0 0.0
  %1453 = vmatprep.subr.mxu0 0.0
  %1454 = vmatpush1.msra.mxu0 0.0
  %1455 = vmatprep.subr.mxu0 0.0
  %1456 = vmatpush1.msra.mxu0 0.0
  %1457 = vmatprep.subr.mxu0 0.0
  %1458 = vmatpush1.msra.mxu0 0.0
  %1459 = vmatprep.subr.mxu0 0.0
  %1460 = vmatpush1.msra.mxu0 0.0
  %1461 = vmatprep.subr.mxu0 0.0
  %1462 = vmatpush1.msra.mxu0 0.0
  %1463 = vmatprep.subr.mxu0 0.0
  %1464 = vmatpush1.msra.mxu0 0.0
  %1465 = vmatprep.subr.mxu0 0.0
  %1466 = vmatpush1.msra.mxu0 0.0
  %1467 = vmatprep.subr.mxu0 0.0
  %1468 = vmatpush1.msra.mxu0 0.0
  %1469 = vmatprep.subr.mxu0 0.0
  %1470 = vmatpush1.msra.mxu0 0.0
  %1471 = vmatprep.subr.mxu0 0.0
  %1472 = vmatpush1.msra.mxu0 0.0
  %1473 = vmatprep.subr.mxu0 0.0
  %1474 = vmatpush1.msra.mxu0 0.0
  %1475 = vmatprep.subr.mxu0 0.0
  %1476 = vmatpush1.msra.mxu0 0.0
  %1477 = vmatprep.subr.mxu0 0.0
  %1478 = vmatpush1.msra.mxu0 0.0
  %1479 = vmatprep.subr.mxu0 0.0
  %1480 = vmatpush1.msra.mxu0 0.0
  %1481 = vmatprep.subr.mxu0 0.0
  %1482 = vmatpush1.msra.mxu0 0.0
  %1483 = vmatprep.subr.mxu0 0.0
  %1484 = vmatpush1.msra.mxu0 0.0
  %1485 = vmatprep.subr.mxu0 0.0
  %1486 = vmatpush1.msra.mxu0 0.0
  %1487 = vmatprep.mubr.f32.mxu0 0.0
  %1488 = vmatmul.mubr.f32.gmra.mrb[0].mxu0 %v1421
  %v1489 = vpop.f32.mrb[0].mxu0
  %v1490 = vadd.f32 0.0, %v1489
  %v1491 = vpop.f32.mrb[0].mxu0
  %1492 = vdwg.mxu0
  %v1493 = vadd.f32 %v1417, %v1490
  %v1494 = vxor.u32 %v1493, 2147483648
  %v1495 = vmul.f32 %v1494, 1.442695
  %v1496 = vpow.pop %v1495
  %v1497 = vadd.f32 %v1496, 1.0
  %v1498 = vrcp.pop %v1497
  %v1499 = vmul.f32 1.0, %v1498
  %v1500 = vtanh.pop %v1493
  %v1501 = vmul.f32 %v1499, %v1307
  %1503 = vrot.lane.b32.xlu0 %v1500, 64
  %v1504 = vpop.permute.xlu0 %1503
  %v1506 = vmul.f32 %v1499, %v1504
  %1508 = vrot.lane.b32.xlu0 %v1506, 32
  %v1509 = vpop.permute.xlu0 %1508
  %v1511 = vadd.f32 %v1501, %v1509
  %v1512 = vtanh.pop %v1511
  %1514 = vrot.lane.b32.xlu0 %v1512, 64
  %v1515 = vpop.permute.xlu0 %1514
  %v1517 = vmul.f32 %v1499, %v1515
  %v1518 = vsel %vm757, %v1517, %v1306
  %v1519 = vsel %vm757, %v1511, %v1307
  %v1520 = vsel %vm757, %v1517, 0.0
  %v1521 = vmax.f32 %v1309, %v1520
  %s1522 = scalar_lea.vmem [#allocation2], 48
  %v1523 = vld [vmem:[%s1522] sm:$0xff]
  %1525 = vrot.lane.b32.xlu0 %v1412, 32
  %v1526 = vpop.permute.xlu0 %1525
  %v1527 = vsel %vm51, %v1526, 0
  %1529 = vmatprep.subr.mxu0 0.0
  %1530 = vmatpush1.msra.mxu0 %v205
  %1531 = vmatprep.subr.mxu0 0.0
  %1532 = vmatpush1.msra.mxu0 %v206
  %1533 = vmatprep.subr.mxu0 0.0
  %1534 = vmatpush1.msra.mxu0 %v207
  %1535 = vmatprep.subr.mxu0 0.0
  %1536 = vmatpush1.msra.mxu0 %v208
  %1537 = vmatprep.subr.mxu0 0.0
  %1538 = vmatpush1.msra.mxu0 0.0
  %1539 = vmatprep.subr.mxu0 0.0
  %1540 = vmatpush1.msra.mxu0 0.0
  %1541 = vmatprep.subr.mxu0 0.0
  %1542 = vmatpush1.msra.mxu0 0.0
  %1543 = vmatprep.subr.mxu0 0.0
  %1544 = vmatpush1.msra.mxu0 0.0
  %1545 = vmatprep.subr.mxu0 0.0
  %1546 = vmatpush1.msra.mxu0 0.0
  %1547 = vmatprep.subr.mxu0 0.0
  %1548 = vmatpush1.msra.mxu0 0.0
  %1549 = vmatprep.subr.mxu0 0.0
  %1550 = vmatpush1.msra.mxu0 0.0
  %1551 = vmatprep.subr.mxu0 0.0
  %1552 = vmatpush1.msra.mxu0 0.0
  %1553 = vmatprep.subr.mxu0 0.0
  %1554 = vmatpush1.msra.mxu0 0.0
  %1555 = vmatprep.subr.mxu0 0.0
  %1556 = vmatpush1.msra.mxu0 0.0
  %1557 = vmatprep.subr.mxu0 0.0
  %1558 = vmatpush1.msra.mxu0 0.0
  %1559 = vmatprep.subr.mxu0 0.0
  %1560 = vmatpush1.msra.mxu0 0.0
  %1561 = vmatprep.subr.mxu0 0.0
  %1562 = vmatpush1.msra.mxu0 0.0
  %1563 = vmatprep.subr.mxu0 0.0
  %1564 = vmatpush1.msra.mxu0 0.0
  %1565 = vmatprep.subr.mxu0 0.0
  %1566 = vmatpush1.msra.mxu0 0.0
  %1567 = vmatprep.subr.mxu0 0.0
  %1568 = vmatpush1.msra.mxu0 0.0
  %1569 = vmatprep.subr.mxu0 0.0
  %1570 = vmatpush1.msra.mxu0 0.0
  %1571 = vmatprep.subr.mxu0 0.0
  %1572 = vmatpush1.msra.mxu0 0.0
  %1573 = vmatprep.subr.mxu0 0.0
  %1574 = vmatpush1.msra.mxu0 0.0
  %1575 = vmatprep.subr.mxu0 0.0
  %1576 = vmatpush1.msra.mxu0 0.0
  %1577 = vmatprep.subr.mxu0 0.0
  %1578 = vmatpush1.msra.mxu0 0.0
  %1579 = vmatprep.subr.mxu0 0.0
  %1580 = vmatpush1.msra.mxu0 0.0
  %1581 = vmatprep.subr.mxu0 0.0
  %1582 = vmatpush1.msra.mxu0 0.0
  %1583 = vmatprep.subr.mxu0 0.0
  %1584 = vmatpush1.msra.mxu0 0.0
  %1585 = vmatprep.subr.mxu0 0.0
  %1586 = vmatpush1.msra.mxu0 0.0
  %1587 = vmatprep.subr.mxu0 0.0
  %1588 = vmatpush1.msra.mxu0 0.0
  %1589 = vmatprep.subr.mxu0 0.0
  %1590 = vmatpush1.msra.mxu0 0.0
  %1591 = vmatprep.subr.mxu0 0.0
  %1592 = vmatpush1.msra.mxu0 0.0
  %1593 = vmatprep.mubr.f32.mxu0 0.0
  %1594 = vmatmul.mubr.f32.gmra.mrb[0].mxu0 %v1527
  %v1595 = vpop.f32.mrb[0].mxu0
  %v1596 = vadd.f32 0.0, %v1595
  %v1597 = vpop.f32.mrb[0].mxu0
  %1598 = vdwg.mxu0
  %v1599 = vadd.f32 %v1523, %v1596
  %v1600 = vxor.u32 %v1599, 2147483648
  %v1601 = vmul.f32 %v1600, 1.442695
  %v1602 = vpow.pop %v1601
  %v1603 = vadd.f32 %v1602, 1.0
  %v1604 = vrcp.pop %v1603
  %v1605 = vmul.f32 1.0, %v1604
  %v1606 = vtanh.pop %v1599
  %v1607 = vmul.f32 %v1605, %v1413
  %1609 = vrot.lane.b32.xlu0 %v1606, 64
  %v1610 = vpop.permute.xlu0 %1609
  %v1612 = vmul.f32 %v1605, %v1610
  %1614 = vrot.lane.b32.xlu0 %v1612, 32
  %v1615 = vpop.permute.xlu0 %1614
  %v1617 = vadd.f32 %v1607, %v1615
  %v1618 = vtanh.pop %v1617
  %1620 = vrot.lane.b32.xlu0 %v1618, 64
  %v1621 = vpop.permute.xlu0 %1620
  %v1623 = vmul.f32 %v1605, %v1621
  %v1624 = vsel %vm645, %v1623, %v1412
  %v1625 = vsel %vm645, %v1617, %v1413
  %v1626 = vsel %vm645, %v1623, 0.0
  %v1627 = vmax.f32 %v1415, %v1626
  %s1628 = scalar_lea.vmem [#allocation3], 8
  %v1629 = vld [vmem:[%s1628] sm:$0xff]
  %1631 = vrot.lane.b32.xlu0 %v1518, 32
  %v1632 = vpop.permute.xlu0 %1631
  %v1633 = vsel %vm51, %v1632, 0
  %1635 = vmatprep.subr.mxu0 0.0
  %1636 = vmatpush1.msra.mxu0 %v209
  %1637 = vmatprep.subr.mxu0 0.0
  %1638 = vmatpush1.msra.mxu0 %v210
  %1639 = vmatprep.subr.mxu0 0.0
  %1640 = vmatpush1.msra.mxu0 %v211
  %1641 = vmatprep.subr.mxu0 0.0
  %1642 = vmatpush1.msra.mxu0 %v212
  %1643 = vmatprep.subr.mxu0 0.0
  %1644 = vmatpush1.msra.mxu0 0.0
  %1645 = vmatprep.subr.mxu0 0.0
  %1646 = vmatpush1.msra.mxu0 0.0
  %1647 = vmatprep.subr.mxu0 0.0
  %1648 = vmatpush1.msra.mxu0 0.0
  %1649 = vmatprep.subr.mxu0 0.0
  %1650 = vmatpush1.msra.mxu0 0.0
  %1651 = vmatprep.subr.mxu0 0.0
  %1652 = vmatpush1.msra.mxu0 0.0
  %1653 = vmatprep.subr.mxu0 0.0
  %1654 = vmatpush1.msra.mxu0 0.0
  %1655 = vmatprep.subr.mxu0 0.0
  %1656 = vmatpush1.msra.mxu0 0.0
  %1657 = vmatprep.subr.mxu0 0.0
  %1658 = vmatpush1.msra.mxu0 0.0
  %1659 = vmatprep.subr.mxu0 0.0
  %1660 = vmatpush1.msra.mxu0 0.0
  %1661 = vmatprep.subr.mxu0 0.0
  %1662 = vmatpush1.msra.mxu0 0.0
  %1663 = vmatprep.subr.mxu0 0.0
  %1664 = vmatpush1.msra.mxu0 0.0
  %1665 = vmatprep.subr.mxu0 0.0
  %1666 = vmatpush1.msra.mxu0 0.0
  %1667 = vmatprep.subr.mxu0 0.0
  %1668 = vmatpush1.msra.mxu0 0.0
  %1669 = vmatprep.subr.mxu0 0.0
  %1670 = vmatpush1.msra.mxu0 0.0
  %1671 = vmatprep.subr.mxu0 0.0
  %1672 = vmatpush1.msra.mxu0 0.0
  %1673 = vmatprep.subr.mxu0 0.0
  %1674 = vmatpush1.msra.mxu0 0.0
  %1675 = vmatprep.subr.mxu0 0.0
  %1676 = vmatpush1.msra.mxu0 0.0
  %1677 = vmatprep.subr.mxu0 0.0
  %1678 = vmatpush1.msra.mxu0 0.0
  %1679 = vmatprep.subr.mxu0 0.0
  %1680 = vmatpush1.msra.mxu0 0.0
  %1681 = vmatprep.subr.mxu0 0.0
  %1682 = vmatpush1.msra.mxu0 0.0
  %1683 = vmatprep.subr.mxu0 0.0
  %1684 = vmatpush1.msra.mxu0 0.0
  %1685 = vmatprep.subr.mxu0 0.0
  %1686 = vmatpush1.msra.mxu0 0.0
  %1687 = vmatprep.subr.mxu0 0.0
  %1688 = vmatpush1.msra.mxu0 0.0
  %1689 = vmatprep.subr.mxu0 0.0
  %1690 = vmatpush1.msra.mxu0 0.0
  %1691 = vmatprep.subr.mxu0 0.0
  %1692 = vmatpush1.msra.mxu0 0.0
  %1693 = vmatprep.subr.mxu0 0.0
  %1694 = vmatpush1.msra.mxu0 0.0
  %1695 = vmatprep.subr.mxu0 0.0
  %1696 = vmatpush1.msra.mxu0 0.0
  %1697 = vmatprep.subr.mxu0 0.0
  %1698 = vmatpush1.msra.mxu0 0.0
  %1699 = vmatprep.mubr.f32.mxu0 0.0
  %1700 = vmatmul.mubr.f32.gmra.mrb[0].mxu0 %v1633
  %v1701 = vpop.f32.mrb[0].mxu0
  %v1702 = vadd.f32 0.0, %v1701
  %v1703 = vpop.f32.mrb[0].mxu0
  %1704 = vdwg.mxu0
  %v1705 = vadd.f32 %v1629, %v1702
  %v1706 = vxor.u32 %v1705, 2147483648
  %v1707 = vmul.f32 %v1706, 1.442695
  %v1708 = vpow.pop %v1707
  %v1709 = vadd.f32 %v1708, 1.0
  %v1710 = vrcp.pop %v1709
  %v1711 = vmul.f32 1.0, %v1710
  %v1712 = vtanh.pop %v1705
  %v1713 = vmul.f32 %v1711, %v1519
  %1715 = vrot.lane.b32.xlu0 %v1712, 64
  %v1716 = vpop.permute.xlu0 %1715
  %v1718 = vmul.f32 %v1711, %v1716
  %1720 = vrot.lane.b32.xlu0 %v1718, 32
  %v1721 = vpop.permute.xlu0 %1720
  %v1723 = vadd.f32 %v1713, %v1721
  %v1724 = vtanh.pop %v1723
  %1726 = vrot.lane.b32.xlu0 %v1724, 64
  %v1727 = vpop.permute.xlu0 %1726
  %v1729 = vmul.f32 %v1711, %v1727
  %v1730 = vsel %vm533, %v1729, %v1518
  %v1731 = vsel %vm533, %v1723, %v1519
  %v1732 = vsel %vm533, %v1729, 0.0
  %v1733 = vmax.f32 %v1521, %v1732
  %s1734 = scalar_lea.vmem [#allocation2], 56
  %v1735 = vld [vmem:[%s1734] sm:$0xff]
  %1737 = vrot.lane.b32.xlu0 %v1624, 32
  %v1738 = vpop.permute.xlu0 %1737
  %v1739 = vsel %vm51, %v1738, 0
  %1741 = vmatprep.subr.mxu0 0.0
  %1742 = vmatpush1.msra.mxu0 %v205
  %1743 = vmatprep.subr.mxu0 0.0
  %1744 = vmatpush1.msra.mxu0 %v206
  %1745 = vmatprep.subr.mxu0 0.0
  %1746 = vmatpush1.msra.mxu0 %v207
  %1747 = vmatprep.subr.mxu0 0.0
  %1748 = vmatpush1.msra.mxu0 %v208
  %1749 = vmatprep.subr.mxu0 0.0
  %1750 = vmatpush1.msra.mxu0 0.0
  %1751 = vmatprep.subr.mxu0 0.0
  %1752 = vmatpush1.msra.mxu0 0.0
  %1753 = vmatprep.subr.mxu0 0.0
  %1754 = vmatpush1.msra.mxu0 0.0
  %1755 = vmatprep.subr.mxu0 0.0
  %1756 = vmatpush1.msra.mxu0 0.0
  %1757 = vmatprep.subr.mxu0 0.0
  %1758 = vmatpush1.msra.mxu0 0.0
  %1759 = vmatprep.subr.mxu0 0.0
  %1760 = vmatpush1.msra.mxu0 0.0
  %1761 = vmatprep.subr.mxu0 0.0
  %1762 = vmatpush1.msra.mxu0 0.0
  %1763 = vmatprep.subr.mxu0 0.0
  %1764 = vmatpush1.msra.mxu0 0.0
  %1765 = vmatprep.subr.mxu0 0.0
  %1766 = vmatpush1.msra.mxu0 0.0
  %1767 = vmatprep.subr.mxu0 0.0
  %1768 = vmatpush1.msra.mxu0 0.0
  %1769 = vmatprep.subr.mxu0 0.0
  %1770 = vmatpush1.msra.mxu0 0.0
  %1771 = vmatprep.subr.mxu0 0.0
  %1772 = vmatpush1.msra.mxu0 0.0
  %1773 = vmatprep.subr.mxu0 0.0
  %1774 = vmatpush1.msra.mxu0 0.0
  %1775 = vmatprep.subr.mxu0 0.0
  %1776 = vmatpush1.msra.mxu0 0.0
  %1777 = vmatprep.subr.mxu0 0.0
  %1778 = vmatpush1.msra.mxu0 0.0
  %1779 = vmatprep.subr.mxu0 0.0
  %1780 = vmatpush1.msra.mxu0 0.0
  %1781 = vmatprep.subr.mxu0 0.0
  %1782 = vmatpush1.msra.mxu0 0.0
  %1783 = vmatprep.subr.mxu0 0.0
  %1784 = vmatpush1.msra.mxu0 0.0
  %1785 = vmatprep.subr.mxu0 0.0
  %1786 = vmatpush1.msra.mxu0 0.0
  %1787 = vmatprep.subr.mxu0 0.0
  %1788 = vmatpush1.msra.mxu0 0.0
  %1789 = vmatprep.subr.mxu0 0.0
  %1790 = vmatpush1.msra.mxu0 0.0
  %1791 = vmatprep.subr.mxu0 0.0
  %1792 = vmatpush1.msra.mxu0 0.0
  %1793 = vmatprep.subr.mxu0 0.0
  %1794 = vmatpush1.msra.mxu0 0.0
  %1795 = vmatprep.subr.mxu0 0.0
  %1796 = vmatpush1.msra.mxu0 0.0
  %1797 = vmatprep.subr.mxu0 0.0
  %1798 = vmatpush1.msra.mxu0 0.0
  %1799 = vmatprep.subr.mxu0 0.0
  %1800 = vmatpush1.msra.mxu0 0.0
  %1801 = vmatprep.subr.mxu0 0.0
  %1802 = vmatpush1.msra.mxu0 0.0
  %1803 = vmatprep.subr.mxu0 0.0
  %1804 = vmatpush1.msra.mxu0 0.0
  %1805 = vmatprep.mubr.f32.mxu0 0.0
  %1806 = vmatmul.mubr.f32.gmra.mrb[0].mxu0 %v1739
  %v1807 = vpop.f32.mrb[0].mxu0
  %v1808 = vadd.f32 0.0, %v1807
  %v1809 = vpop.f32.mrb[0].mxu0
  %1810 = vdwg.mxu0
  %v1811 = vadd.f32 %v1735, %v1808
  %v1812 = vxor.u32 %v1811, 2147483648
  %v1813 = vmul.f32 %v1812, 1.442695
  %v1814 = vpow.pop %v1813
  %v1815 = vadd.f32 %v1814, 1.0
  %v1816 = vrcp.pop %v1815
  %v1817 = vmul.f32 1.0, %v1816
  %v1818 = vtanh.pop %v1811
  %v1819 = vmul.f32 %v1817, %v1625
  %1821 = vrot.lane.b32.xlu0 %v1818, 64
  %v1822 = vpop.permute.xlu0 %1821
  %v1824 = vmul.f32 %v1817, %v1822
  %1826 = vrot.lane.b32.xlu0 %v1824, 32
  %v1827 = vpop.permute.xlu0 %1826
  %v1829 = vadd.f32 %v1819, %v1827
  %v1830 = vtanh.pop %v1829
  %1832 = vrot.lane.b32.xlu0 %v1830, 64
  %v1833 = vpop.permute.xlu0 %1832
  %v1835 = vmul.f32 %v1817, %v1833
  %v1836 = vsel %vm423, %v1835, 0.0
  %v1837 = vmax.f32 %v1627, %v1836
  %v1838 = vld [vmem:[#allocation3] sm:$0xff]
  %1840 = vrot.lane.b32.xlu0 %v1730, 32
  %v1841 = vpop.permute.xlu0 %1840
  %v1842 = vsel %vm51, %v1841, 0
  %1844 = vmatprep.subr.mxu0 0.0
  %1845 = vmatpush1.msra.mxu0 %v209
  %1846 = vmatprep.subr.mxu0 0.0
  %1847 = vmatpush1.msra.mxu0 %v210
  %1848 = vmatprep.subr.mxu0 0.0
  %1849 = vmatpush1.msra.mxu0 %v211
  %1850 = vmatprep.subr.mxu0 0.0
  %1851 = vmatpush1.msra.mxu0 %v212
  %1852 = vmatprep.subr.mxu0 0.0
  %1853 = vmatpush1.msra.mxu0 0.0
  %1854 = vmatprep.subr.mxu0 0.0
  %1855 = vmatpush1.msra.mxu0 0.0
  %1856 = vmatprep.subr.mxu0 0.0
  %1857 = vmatpush1.msra.mxu0 0.0
  %1858 = vmatprep.subr.mxu0 0.0
  %1859 = vmatpush1.msra.mxu0 0.0
  %1860 = vmatprep.subr.mxu0 0.0
  %1861 = vmatpush1.msra.mxu0 0.0
  %1862 = vmatprep.subr.mxu0 0.0
  %1863 = vmatpush1.msra.mxu0 0.0
  %1864 = vmatprep.subr.mxu0 0.0
  %1865 = vmatpush1.msra.mxu0 0.0
  %1866 = vmatprep.subr.mxu0 0.0
  %1867 = vmatpush1.msra.mxu0 0.0
  %1868 = vmatprep.subr.mxu0 0.0
  %1869 = vmatpush1.msra.mxu0 0.0
  %1870 = vmatprep.subr.mxu0 0.0
  %1871 = vmatpush1.msra.mxu0 0.0
  %1872 = vmatprep.subr.mxu0 0.0
  %1873 = vmatpush1.msra.mxu0 0.0
  %1874 = vmatprep.subr.mxu0 0.0
  %1875 = vmatpush1.msra.mxu0 0.0
  %1876 = vmatprep.subr.mxu0 0.0
  %1877 = vmatpush1.msra.mxu0 0.0
  %1878 = vmatprep.subr.mxu0 0.0
  %1879 = vmatpush1.msra.mxu0 0.0
  %1880 = vmatprep.subr.mxu0 0.0
  %1881 = vmatpush1.msra.mxu0 0.0
  %1882 = vmatprep.subr.mxu0 0.0
  %1883 = vmatpush1.msra.mxu0 0.0
  %1884 = vmatprep.subr.mxu0 0.0
  %1885 = vmatpush1.msra.mxu0 0.0
  %1886 = vmatprep.subr.mxu0 0.0
  %1887 = vmatpush1.msra.mxu0 0.0
  %1888 = vmatprep.subr.mxu0 0.0
  %1889 = vmatpush1.msra.mxu0 0.0
  %1890 = vmatprep.subr.mxu0 0.0
  %1891 = vmatpush1.msra.mxu0 0.0
  %1892 = vmatprep.subr.mxu0 0.0
  %1893 = vmatpush1.msra.mxu0 0.0
  %1894 = vmatprep.subr.mxu0 0.0
  %1895 = vmatpush1.msra.mxu0 0.0
  %1896 = vmatprep.subr.mxu0 0.0
  %1897 = vmatpush1.msra.mxu0 0.0
  %1898 = vmatprep.subr.mxu0 0.0
  %1899 = vmatpush1.msra.mxu0 0.0
  %1900 = vmatprep.subr.mxu0 0.0
  %1901 = vmatpush1.msra.mxu0 0.0
  %1902 = vmatprep.subr.mxu0 0.0
  %1903 = vmatpush1.msra.mxu0 0.0
  %1904 = vmatprep.subr.mxu0 0.0
  %1905 = vmatpush1.msra.mxu0 0.0
  %1906 = vmatprep.subr.mxu0 0.0
  %1907 = vmatpush1.msra.mxu0 0.0
  %1908 = vmatprep.mubr.f32.mxu0 0.0
  %1909 = vmatmul.mubr.f32.gmra.mrb[0].mxu0 %v1842
  %v1910 = vpop.f32.mrb[0].mxu0
  %v1911 = vadd.f32 0.0, %v1910
  %v1912 = vpop.f32.mrb[0].mxu0
  %1913 = vdwg.mxu0
  %v1914 = vadd.f32 %v1838, %v1911
  %v1915 = vxor.u32 %v1914, 2147483648
  %v1916 = vmul.f32 %v1915, 1.442695
  %v1917 = vpow.pop %v1916
  %v1918 = vadd.f32 %v1917, 1.0
  %v1919 = vrcp.pop %v1918
  %v1920 = vmul.f32 1.0, %v1919
  %v1921 = vtanh.pop %v1914
  %v1922 = vmul.f32 %v1920, %v1731
  %1924 = vrot.lane.b32.xlu0 %v1921, 64
  %v1925 = vpop.permute.xlu0 %1924
  %v1927 = vmul.f32 %v1920, %v1925
  %1929 = vrot.lane.b32.xlu0 %v1927, 32
  %v1930 = vpop.permute.xlu0 %1929
  %v1932 = vadd.f32 %v1922, %v1930
  %v1933 = vtanh.pop %v1932
  %1935 = vrot.lane.b32.xlu0 %v1933, 64
  %v1936 = vpop.permute.xlu0 %1935
  %v1938 = vmul.f32 %v1920, %v1936
  %v1939 = vsel %vm318, %v1938, 0.0
  %v1940 = vmax.f32 %v1733, %v1939
  %1942 = vrot.lane.b32.xlu0 %v1837, 32
  %v1943 = vpop.permute.xlu0 %1942
  %1945 = vst.msk [vmem:[%s6] sm:$0xff] %vm51, %v1943
  %1947 = vrot.lane.b32.xlu0 %v1940, 64
  %v1948 = vpop.permute.xlu0 %1947
  %vm1950 = vcmask 523520
  %1951 = vst.msk [vmem:[%s6] sm:$0xff] %vm1950, %v1948
  // Predicated region
  $region26: #{bilstm_maxpool_nli_forward.2} parent=0 // pred_check
    _
  $region27: #{bilstm_maxpool_nli_forward.2} parent=0 // pred_check_branch
    %1953 = sbr.rel (0) target = $region29
  $region28: #{bilstm_maxpool_nli_forward.2} parent=0 // pred_region
    _
  $region29: #{bilstm_maxpool_nli_forward.2} parent=0 // pred_fallthru
    _
  // Predicated region
  $region30: #{bilstm_maxpool_nli_forward.2} parent=0 // pred_check
    _
  $region31: #{bilstm_maxpool_nli_forward.2} parent=0 // pred_check_branch
    %1955 = sbr.rel (0) target = $region33
  $region32: #{bilstm_maxpool_nli_forward.2} parent=0 // pred_region
    _
  $region33: #{bilstm_maxpool_nli_forward.2} parent=0 // pred_fallthru
    _

</llo_original>
